<compile_context>
chip_gen: v7x
topology: tpu7x:2x2x1
jax: 0.10.0
libtpu: 0.0.40
codegen_flags: <defaults>
</compile_context>

<pallas_src>
import math
import numpy as np

import jax
import jax.numpy as jnp
from jax.experimental import pallas as pl
from jax.experimental.pallas import tpu as pltpu

# ----------------------------- config ---------------------------------------
NUM_NEURONS = 8          # config.num_neurons
VEC_SIZE = 16            # config.vec_size
NUM_HEADS = 2            # config.num_heads
INTERNAL = VEC_SIZE * NUM_HEADS   # internal_vec_size = 32
LAYER_NORM_EPS = 1e-12   # config.layer_norm_eps
BATCH = 2
SEQ = 8

_HIGHEST = jax.lax.Precision.HIGHEST


# ----------------------------- fused kernel ---------------------------------
def neuron_bank_kernel(k_ref, v_ref, qf_ref, gamma_ref, beta_ref,
                       hmask_ref, dmask_ref, wk_ref, bk_ref, wv_ref, bv_ref,
                       ok_ref, ov_ref):
    """Fused attention + LayerNorm + per-neuron linears (single invocation).

    k_ref, v_ref : (B, S, VH)   hidden keys / values, interleaved channels c = v*H + h
    qf_ref       : (H*N, VH)    zero-padded query bank (row h*N+n, col v*H+h)
    gamma_ref    : (1, VH)      LayerNorm weight (original channel order)
    beta_ref     : (1, VH)      LayerNorm bias
    hmask_ref    : (H, VH)      0/1 head-channel masks (hmask[h, c] = [c % H == h])
    dmask_ref    : (N, N*VH)    0/1 block-diagonal selection mask
    wk_ref,wv_ref: (VH, N*VH)   NeuronwiseLinear weight slabs (column block n = W[n])
    bk_ref,bv_ref: (1, N*VH)    NeuronwiseLinear biases, flattened per neuron
    ok_ref,ov_ref: (B, N*VH)    lane-dense outputs (reshaped to (B, N, VH) outside)
    """
    B = k_ref.shape[0]
    N, H, V, VH = NUM_NEURONS, NUM_HEADS, VEC_SIZE, INTERNAL
    inv_sqrt_v = 1.0 / math.sqrt(V)

    qf = qf_ref[...]
    gamma = gamma_ref[...]
    beta = beta_ref[...]
    hmask = hmask_ref[...]
    dmask = dmask_ref[...]
    wk = wk_ref[...]
    wv = wv_ref[...]
    bk = bk_ref[...]
    bv = bv_ref[...]

    # ---- attention + LayerNorm; static unroll over the tiny batch dim ------
    y_rows = []
    for b in range(B):                       # unrolled: no grid-step overhead
        k_b = k_ref[b]                       # (S, VH)
        v_b = v_ref[b]                       # (S, VH)

        # scores[h*N+n, s] = <q[h,n,:], keys[b,s, head-h channels]> / sqrt(V)
        # All heads in one MXU op, contracting the channel axes (no k.T).
        scores = jax.lax.dot_general(
            qf, k_b, (((1,), (1,)), ((), ())),
            precision=_HIGHEST,
            preferred_element_type=jnp.float32) * inv_sqrt_v      # (H*N, S)

        m = jnp.max(scores, axis=-1, keepdims=True)
        e = jnp.exp(scores - m)
        probs = e / jnp.sum(e, axis=-1, keepdims=True)            # (H*N, S)

        # probs @ values in the original interleaved channel order; recombine
        # heads via precomputed 0/1 channel masks (no concat / deinterleave).
        x = jnp.zeros((N, VH), jnp.float32)
        for h in range(H):
            out_h = jnp.dot(probs[h * N:(h + 1) * N], v_b,
                            precision=_HIGHEST,
                            preferred_element_type=jnp.float32)   # (N, VH)
            x = x + out_h * hmask[h:h + 1, :]

        # LayerNorm over channels (biased variance, like torch.nn.LayerNorm)
        mean = jnp.mean(x, axis=-1, keepdims=True)
        var = jnp.mean((x - mean) ** 2, axis=-1, keepdims=True)
        y = (x - mean) * jax.lax.rsqrt(var + LAYER_NORM_EPS)
        y_rows.append(y * gamma + beta)                           # (N, VH)

    y_all = jnp.concatenate(y_rows, axis=0)                       # (B*N, VH)

    # ---- NeuronwiseLinear: one lane-dense matmul per output, per-neuron ----
    # diagonal blocks selected by a masked sublane reduction.
    ok_full = jnp.dot(y_all, wk, precision=_HIGHEST,
                      preferred_element_type=jnp.float32)         # (B*N, N*VH)
    ov_full = jnp.dot(y_all, wv, precision=_HIGHEST,
                      preferred_element_type=jnp.float32)

    ok_rows, ov_rows = [], []
    for b in range(B):
        blk = slice(b * N, (b + 1) * N)                           # tile-aligned
        ok_rows.append(jnp.sum(ok_full[blk] * dmask, axis=0, keepdims=True) + bk)
        ov_rows.append(jnp.sum(ov_full[blk] * dmask, axis=0, keepdims=True) + bv)

    ok_ref[...] = jnp.concatenate(ok_rows, axis=0)   # (B, N*VH) lane-dense store
    ov_ref[...] = jnp.concatenate(ov_rows, axis=0)


# ----------------------------- one-time parameter prep ----------------------
def prepare_params(params):
    """Done ONCE (outside jit): layout prep so the forward is a single kernel."""
    H, N, V, VH = NUM_HEADS, NUM_NEURONS, VEC_SIZE, INTERNAL

    q = jnp.asarray(params["query_bank"], jnp.float32)            # (H, N, V)
    # zero-padded query bank: q_full[h*N + n, v*H + h] = q[h, n, v]
    eye_h = jnp.eye(H, dtype=jnp.float32)
    q_full = (q[:, :, :, None] * eye_h[:, None, None, :]).reshape(H * N, VH)

    # head-channel select masks: hmask[h, c] = 1 iff channel c belongs to head h
    hmask = np.zeros((H, VH), np.float32)
    for h in range(H):
        hmask[h, h::H] = 1.0

    # block-diagonal selection mask for the neuronwise linears
    dmask = np.zeros((N, N * VH), np.float32)
    for n in range(N):
        dmask[n, n * VH:(n + 1) * VH] = 1.0

    # weight slabs: wk_slab[i, n*VH + o] = wk[n, i, o]   (lane-dense columns)
    wk_slab = jnp.transpose(params["wk"], (1, 0, 2)).reshape(VH, N * VH)
    wv_slab = jnp.transpose(params["wv"], (1, 0, 2)).reshape(VH, N * VH)

    return dict(
        q_full=q_full,
        gamma=params["ln_gamma"].reshape(1, VH),
        beta=params["ln_beta"].reshape(1, VH),
        hmask=jnp.asarray(hmask),
        dmask=jnp.asarray(dmask),
        wk_slab=wk_slab,
        bk_flat=params["bk"].reshape(1, N * VH),
        wv_slab=wv_slab,
        bv_flat=params["bv"].reshape(1, N * VH),
    )


# ----------------------------- forward wrapper -------------------------------
def neuron_bank_forward(hidden_keys, hidden_values, prepped):
    B, S, VH = hidden_keys.shape
    N = NUM_NEURONS
    assert VH == INTERNAL

    operands = (hidden_keys, hidden_values, prepped["q_full"], prepped["gamma"],
                prepped["beta"], prepped["hmask"], prepped["dmask"],
                prepped["wk_slab"], prepped["bk_flat"], prepped["wv_slab"],
                prepped["bv_flat"])
    vmem_spec = pl.BlockSpec(memory_space=pltpu.MemorySpace.VMEM)

    # Single kernel invocation, no grid, everything resident in VMEM
    # (total footprint < 100 KiB, fits every generation; single TensorCore).
    ok_flat, ov_flat = pl.pallas_call(
        neuron_bank_kernel,
        out_shape=(jax.ShapeDtypeStruct((B, N * VH), jnp.float32),
                   jax.ShapeDtypeStruct((B, N * VH), jnp.float32)),
        in_specs=[vmem_spec] * len(operands),
        out_specs=(vmem_spec, vmem_spec),
    )(*operands)

    # free row-major split of the last dim: (B, N*VH) -> (B, N, VH)
    return ok_flat.reshape(B, N, VH), ov_flat.reshape(B, N, VH)


# ----------------------------- reference (pure JAX, PyTorch semantics) -------
def neuron_bank_reference(hidden_keys, hidden_values, p):
    B, S, VH = hidden_keys.shape
    H, V, N = NUM_HEADS, VEC_SIZE, NUM_NEURONS
    with jax.default_matmul_precision("highest"):
        keys_r = hidden_keys.reshape(B, S, V, H).transpose(3, 2, 1, 0).reshape(H, V, S * B)
        att = jnp.einsum("hnv,hvx->hnx", p["query_bank"], keys_r) / math.sqrt(V)
        att = att.reshape(H, N, S, B).transpose(3, 0, 1, 2)                  # (B,H,N,S)
        probs = jax.nn.softmax(att, axis=-1)
        vals_r = hidden_values.reshape(B, S, V, H).transpose(0, 3, 1, 2)      # (B,H,S,V)
        out = jnp.einsum("bhns,bhsv->bhnv", probs, vals_r)
        out = out.transpose(0, 2, 3, 1).reshape(B, N, V * H)                  # interleaved
        mean = out.mean(-1, keepdims=True)
        var = ((out - mean) ** 2).mean(-1, keepdims=True)
        xn = (out - mean) / jnp.sqrt(var + LAYER_NORM_EPS)
        xn = xn * p["ln_gamma"] + p["ln_beta"]
        xn = xn.transpose(1, 0, 2)                                            # (N,B,VH)
        ok = jnp.einsum("nbi,nio->nbo", xn, p["wk"]) + p["bk"]
        ov = jnp.einsum("nbi,nio->nbo", xn, p["wv"]) + p["bv"]
        return ok.transpose(1, 0, 2), ov.transpose(1, 0, 2)


# ----------------------------- main -------------------------------------------
if __name__ == "__main__":
    key = jax.random.PRNGKey(0)
    k1, k2, k3, k4, k5, k6, k7 = jax.random.split(key, 7)

    # deterministic synthetic parameters (shapes match the module's __init__)
    params = {
        "query_bank": jax.random.normal(k1, (NUM_HEADS, NUM_NEURONS, VEC_SIZE), jnp.float32),
        "ln_gamma": jnp.ones((INTERNAL,), jnp.float32),
        "ln_beta": jnp.zeros((INTERNAL,), jnp.float32),
        # NeuronwiseLinear(num_neurons, in=internal, out=internal): per-neuron W and bias
        "wk": jax.random.normal(k2, (NUM_NEURONS, INTERNAL, INTERNAL), jnp.float32)
        / math.sqrt(INTERNAL),
        "bk": jax.random.normal(k3, (NUM_NEURONS, 1, INTERNAL), jnp.float32) * 0.02,
        "wv": jax.random.normal(k4, (NUM_NEURONS, INTERNAL, INTERNAL), jnp.float32)
        / math.sqrt(INTERNAL),
        "bv": jax.random.normal(k5, (NUM_NEURONS, 1, INTERNAL), jnp.float32) * 0.02,
    }

    hidden_keys = jax.random.normal(k6, (BATCH, SEQ, INTERNAL), jnp.float32)
    hidden_values = jax.random.normal(k7, (BATCH, SEQ, INTERNAL), jnp.float32)

    prepped = prepare_params(params)              # one-time layout prep
    fwd = jax.jit(neuron_bank_forward)

    out_keys, out_values = fwd(hidden_keys, hidden_values, prepped)
    jax.block_until_ready((out_keys, out_values))

    ref_keys, ref_values = neuron_bank_reference(hidden_keys, hidden_values, params)
    np.testing.assert_allclose(np.asarray(out_keys), np.asarray(ref_keys), rtol=1e-4, atol=1e-4)
    np.testing.assert_allclose(np.asarray(out_values), np.asarray(ref_values), rtol=1e-4, atol=1e-4)

    assert out_keys.shape == (BATCH, NUM_NEURONS, INTERNAL)
    assert out_values.shape == (BATCH, NUM_NEURONS, INTERNAL)
    print("KERNEL_OK")
</pallas_src>

<mosaic_0001>
module attributes {stable_mosaic.version = 11 : i64} {
  func.func @neuron_bank_kernel(%arg0: memref<2x8x32xf32, #tpu.memory_space<vmem>>, %arg1: memref<2x8x32xf32, #tpu.memory_space<vmem>>, %arg2: memref<16x32xf32, #tpu.memory_space<vmem>>, %arg3: memref<1x32xf32, #tpu.memory_space<vmem>>, %arg4: memref<1x32xf32, #tpu.memory_space<vmem>>, %arg5: memref<2x32xf32, #tpu.memory_space<vmem>>, %arg6: memref<8x256xf32, #tpu.memory_space<vmem>>, %arg7: memref<32x256xf32, #tpu.memory_space<vmem>>, %arg8: memref<1x256xf32, #tpu.memory_space<vmem>>, %arg9: memref<32x256xf32, #tpu.memory_space<vmem>>, %arg10: memref<1x256xf32, #tpu.memory_space<vmem>>, %arg11: memref<2x256xf32, #tpu.memory_space<vmem>>, %arg12: memref<2x256xf32, #tpu.memory_space<vmem>>) attributes {dimension_semantics = [], scalar_prefetch = 0 : i64, scratch_operands = 0 : i64, tpu.core_type = #tpu.core_type<tc>} {
    %c0 = arith.constant 0 : index
    %c0_0 = arith.constant 0 : index
    %0 = vector.load %arg2[%c0, %c0_0] : memref<16x32xf32, #tpu.memory_space<vmem>>, vector<16x32xf32>
    %c0_1 = arith.constant 0 : index
    %c0_2 = arith.constant 0 : index
    %1 = vector.load %arg3[%c0_1, %c0_2] : memref<1x32xf32, #tpu.memory_space<vmem>>, vector<1x32xf32>
    %c0_3 = arith.constant 0 : index
    %c0_4 = arith.constant 0 : index
    %2 = vector.load %arg4[%c0_3, %c0_4] : memref<1x32xf32, #tpu.memory_space<vmem>>, vector<1x32xf32>
    %c0_5 = arith.constant 0 : index
    %c0_6 = arith.constant 0 : index
    %3 = vector.load %arg5[%c0_5, %c0_6] : memref<2x32xf32, #tpu.memory_space<vmem>>, vector<2x32xf32>
    %c0_7 = arith.constant 0 : index
    %c0_8 = arith.constant 0 : index
    %4 = vector.load %arg6[%c0_7, %c0_8] : memref<8x256xf32, #tpu.memory_space<vmem>>, vector<8x256xf32>
    %c0_9 = arith.constant 0 : index
    %c0_10 = arith.constant 0 : index
    %5 = vector.load %arg7[%c0_9, %c0_10] : memref<32x256xf32, #tpu.memory_space<vmem>>, vector<32x256xf32>
    %c0_11 = arith.constant 0 : index
    %c0_12 = arith.constant 0 : index
    %6 = vector.load %arg9[%c0_11, %c0_12] : memref<32x256xf32, #tpu.memory_space<vmem>>, vector<32x256xf32>
    %c0_13 = arith.constant 0 : index
    %c0_14 = arith.constant 0 : index
    %7 = vector.load %arg8[%c0_13, %c0_14] : memref<1x256xf32, #tpu.memory_space<vmem>>, vector<1x256xf32>
    %c0_15 = arith.constant 0 : index
    %c0_16 = arith.constant 0 : index
    %8 = vector.load %arg10[%c0_15, %c0_16] : memref<1x256xf32, #tpu.memory_space<vmem>>, vector<1x256xf32>
    %c0_17 = arith.constant 0 : index
    %c0_18 = arith.constant 0 : index
    %c0_19 = arith.constant 0 : index
    %9 = vector.load %arg0[%c0_17, %c0_18, %c0_19] : memref<2x8x32xf32, #tpu.memory_space<vmem>>, vector<1x8x32xf32>
    %10 = vector.shape_cast %9 : vector<1x8x32xf32> to vector<8x32xf32>
    %c0_20 = arith.constant 0 : index
    %c0_21 = arith.constant 0 : index
    %c0_22 = arith.constant 0 : index
    %11 = vector.load %arg1[%c0_20, %c0_21, %c0_22] : memref<2x8x32xf32, #tpu.memory_space<vmem>>, vector<1x8x32xf32>
    %12 = vector.shape_cast %11 : vector<1x8x32xf32> to vector<8x32xf32>
    %cst = arith.constant dense<0.000000e+00> : vector<16x8xf32>
    %13 = tpu.matmul %0, %10, %cst {dimension_numbers = #tpu.dot_dimension_numbers<[1], [1], [0], [0], [0, 0, 1, 0], [], []>, precision = #tpu.contract_precision<fp32>} : vector<16x32xf32>, vector<8x32xf32>, vector<16x8xf32> -> vector<16x8xf32>
    %cst_23 = arith.constant 2.500000e-01 : f32
    %14 = vector.broadcast %cst_23 : f32 to vector<16x8xf32>
    %15 = arith.mulf %13, %14 : vector<16x8xf32>
    %cst_24 = arith.constant dense<0xFF800000> : vector<16xf32>
    %16 = vector.multi_reduction <maximumf>, %15, %cst_24 [1] : vector<16x8xf32> to vector<16xf32>
    %17 = vector.shape_cast %16 : vector<16xf32> to vector<16x1xf32>
    %18 = vector.broadcast %17 : vector<16x1xf32> to vector<16x8xf32>
    %19 = arith.subf %15, %18 : vector<16x8xf32>
    %20 = math.exp %19 : vector<16x8xf32>
    %cst_25 = arith.constant dense<0.000000e+00> : vector<16xf32>
    %21 = vector.multi_reduction <add>, %20, %cst_25 [1] : vector<16x8xf32> to vector<16xf32>
    %22 = vector.shape_cast %21 : vector<16xf32> to vector<16x1xf32>
    %23 = vector.broadcast %22 : vector<16x1xf32> to vector<16x8xf32>
    %24 = arith.divf %20, %23 : vector<16x8xf32>
    %cst_26 = arith.constant 0.000000e+00 : f32
    %25 = vector.broadcast %cst_26 : f32 to vector<8x32xf32>
    %26 = vector.extract_strided_slice %24 {offsets = [0, 0], sizes = [8, 8], strides = [1, 1]} : vector<16x8xf32> to vector<8x8xf32>
    %cst_27 = arith.constant dense<0.000000e+00> : vector<8x32xf32>
    %27 = tpu.matmul %26, %12, %cst_27 {dimension_numbers = #tpu.dot_dimension_numbers<[1], [0], [0], [1], [0, 0, 1, 1], [], []>, precision = #tpu.contract_precision<fp32>} : vector<8x8xf32>, vector<8x32xf32>, vector<8x32xf32> -> vector<8x32xf32>
    %28 = vector.extract_strided_slice %3 {offsets = [0, 0], sizes = [1, 32], strides = [1, 1]} : vector<2x32xf32> to vector<1x32xf32>
    %29 = vector.broadcast %28 : vector<1x32xf32> to vector<8x32xf32>
    %30 = arith.mulf %27, %29 : vector<8x32xf32>
    %31 = arith.addf %25, %30 : vector<8x32xf32>
    %32 = vector.extract_strided_slice %24 {offsets = [8, 0], sizes = [8, 8], strides = [1, 1]} : vector<16x8xf32> to vector<8x8xf32>
    %cst_28 = arith.constant dense<0.000000e+00> : vector<8x32xf32>
    %33 = tpu.matmul %32, %12, %cst_28 {dimension_numbers = #tpu.dot_dimension_numbers<[1], [0], [0], [1], [0, 0, 1, 1], [], []>, precision = #tpu.contract_precision<fp32>} : vector<8x8xf32>, vector<8x32xf32>, vector<8x32xf32> -> vector<8x32xf32>
    %34 = vector.extract_strided_slice %3 {offsets = [1, 0], sizes = [1, 32], strides = [1, 1]} : vector<2x32xf32> to vector<1x32xf32>
    %35 = vector.broadcast %34 : vector<1x32xf32> to vector<8x32xf32>
    %36 = arith.mulf %33, %35 : vector<8x32xf32>
    %37 = arith.addf %31, %36 : vector<8x32xf32>
    %cst_29 = arith.constant dense<0.000000e+00> : vector<8xf32>
    %38 = vector.multi_reduction <add>, %37, %cst_29 [1] : vector<8x32xf32> to vector<8xf32>
    %39 = vector.shape_cast %38 : vector<8xf32> to vector<8x1xf32>
    %cst_30 = arith.constant 3.200000e+01 : f32
    %40 = vector.broadcast %cst_30 : f32 to vector<8x1xf32>
    %41 = arith.divf %39, %40 : vector<8x1xf32>
    %42 = vector.broadcast %41 : vector<8x1xf32> to vector<8x32xf32>
    %43 = arith.subf %37, %42 : vector<8x32xf32>
    %44 = arith.mulf %43, %43 : vector<8x32xf32>
    %cst_31 = arith.constant dense<0.000000e+00> : vector<8xf32>
    %45 = vector.multi_reduction <add>, %44, %cst_31 [1] : vector<8x32xf32> to vector<8xf32>
    %46 = vector.shape_cast %45 : vector<8xf32> to vector<8x1xf32>
    %cst_32 = arith.constant 3.200000e+01 : f32
    %47 = vector.broadcast %cst_32 : f32 to vector<8x1xf32>
    %48 = arith.divf %46, %47 : vector<8x1xf32>
    %49 = vector.broadcast %41 : vector<8x1xf32> to vector<8x32xf32>
    %50 = arith.subf %37, %49 : vector<8x32xf32>
    %cst_33 = arith.constant 9.99999996E-13 : f32
    %51 = vector.broadcast %cst_33 : f32 to vector<8x1xf32>
    %52 = arith.addf %48, %51 : vector<8x1xf32>
    %53 = math.rsqrt %52 : vector<8x1xf32>
    %54 = vector.broadcast %53 : vector<8x1xf32> to vector<8x32xf32>
    %55 = arith.mulf %50, %54 : vector<8x32xf32>
    %56 = vector.broadcast %1 : vector<1x32xf32> to vector<8x32xf32>
    %57 = arith.mulf %55, %56 : vector<8x32xf32>
    %58 = vector.broadcast %2 : vector<1x32xf32> to vector<8x32xf32>
    %59 = arith.addf %57, %58 : vector<8x32xf32>
    %c1 = arith.constant 1 : index
    %c0_34 = arith.constant 0 : index
    %c0_35 = arith.constant 0 : index
    %60 = vector.load %arg0[%c1, %c0_34, %c0_35] : memref<2x8x32xf32, #tpu.memory_space<vmem>>, vector<1x8x32xf32>
    %61 = vector.shape_cast %60 : vector<1x8x32xf32> to vector<8x32xf32>
    %c1_36 = arith.constant 1 : index
    %c0_37 = arith.constant 0 : index
    %c0_38 = arith.constant 0 : index
    %62 = vector.load %arg1[%c1_36, %c0_37, %c0_38] : memref<2x8x32xf32, #tpu.memory_space<vmem>>, vector<1x8x32xf32>
    %63 = vector.shape_cast %62 : vector<1x8x32xf32> to vector<8x32xf32>
    %cst_39 = arith.constant dense<0.000000e+00> : vector<16x8xf32>
    %64 = tpu.matmul %0, %61, %cst_39 {dimension_numbers = #tpu.dot_dimension_numbers<[1], [1], [0], [0], [0, 0, 1, 0], [], []>, precision = #tpu.contract_precision<fp32>} : vector<16x32xf32>, vector<8x32xf32>, vector<16x8xf32> -> vector<16x8xf32>
    %cst_40 = arith.constant 2.500000e-01 : f32
    %65 = vector.broadcast %cst_40 : f32 to vector<16x8xf32>
    %66 = arith.mulf %64, %65 : vector<16x8xf32>
    %cst_41 = arith.constant dense<0xFF800000> : vector<16xf32>
    %67 = vector.multi_reduction <maximumf>, %66, %cst_41 [1] : vector<16x8xf32> to vector<16xf32>
    %68 = vector.shape_cast %67 : vector<16xf32> to vector<16x1xf32>
    %69 = vector.broadcast %68 : vector<16x1xf32> to vector<16x8xf32>
    %70 = arith.subf %66, %69 : vector<16x8xf32>
    %71 = math.exp %70 : vector<16x8xf32>
    %cst_42 = arith.constant dense<0.000000e+00> : vector<16xf32>
    %72 = vector.multi_reduction <add>, %71, %cst_42 [1] : vector<16x8xf32> to vector<16xf32>
    %73 = vector.shape_cast %72 : vector<16xf32> to vector<16x1xf32>
    %74 = vector.broadcast %73 : vector<16x1xf32> to vector<16x8xf32>
    %75 = arith.divf %71, %74 : vector<16x8xf32>
    %cst_43 = arith.constant 0.000000e+00 : f32
    %76 = vector.broadcast %cst_43 : f32 to vector<8x32xf32>
    %77 = vector.extract_strided_slice %75 {offsets = [0, 0], sizes = [8, 8], strides = [1, 1]} : vector<16x8xf32> to vector<8x8xf32>
    %cst_44 = arith.constant dense<0.000000e+00> : vector<8x32xf32>
    %78 = tpu.matmul %77, %63, %cst_44 {dimension_numbers = #tpu.dot_dimension_numbers<[1], [0], [0], [1], [0, 0, 1, 1], [], []>, precision = #tpu.contract_precision<fp32>} : vector<8x8xf32>, vector<8x32xf32>, vector<8x32xf32> -> vector<8x32xf32>
    %79 = vector.extract_strided_slice %3 {offsets = [0, 0], sizes = [1, 32], strides = [1, 1]} : vector<2x32xf32> to vector<1x32xf32>
    %80 = vector.broadcast %79 : vector<1x32xf32> to vector<8x32xf32>
    %81 = arith.mulf %78, %80 : vector<8x32xf32>
    %82 = arith.addf %76, %81 : vector<8x32xf32>
    %83 = vector.extract_strided_slice %75 {offsets = [8, 0], sizes = [8, 8], strides = [1, 1]} : vector<16x8xf32> to vector<8x8xf32>
    %cst_45 = arith.constant dense<0.000000e+00> : vector<8x32xf32>
    %84 = tpu.matmul %83, %63, %cst_45 {dimension_numbers = #tpu.dot_dimension_numbers<[1], [0], [0], [1], [0, 0, 1, 1], [], []>, precision = #tpu.contract_precision<fp32>} : vector<8x8xf32>, vector<8x32xf32>, vector<8x32xf32> -> vector<8x32xf32>
    %85 = vector.extract_strided_slice %3 {offsets = [1, 0], sizes = [1, 32], strides = [1, 1]} : vector<2x32xf32> to vector<1x32xf32>
    %86 = vector.broadcast %85 : vector<1x32xf32> to vector<8x32xf32>
    %87 = arith.mulf %84, %86 : vector<8x32xf32>
    %88 = arith.addf %82, %87 : vector<8x32xf32>
    %cst_46 = arith.constant dense<0.000000e+00> : vector<8xf32>
    %89 = vector.multi_reduction <add>, %88, %cst_46 [1] : vector<8x32xf32> to vector<8xf32>
    %90 = vector.shape_cast %89 : vector<8xf32> to vector<8x1xf32>
    %cst_47 = arith.constant 3.200000e+01 : f32
    %91 = vector.broadcast %cst_47 : f32 to vector<8x1xf32>
    %92 = arith.divf %90, %91 : vector<8x1xf32>
    %93 = vector.broadcast %92 : vector<8x1xf32> to vector<8x32xf32>
    %94 = arith.subf %88, %93 : vector<8x32xf32>
    %95 = arith.mulf %94, %94 : vector<8x32xf32>
    %cst_48 = arith.constant dense<0.000000e+00> : vector<8xf32>
    %96 = vector.multi_reduction <add>, %95, %cst_48 [1] : vector<8x32xf32> to vector<8xf32>
    %97 = vector.shape_cast %96 : vector<8xf32> to vector<8x1xf32>
    %cst_49 = arith.constant 3.200000e+01 : f32
    %98 = vector.broadcast %cst_49 : f32 to vector<8x1xf32>
    %99 = arith.divf %97, %98 : vector<8x1xf32>
    %100 = vector.broadcast %92 : vector<8x1xf32> to vector<8x32xf32>
    %101 = arith.subf %88, %100 : vector<8x32xf32>
    %cst_50 = arith.constant 9.99999996E-13 : f32
    %102 = vector.broadcast %cst_50 : f32 to vector<8x1xf32>
    %103 = arith.addf %99, %102 : vector<8x1xf32>
    %104 = math.rsqrt %103 : vector<8x1xf32>
    %105 = vector.broadcast %104 : vector<8x1xf32> to vector<8x32xf32>
    %106 = arith.mulf %101, %105 : vector<8x32xf32>
    %107 = vector.broadcast %1 : vector<1x32xf32> to vector<8x32xf32>
    %108 = arith.mulf %106, %107 : vector<8x32xf32>
    %109 = vector.broadcast %2 : vector<1x32xf32> to vector<8x32xf32>
    %110 = arith.addf %108, %109 : vector<8x32xf32>
    %111 = tpu.concatenate %59, %110 in 0 : vector<8x32xf32>, vector<8x32xf32> -> vector<16x32xf32>
    %cst_51 = arith.constant dense<0.000000e+00> : vector<16x256xf32>
    %112 = tpu.matmul %111, %5, %cst_51 {dimension_numbers = #tpu.dot_dimension_numbers<[1], [0], [0], [1], [0, 0, 1, 1], [], []>, precision = #tpu.contract_precision<fp32>} : vector<16x32xf32>, vector<32x256xf32>, vector<16x256xf32> -> vector<16x256xf32>
    %cst_52 = arith.constant dense<0.000000e+00> : vector<16x256xf32>
    %113 = tpu.matmul %111, %6, %cst_52 {dimension_numbers = #tpu.dot_dimension_numbers<[1], [0], [0], [1], [0, 0, 1, 1], [], []>, precision = #tpu.contract_precision<fp32>} : vector<16x32xf32>, vector<32x256xf32>, vector<16x256xf32> -> vector<16x256xf32>
    %114 = vector.extract_strided_slice %112 {offsets = [0, 0], sizes = [8, 256], strides = [1, 1]} : vector<16x256xf32> to vector<8x256xf32>
    %115 = arith.mulf %114, %4 : vector<8x256xf32>
    %cst_53 = arith.constant dense<0.000000e+00> : vector<256xf32>
    %116 = vector.multi_reduction <add>, %115, %cst_53 [0] : vector<8x256xf32> to vector<256xf32>
    %117 = vector.shape_cast %116 : vector<256xf32> to vector<1x256xf32>
    %118 = arith.addf %117, %7 : vector<1x256xf32>
    %119 = vector.extract_strided_slice %113 {offsets = [0, 0], sizes = [8, 256], strides = [1, 1]} : vector<16x256xf32> to vector<8x256xf32>
    %120 = arith.mulf %119, %4 : vector<8x256xf32>
    %cst_54 = arith.constant dense<0.000000e+00> : vector<256xf32>
    %121 = vector.multi_reduction <add>, %120, %cst_54 [0] : vector<8x256xf32> to vector<256xf32>
    %122 = vector.shape_cast %121 : vector<256xf32> to vector<1x256xf32>
    %123 = arith.addf %122, %8 : vector<1x256xf32>
    %124 = vector.extract_strided_slice %112 {offsets = [8, 0], sizes = [8, 256], strides = [1, 1]} : vector<16x256xf32> to vector<8x256xf32>
    %125 = arith.mulf %124, %4 : vector<8x256xf32>
    %cst_55 = arith.constant dense<0.000000e+00> : vector<256xf32>
    %126 = vector.multi_reduction <add>, %125, %cst_55 [0] : vector<8x256xf32> to vector<256xf32>
    %127 = vector.shape_cast %126 : vector<256xf32> to vector<1x256xf32>
    %128 = arith.addf %127, %7 : vector<1x256xf32>
    %129 = vector.extract_strided_slice %113 {offsets = [8, 0], sizes = [8, 256], strides = [1, 1]} : vector<16x256xf32> to vector<8x256xf32>
    %130 = arith.mulf %129, %4 : vector<8x256xf32>
    %cst_56 = arith.constant dense<0.000000e+00> : vector<256xf32>
    %131 = vector.multi_reduction <add>, %130, %cst_56 [0] : vector<8x256xf32> to vector<256xf32>
    %132 = vector.shape_cast %131 : vector<256xf32> to vector<1x256xf32>
    %133 = arith.addf %132, %8 : vector<1x256xf32>
    %134 = tpu.concatenate %118, %128 in 0 : vector<1x256xf32>, vector<1x256xf32> -> vector<2x256xf32>
    %c0_57 = arith.constant 0 : index
    %c0_58 = arith.constant 0 : index
    %135 = vector.load %arg11[%c0_57, %c0_58] : memref<2x256xf32, #tpu.memory_space<vmem>>, vector<2x256xf32>
    tpu.vector_store %arg11[%c0_57, %c0_58], %134 {strides = array<i32>} : memref<2x256xf32, #tpu.memory_space<vmem>>, vector<2x256xf32>,
    %136 = tpu.concatenate %123, %133 in 0 : vector<1x256xf32>, vector<1x256xf32> -> vector<2x256xf32>
    %c0_59 = arith.constant 0 : index
    %c0_60 = arith.constant 0 : index
    %137 = vector.load %arg12[%c0_59, %c0_60] : memref<2x256xf32, #tpu.memory_space<vmem>>, vector<2x256xf32>
    tpu.vector_store %arg12[%c0_59, %c0_60], %136 {strides = array<i32>} : memref<2x256xf32, #tpu.memory_space<vmem>>, vector<2x256xf32>,
    return
  }
}

</mosaic_0001>

<llo_original>
// kernel: neuron_bank_forward.1
$region0: #{neuron_bank_forward.1}
  #allocation0 [shape = 'u32[]', space=smem, size = 0x4, offset = 0x4, fixed_abs, tag = 'smem constant byte address 0x4 - core index']
  #allocation1 [shape = 'u32[144,128]{1,0:T(1,128)}', space=vmem, size = 0x12000, scoped, tag = 'internal scratch']
  %s0 = inlined_call_operand.hbm [shape: f32[2,8,32], index: 0, kind: input, shape index: {}]
  %s1 = inlined_call_operand.hbm [shape: f32[2,8,32], index: 1, kind: input, shape index: {}]
  %s2 = inlined_call_operand.vmem [shape: f32[16,32], index: 2, kind: input, shape index: {}]
  %s3 = inlined_call_operand.vmem [shape: f32[1,32], index: 3, kind: input, shape index: {}]
  %s4 = inlined_call_operand.hbm [shape: f32[1,32], index: 4, kind: input, shape index: {}]
  %s5 = inlined_call_operand.vmem [shape: f32[2,32], index: 5, kind: input, shape index: {}]
  %s6 = inlined_call_operand.hbm [shape: f32[8,256], index: 6, kind: input, shape index: {}]
  %s7 = inlined_call_operand.hbm [shape: f32[32,256], index: 7, kind: input, shape index: {}]
  %s8 = inlined_call_operand.vmem [shape: f32[1,256], index: 8, kind: input, shape index: {}]
  %s9 = inlined_call_operand.hbm [shape: f32[32,256], index: 9, kind: input, shape index: {}]
  %s10 = inlined_call_operand.vmem [shape: f32[1,256], index: 10, kind: input, shape index: {}]
  %s11 = inlined_call_operand.vmem [shape: f32[2,256], index: 11, kind: output, shape index: {0}]
  %s12 = inlined_call_operand.vmem [shape: f32[2,256], index: 12, kind: output, shape index: {1}]
  %13 = xla_tuple %s11, %s12
  %s14 = sld [smem:[#allocation0]]
  $region86: #{neuron_bank_forward.1} parent=0
    _
  %s16 = ssub.s32 1, %s14
  %s17 = scalar_select 0, %s16, %s14
  $region1: #{neuron_bank_forward.1} parent=0
    #allocation2 [shape = 'u8[8192]{0}', space=vmem, size = 0x2000, scoped, tag = 'input window, operand 0, single buffered']
    #allocation3 [shape = 's32[1]{0}', space=sflag, size = 0x4, scoped, tag = 'scoped memory for neuron_bank_forward.1']
    #allocation4 [shape = 'u8[8192]{0}', space=vmem, size = 0x2000, scoped, tag = 'input window, operand 1, single buffered']
    #allocation5 [shape = 's32[1]{0}', space=sflag, size = 0x4, scoped, tag = 'scoped memory for neuron_bank_forward.1']
    #allocation6 [shape = 'u8[512]{0}', space=vmem, size = 0x400, scoped, tag = 'input window, operand 4, single buffered']
    #allocation7 [shape = 'u8[8192]{0}', space=vmem, size = 0x2000, scoped, tag = 'input window, operand 6, single buffered']
    #allocation8 [shape = 's32[1]{0}', space=sflag, size = 0x4, scoped, tag = 'scoped memory for neuron_bank_forward.1']
    #allocation9 [shape = 'u8[32768]{0}', space=vmem, size = 0x8000, scoped, tag = 'input window, operand 7, single buffered']
    #allocation10 [shape = 'u8[32768]{0}', space=vmem, size = 0x8000, scoped, tag = 'input window, operand 9, single buffered']
    #allocation11 [shape = 's32[1]{0}', space=sflag, size = 0x4, scoped, tag = 'scoped memory for neuron_bank_forward.1']
    %18 = vsyncpa [#allocation3], 0
    %19 = vsyncpa [#allocation5], 0
    %20 = vsyncpa [#allocation8], 0
    %21 = vsyncpa [#allocation11], 0
    // Predicated region
    $region2: #{neuron_bank_forward.1} parent=1 // pred_check
      _
    $region3: #{neuron_bank_forward.1} parent=1 // pred_check_branch
      %23 = sbr.rel (0) target = $region5
    $region4: #{neuron_bank_forward.1} parent=1 // pred_region
      %s25 = ssub.s32 256, 256
      %26 = vsyncadd [#allocation3], %s25
      %s27 = sshll.u32 [#allocation2], 4
      %s28 = int_to_ptr.vmem [resolvable:$true] %s27
      %33 = dma.hbm_to_vmem [thread:$0]  %s0, 256, %s28, [#allocation3], 128, 128, 8
    $region5: #{neuron_bank_forward.1} parent=1 // pred_fallthru
      _
    // Predicated region
    $region6: #{neuron_bank_forward.1} parent=1 // pred_check
      _
    $region7: #{neuron_bank_forward.1} parent=1 // pred_check_branch
      %35 = sbr.rel (0) target = $region9
    $region8: #{neuron_bank_forward.1} parent=1 // pred_region
      %s37 = ssub.s32 256, 256
      %38 = vsyncadd [#allocation5], %s37
      %s39 = sshll.u32 [#allocation4], 4
      %s40 = int_to_ptr.vmem [resolvable:$true] %s39
      %45 = dma.hbm_to_vmem [thread:$0]  %s1, 256, %s40, [#allocation5], 128, 128, 8
    $region9: #{neuron_bank_forward.1} parent=1 // pred_fallthru
      _
    // Predicated region
    $region10: #{neuron_bank_forward.1} parent=1 // pred_check
      _
    $region11: #{neuron_bank_forward.1} parent=1 // pred_check_branch
      %47 = sbr.rel (0) target = $region13
    $region12: #{neuron_bank_forward.1} parent=1 // pred_region
      _
    $region13: #{neuron_bank_forward.1} parent=1 // pred_fallthru
      _
    // Predicated region
    $region14: #{neuron_bank_forward.1} parent=1 // pred_check
      _
    $region15: #{neuron_bank_forward.1} parent=1 // pred_check_branch
      %49 = sbr.rel (0) target = $region17
    $region16: #{neuron_bank_forward.1} parent=1 // pred_region
      _
    $region17: #{neuron_bank_forward.1} parent=1 // pred_fallthru
      _
    // Predicated region
    $region18: #{neuron_bank_forward.1} parent=1 // pred_check
      _
    $region19: #{neuron_bank_forward.1} parent=1 // pred_check_branch
      %51 = sbr.rel (0) target = $region21
    $region20: #{neuron_bank_forward.1} parent=1 // pred_region
      %s53 = ssub.s32 16, 16
      %54 = vsyncadd [#allocation5], %s53
      %s56 = sshll.u32 [#allocation6], 4
      %s57 = int_to_ptr.vmem [resolvable:$true] %s56
      %59 = dma.hbm_to_vmem [thread:$0]  %s4, 16, %s57, [#allocation5]
    $region21: #{neuron_bank_forward.1} parent=1 // pred_fallthru
      _
    // Predicated region
    $region22: #{neuron_bank_forward.1} parent=1 // pred_check
      _
    $region23: #{neuron_bank_forward.1} parent=1 // pred_check_branch
      %61 = sbr.rel (0) target = $region25
    $region24: #{neuron_bank_forward.1} parent=1 // pred_region
      _
    $region25: #{neuron_bank_forward.1} parent=1 // pred_fallthru
      _
    // Predicated region
    $region26: #{neuron_bank_forward.1} parent=1 // pred_check
      _
    $region27: #{neuron_bank_forward.1} parent=1 // pred_check_branch
      %63 = sbr.rel (0) target = $region29
    $region28: #{neuron_bank_forward.1} parent=1 // pred_region
      %s65 = ssub.s32 256, 256
      %66 = vsyncadd [#allocation8], %s65
      %s68 = sshll.u32 [#allocation7], 4
      %s69 = int_to_ptr.vmem [resolvable:$true] %s68
      %71 = dma.hbm_to_vmem [thread:$0]  %s6, 256, %s69, [#allocation8]
    $region29: #{neuron_bank_forward.1} parent=1 // pred_fallthru
      _
    // Predicated region
    $region30: #{neuron_bank_forward.1} parent=1 // pred_check
      _
    $region31: #{neuron_bank_forward.1} parent=1 // pred_check_branch
      %73 = sbr.rel (0) target = $region33
    $region32: #{neuron_bank_forward.1} parent=1 // pred_region
      %s75 = ssub.s32 1024, 1024
      %76 = vsyncadd [#allocation8], %s75
      %s77 = sshll.u32 [#allocation9], 4
      %s78 = int_to_ptr.vmem [resolvable:$true] %s77
      %83 = dma.hbm_to_vmem [thread:$0]  %s7, 1024, %s78, [#allocation8], 256, 256, 16
    $region33: #{neuron_bank_forward.1} parent=1 // pred_fallthru
      _
    // Predicated region
    $region34: #{neuron_bank_forward.1} parent=1 // pred_check
      _
    $region35: #{neuron_bank_forward.1} parent=1 // pred_check_branch
      %85 = sbr.rel (0) target = $region37
    $region36: #{neuron_bank_forward.1} parent=1 // pred_region
      _
    $region37: #{neuron_bank_forward.1} parent=1 // pred_fallthru
      _
    // Predicated region
    $region38: #{neuron_bank_forward.1} parent=1 // pred_check
      _
    $region39: #{neuron_bank_forward.1} parent=1 // pred_check_branch
      %87 = sbr.rel (0) target = $region41
    $region40: #{neuron_bank_forward.1} parent=1 // pred_region
      %s89 = ssub.s32 1024, 1024
      %90 = vsyncadd [#allocation11], %s89
      %s91 = sshll.u32 [#allocation10], 4
      %s92 = int_to_ptr.vmem [resolvable:$true] %s91
      %97 = dma.hbm_to_vmem [thread:$0]  %s9, 1024, %s92, [#allocation11], 256, 256, 16
    $region41: #{neuron_bank_forward.1} parent=1 // pred_fallthru
      _
    // Predicated region
    $region42: #{neuron_bank_forward.1} parent=1 // pred_check
      _
    $region43: #{neuron_bank_forward.1} parent=1 // pred_check_branch
      %99 = sbr.rel (0) target = $region45
    $region44: #{neuron_bank_forward.1} parent=1 // pred_region
      _
    $region45: #{neuron_bank_forward.1} parent=1 // pred_fallthru
      _
    // Predicated region
    $region46: #{neuron_bank_forward.1} parent=1 // pred_check
      _
    $region47: #{neuron_bank_forward.1} parent=1 // pred_check_branch
      %101 = sbr.rel (0) target = $region49
    $region48: #{neuron_bank_forward.1} parent=1 // pred_region
      %102 = dma.done [#allocation3], 256
    $region49: #{neuron_bank_forward.1} parent=1 // pred_fallthru
      _
    // Predicated region
    $region50: #{neuron_bank_forward.1} parent=1 // pred_check
      _
    $region51: #{neuron_bank_forward.1} parent=1 // pred_check_branch
      %104 = sbr.rel (0) target = $region53
    $region52: #{neuron_bank_forward.1} parent=1 // pred_region
      %105 = dma.done [#allocation5], 256
    $region53: #{neuron_bank_forward.1} parent=1 // pred_fallthru
      _
    // Predicated region
    $region54: #{neuron_bank_forward.1} parent=1 // pred_check
      _
    $region55: #{neuron_bank_forward.1} parent=1 // pred_check_branch
      %107 = sbr.rel (0) target = $region57
    $region56: #{neuron_bank_forward.1} parent=1 // pred_region
      %108 = dma.done [#allocation5], 16
    $region57: #{neuron_bank_forward.1} parent=1 // pred_fallthru
      _
    // Predicated region
    $region58: #{neuron_bank_forward.1} parent=1 // pred_check
      _
    $region59: #{neuron_bank_forward.1} parent=1 // pred_check_branch
      %110 = sbr.rel (0) target = $region61
    $region60: #{neuron_bank_forward.1} parent=1 // pred_region
      %111 = dma.done [#allocation8], 256
    $region61: #{neuron_bank_forward.1} parent=1 // pred_fallthru
      _
    // Predicated region
    $region62: #{neuron_bank_forward.1} parent=1 // pred_check
      _
    $region63: #{neuron_bank_forward.1} parent=1 // pred_check_branch
      %113 = sbr.rel (0) target = $region65
    $region64: #{neuron_bank_forward.1} parent=1 // pred_region
      %114 = dma.done [#allocation8], 1024
    $region65: #{neuron_bank_forward.1} parent=1 // pred_fallthru
      _
    // Predicated region
    $region66: #{neuron_bank_forward.1} parent=1 // pred_check
      _
    $region67: #{neuron_bank_forward.1} parent=1 // pred_check_branch
      %116 = sbr.rel (0) target = $region69
    $region68: #{neuron_bank_forward.1} parent=1 // pred_region
      %117 = dma.done [#allocation11], 1024
    $region69: #{neuron_bank_forward.1} parent=1 // pred_fallthru
      _
    %v118 = vld [vmem:[%s2] sm:$0xff]
    %v119 = vld [vmem:[%s2 + $0x8] sm:$0xff]
    %v120 = vld [vmem:[%s3] sm:$0x1]
    %v121 = vld [vmem:[#allocation6] sm:$0x1]
    %v122 = vld [vmem:[%s5] sm:$0x3]
    %v123 = vld [vmem:[#allocation7] sm:$0xff]
    %v124 = vld [vmem:[#allocation7 + $0x8] sm:$0xff]
    %v125 = vld [vmem:[#allocation9] sm:$0xff]
    %v126 = vld [vmem:[#allocation9 + $0x8] sm:$0xff]
    %v127 = vld [vmem:[#allocation9 + $0x10] sm:$0xff]
    %v128 = vld [vmem:[#allocation9 + $0x18] sm:$0xff]
    %v129 = vld [vmem:[#allocation9 + $0x20] sm:$0xff]
    %v130 = vld [vmem:[#allocation9 + $0x28] sm:$0xff]
    %v131 = vld [vmem:[#allocation9 + $0x30] sm:$0xff]
    %v132 = vld [vmem:[#allocation9 + $0x38] sm:$0xff]
    %v133 = vld [vmem:[#allocation10] sm:$0xff]
    %v134 = vld [vmem:[#allocation10 + $0x8] sm:$0xff]
    %v135 = vld [vmem:[#allocation10 + $0x10] sm:$0xff]
    %v136 = vld [vmem:[#allocation10 + $0x18] sm:$0xff]
    %v137 = vld [vmem:[#allocation10 + $0x20] sm:$0xff]
    %v138 = vld [vmem:[#allocation10 + $0x28] sm:$0xff]
    %v139 = vld [vmem:[#allocation10 + $0x30] sm:$0xff]
    %v140 = vld [vmem:[#allocation10 + $0x38] sm:$0xff]
    %v141 = vld [vmem:[%s8] sm:$0x3]
    %v142 = vld [vmem:[%s10] sm:$0x3]
    %v143 = vld [vmem:[#allocation2] sm:$0xff]
    %v144 = vld [vmem:[#allocation4] sm:$0xff]
    %vm145 = vcmask 261120
    %v147 = vsel %vm145, %v118, 0
    %v150 = vsel %vm145, %v119, 0
    %v153 = vsel %vm145, %v143, 0
    %155 = vmatprep.subr.mxu0 0.0
    %v156 = vand.u32 %v153, 4294901760
    %157 = vmatpush1.xpose.msra.mxu0 %v156
    %158 = vmatprep.subr.mxu0 0.0
    %159 = vmatpush1.xpose.msra.mxu0 0.0
    %160 = vmatprep.subr.mxu0 0.0
    %161 = vmatpush1.xpose.msra.mxu0 0.0
    %162 = vmatprep.subr.mxu0 0.0
    %163 = vmatpush1.xpose.msra.mxu0 0.0
    %164 = vmatprep.subr.mxu0 0.0
    %165 = vmatpush1.xpose.msra.mxu0 0.0
    %166 = vmatprep.subr.mxu0 0.0
    %167 = vmatpush1.xpose.msra.mxu0 0.0
    %168 = vmatprep.subr.mxu0 0.0
    %169 = vmatpush1.xpose.msra.mxu0 0.0
    %170 = vmatprep.subr.mxu0 0.0
    %171 = vmatpush1.xpose.msra.mxu0 0.0
    %172 = vmatprep.subr.mxu0 0.0
    %173 = vmatpush1.xpose.msra.mxu0 0.0
    %174 = vmatprep.subr.mxu0 0.0
    %175 = vmatpush1.xpose.msra.mxu0 0.0
    %176 = vmatprep.subr.mxu0 0.0
    %177 = vmatpush1.xpose.msra.mxu0 0.0
    %178 = vmatprep.subr.mxu0 0.0
    %179 = vmatpush1.xpose.msra.mxu0 0.0
    %180 = vmatprep.subr.mxu0 0.0
    %181 = vmatpush1.xpose.msra.mxu0 0.0
    %182 = vmatprep.subr.mxu0 0.0
    %183 = vmatpush1.xpose.msra.mxu0 0.0
    %184 = vmatprep.subr.mxu0 0.0
    %185 = vmatpush1.xpose.msra.mxu0 0.0
    %186 = vmatprep.subr.mxu0 0.0
    %187 = vmatpush1.xpose.msra.mxu0 0.0
    %188 = vmatprep.subr.mxu0 0.0
    %189 = vmatpush1.xpose.msra.mxu0 0.0
    %190 = vmatprep.subr.mxu0 0.0
    %191 = vmatpush1.xpose.msra.mxu0 0.0
    %192 = vmatprep.subr.mxu0 0.0
    %193 = vmatpush1.xpose.msra.mxu0 0.0
    %194 = vmatprep.subr.mxu0 0.0
    %195 = vmatpush1.xpose.msra.mxu0 0.0
    %196 = vmatprep.subr.mxu0 0.0
    %197 = vmatpush1.xpose.msra.mxu0 0.0
    %198 = vmatprep.subr.mxu0 0.0
    %199 = vmatpush1.xpose.msra.mxu0 0.0
    %200 = vmatprep.subr.mxu0 0.0
    %201 = vmatpush1.xpose.msra.mxu0 0.0
    %202 = vmatprep.subr.mxu0 0.0
    %203 = vmatpush1.xpose.msra.mxu0 0.0
    %204 = vmatprep.subr.mxu0 0.0
    %205 = vmatpush1.xpose.msra.mxu0 0.0
    %206 = vmatprep.subr.mxu0 0.0
    %207 = vmatpush1.xpose.msra.mxu0 0.0
    %208 = vmatprep.subr.mxu0 0.0
    %209 = vmatpush1.xpose.msra.mxu0 0.0
    %210 = vmatprep.subr.mxu0 0.0
    %211 = vmatpush1.xpose.msra.mxu0 0.0
    %212 = vmatprep.subr.mxu0 0.0
    %213 = vmatpush1.xpose.msra.mxu0 0.0
    %214 = vmatprep.subr.mxu0 0.0
    %215 = vmatpush1.xpose.msra.mxu0 0.0
    %216 = vmatprep.subr.mxu0 0.0
    %217 = vmatpush1.xpose.msra.mxu0 0.0
    %218 = vmatprep.subr.mxu0 0.0
    %219 = vmatpush1.xpose.msra.mxu0 0.0
    %220 = vmatprep.mubr.f32.mxu0 0.0
    %v221 = vand.u32 %v147, 4294901760
    %v222 = vsub.f32 %v147, %v221
    %v223 = vand.u32 %v222, 4294901760
    %v224 = vsub.f32 %v222, %v223
    %v225 = vand.u32 %v224, 4294901760
    %226 = vmatmul.mubr.f32.gmra.mrb[0].mxu0 %v225
    %v227 = vpop.f32.mrb[0].mxu0
    %v228 = vadd.f32 0.0, %v227
    %v229 = vpop.f32.mrb[0].mxu0
    %230 = vmatprep.mubr.f32.mxu0 0.0
    %v231 = vand.u32 %v150, 4294901760
    %v232 = vsub.f32 %v150, %v231
    %v233 = vand.u32 %v232, 4294901760
    %v234 = vsub.f32 %v232, %v233
    %v235 = vand.u32 %v234, 4294901760
    %236 = vmatmul.mubr.f32.gmra.mrb[0].mxu0 %v235
    %v237 = vpop.f32.mrb[0].mxu0
    %v238 = vadd.f32 0.0, %v237
    %v239 = vpop.f32.mrb[0].mxu0
    %240 = vdwg.mxu0
    %241 = vmatprep.subr.mxu0 0.0
    %v242 = vand.u32 %v153, 4294901760
    %v243 = vsub.f32 %v153, %v242
    %v244 = vand.u32 %v243, 4294901760
    %v245 = vsub.f32 %v243, %v244
    %v246 = vand.u32 %v245, 4294901760
    %247 = vmatpush1.xpose.msra.mxu0 %v246
    %248 = vmatprep.subr.mxu0 0.0
    %249 = vmatpush1.xpose.msra.mxu0 0.0
    %250 = vmatprep.subr.mxu0 0.0
    %251 = vmatpush1.xpose.msra.mxu0 0.0
    %252 = vmatprep.subr.mxu0 0.0
    %253 = vmatpush1.xpose.msra.mxu0 0.0
    %254 = vmatprep.subr.mxu0 0.0
    %255 = vmatpush1.xpose.msra.mxu0 0.0
    %256 = vmatprep.subr.mxu0 0.0
    %257 = vmatpush1.xpose.msra.mxu0 0.0
    %258 = vmatprep.subr.mxu0 0.0
    %259 = vmatpush1.xpose.msra.mxu0 0.0
    %260 = vmatprep.subr.mxu0 0.0
    %261 = vmatpush1.xpose.msra.mxu0 0.0
    %262 = vmatprep.subr.mxu0 0.0
    %263 = vmatpush1.xpose.msra.mxu0 0.0
    %264 = vmatprep.subr.mxu0 0.0
    %265 = vmatpush1.xpose.msra.mxu0 0.0
    %266 = vmatprep.subr.mxu0 0.0
    %267 = vmatpush1.xpose.msra.mxu0 0.0
    %268 = vmatprep.subr.mxu0 0.0
    %269 = vmatpush1.xpose.msra.mxu0 0.0
    %270 = vmatprep.subr.mxu0 0.0
    %271 = vmatpush1.xpose.msra.mxu0 0.0
    %272 = vmatprep.subr.mxu0 0.0
    %273 = vmatpush1.xpose.msra.mxu0 0.0
    %274 = vmatprep.subr.mxu0 0.0
    %275 = vmatpush1.xpose.msra.mxu0 0.0
    %276 = vmatprep.subr.mxu0 0.0
    %277 = vmatpush1.xpose.msra.mxu0 0.0
    %278 = vmatprep.subr.mxu0 0.0
    %279 = vmatpush1.xpose.msra.mxu0 0.0
    %280 = vmatprep.subr.mxu0 0.0
    %281 = vmatpush1.xpose.msra.mxu0 0.0
    %282 = vmatprep.subr.mxu0 0.0
    %283 = vmatpush1.xpose.msra.mxu0 0.0
    %284 = vmatprep.subr.mxu0 0.0
    %285 = vmatpush1.xpose.msra.mxu0 0.0
    %286 = vmatprep.subr.mxu0 0.0
    %287 = vmatpush1.xpose.msra.mxu0 0.0
    %288 = vmatprep.subr.mxu0 0.0
    %289 = vmatpush1.xpose.msra.mxu0 0.0
    %290 = vmatprep.subr.mxu0 0.0
    %291 = vmatpush1.xpose.msra.mxu0 0.0
    %292 = vmatprep.subr.mxu0 0.0
    %293 = vmatpush1.xpose.msra.mxu0 0.0
    %294 = vmatprep.subr.mxu0 0.0
    %295 = vmatpush1.xpose.msra.mxu0 0.0
    %296 = vmatprep.subr.mxu0 0.0
    %297 = vmatpush1.xpose.msra.mxu0 0.0
    %298 = vmatprep.subr.mxu0 0.0
    %299 = vmatpush1.xpose.msra.mxu0 0.0
    %300 = vmatprep.subr.mxu0 0.0
    %301 = vmatpush1.xpose.msra.mxu0 0.0
    %302 = vmatprep.subr.mxu0 0.0
    %303 = vmatpush1.xpose.msra.mxu0 0.0
    %304 = vmatprep.subr.mxu0 0.0
    %305 = vmatpush1.xpose.msra.mxu0 0.0
    %306 = vmatprep.subr.mxu0 0.0
    %307 = vmatpush1.xpose.msra.mxu0 0.0
    %308 = vmatprep.subr.mxu0 0.0
    %309 = vmatpush1.xpose.msra.mxu0 0.0
    %310 = vmatprep.mubr.f32.mxu0 0.0
    %v311 = vand.u32 %v147, 4294901760
    %312 = vmatmul.mubr.f32.gmra.mrb[0].mxu0 %v311
    %v313 = vpop.f32.mrb[0].mxu0
    %v314 = vadd.f32 %v228, %v313
    %v315 = vpop.f32.mrb[0].mxu0
    %316 = vmatprep.mubr.f32.mxu0 0.0
    %v317 = vand.u32 %v150, 4294901760
    %318 = vmatmul.mubr.f32.gmra.mrb[0].mxu0 %v317
    %v319 = vpop.f32.mrb[0].mxu0
    %v320 = vadd.f32 %v238, %v319
    %v321 = vpop.f32.mrb[0].mxu0
    %322 = vdwg.mxu0
    %323 = vmatprep.subr.mxu0 0.0
    %v324 = vand.u32 %v153, 4294901760
    %v325 = vsub.f32 %v153, %v324
    %326 = vmatpush1.xpose.msra.mxu0 %v325
    %327 = vmatprep.subr.mxu0 0.0
    %328 = vmatpush1.xpose.msra.mxu0 0.0
    %329 = vmatprep.subr.mxu0 0.0
    %330 = vmatpush1.xpose.msra.mxu0 0.0
    %331 = vmatprep.subr.mxu0 0.0
    %332 = vmatpush1.xpose.msra.mxu0 0.0
    %333 = vmatprep.subr.mxu0 0.0
    %334 = vmatpush1.xpose.msra.mxu0 0.0
    %335 = vmatprep.subr.mxu0 0.0
    %336 = vmatpush1.xpose.msra.mxu0 0.0
    %337 = vmatprep.subr.mxu0 0.0
    %338 = vmatpush1.xpose.msra.mxu0 0.0
    %339 = vmatprep.subr.mxu0 0.0
    %340 = vmatpush1.xpose.msra.mxu0 0.0
    %341 = vmatprep.subr.mxu0 0.0
    %342 = vmatpush1.xpose.msra.mxu0 0.0
    %343 = vmatprep.subr.mxu0 0.0
    %344 = vmatpush1.xpose.msra.mxu0 0.0
    %345 = vmatprep.subr.mxu0 0.0
    %346 = vmatpush1.xpose.msra.mxu0 0.0
    %347 = vmatprep.subr.mxu0 0.0
    %348 = vmatpush1.xpose.msra.mxu0 0.0
    %349 = vmatprep.subr.mxu0 0.0
    %350 = vmatpush1.xpose.msra.mxu0 0.0
    %351 = vmatprep.subr.mxu0 0.0
    %352 = vmatpush1.xpose.msra.mxu0 0.0
    %353 = vmatprep.subr.mxu0 0.0
    %354 = vmatpush1.xpose.msra.mxu0 0.0
    %355 = vmatprep.subr.mxu0 0.0
    %356 = vmatpush1.xpose.msra.mxu0 0.0
    %357 = vmatprep.subr.mxu0 0.0
    %358 = vmatpush1.xpose.msra.mxu0 0.0
    %359 = vmatprep.subr.mxu0 0.0
    %360 = vmatpush1.xpose.msra.mxu0 0.0
    %361 = vmatprep.subr.mxu0 0.0
    %362 = vmatpush1.xpose.msra.mxu0 0.0
    %363 = vmatprep.subr.mxu0 0.0
    %364 = vmatpush1.xpose.msra.mxu0 0.0
    %365 = vmatprep.subr.mxu0 0.0
    %366 = vmatpush1.xpose.msra.mxu0 0.0
    %367 = vmatprep.subr.mxu0 0.0
    %368 = vmatpush1.xpose.msra.mxu0 0.0
    %369 = vmatprep.subr.mxu0 0.0
    %370 = vmatpush1.xpose.msra.mxu0 0.0
    %371 = vmatprep.subr.mxu0 0.0
    %372 = vmatpush1.xpose.msra.mxu0 0.0
    %373 = vmatprep.subr.mxu0 0.0
    %374 = vmatpush1.xpose.msra.mxu0 0.0
    %375 = vmatprep.subr.mxu0 0.0
    %376 = vmatpush1.xpose.msra.mxu0 0.0
    %377 = vmatprep.subr.mxu0 0.0
    %378 = vmatpush1.xpose.msra.mxu0 0.0
    %379 = vmatprep.subr.mxu0 0.0
    %380 = vmatpush1.xpose.msra.mxu0 0.0
    %381 = vmatprep.subr.mxu0 0.0
    %382 = vmatpush1.xpose.msra.mxu0 0.0
    %383 = vmatprep.subr.mxu0 0.0
    %384 = vmatpush1.xpose.msra.mxu0 0.0
    %385 = vmatprep.subr.mxu0 0.0
    %386 = vmatpush1.xpose.msra.mxu0 0.0
    %387 = vmatprep.subr.mxu0 0.0
    %388 = vmatpush1.xpose.msra.mxu0 0.0
    %389 = vmatprep.mubr.f32.mxu0 0.0
    %v390 = vand.u32 %v147, 4294901760
    %v391 = vsub.f32 %v147, %v390
    %392 = vmatmul.mubr.f32.gmra.mrb[0].mxu0 %v391
    %v393 = vpop.f32.mrb[0].mxu0
    %v394 = vadd.f32 %v314, %v393
    %v395 = vpop.f32.mrb[0].mxu0
    %396 = vmatprep.mubr.f32.mxu0 0.0
    %v397 = vand.u32 %v150, 4294901760
    %v398 = vsub.f32 %v150, %v397
    %399 = vmatmul.mubr.f32.gmra.mrb[0].mxu0 %v398
    %v400 = vpop.f32.mrb[0].mxu0
    %v401 = vadd.f32 %v320, %v400
    %v402 = vpop.f32.mrb[0].mxu0
    %403 = vdwg.mxu0
    %404 = vmatprep.subr.mxu0 0.0
    %v405 = vand.u32 %v153, 4294901760
    %406 = vmatpush1.xpose.msra.mxu0 %v405
    %407 = vmatprep.subr.mxu0 0.0
    %408 = vmatpush1.xpose.msra.mxu0 0.0
    %409 = vmatprep.subr.mxu0 0.0
    %410 = vmatpush1.xpose.msra.mxu0 0.0
    %411 = vmatprep.subr.mxu0 0.0
    %412 = vmatpush1.xpose.msra.mxu0 0.0
    %413 = vmatprep.subr.mxu0 0.0
    %414 = vmatpush1.xpose.msra.mxu0 0.0
    %415 = vmatprep.subr.mxu0 0.0
    %416 = vmatpush1.xpose.msra.mxu0 0.0
    %417 = vmatprep.subr.mxu0 0.0
    %418 = vmatpush1.xpose.msra.mxu0 0.0
    %419 = vmatprep.subr.mxu0 0.0
    %420 = vmatpush1.xpose.msra.mxu0 0.0
    %421 = vmatprep.subr.mxu0 0.0
    %422 = vmatpush1.xpose.msra.mxu0 0.0
    %423 = vmatprep.subr.mxu0 0.0
    %424 = vmatpush1.xpose.msra.mxu0 0.0
    %425 = vmatprep.subr.mxu0 0.0
    %426 = vmatpush1.xpose.msra.mxu0 0.0
    %427 = vmatprep.subr.mxu0 0.0
    %428 = vmatpush1.xpose.msra.mxu0 0.0
    %429 = vmatprep.subr.mxu0 0.0
    %430 = vmatpush1.xpose.msra.mxu0 0.0
    %431 = vmatprep.subr.mxu0 0.0
    %432 = vmatpush1.xpose.msra.mxu0 0.0
    %433 = vmatprep.subr.mxu0 0.0
    %434 = vmatpush1.xpose.msra.mxu0 0.0
    %435 = vmatprep.subr.mxu0 0.0
    %436 = vmatpush1.xpose.msra.mxu0 0.0
    %437 = vmatprep.subr.mxu0 0.0
    %438 = vmatpush1.xpose.msra.mxu0 0.0
    %439 = vmatprep.subr.mxu0 0.0
    %440 = vmatpush1.xpose.msra.mxu0 0.0
    %441 = vmatprep.subr.mxu0 0.0
    %442 = vmatpush1.xpose.msra.mxu0 0.0
    %443 = vmatprep.subr.mxu0 0.0
    %444 = vmatpush1.xpose.msra.mxu0 0.0
    %445 = vmatprep.subr.mxu0 0.0
    %446 = vmatpush1.xpose.msra.mxu0 0.0
    %447 = vmatprep.subr.mxu0 0.0
    %448 = vmatpush1.xpose.msra.mxu0 0.0
    %449 = vmatprep.subr.mxu0 0.0
    %450 = vmatpush1.xpose.msra.mxu0 0.0
    %451 = vmatprep.subr.mxu0 0.0
    %452 = vmatpush1.xpose.msra.mxu0 0.0
    %453 = vmatprep.subr.mxu0 0.0
    %454 = vmatpush1.xpose.msra.mxu0 0.0
    %455 = vmatprep.subr.mxu0 0.0
    %456 = vmatpush1.xpose.msra.mxu0 0.0
    %457 = vmatprep.subr.mxu0 0.0
    %458 = vmatpush1.xpose.msra.mxu0 0.0
    %459 = vmatprep.subr.mxu0 0.0
    %460 = vmatpush1.xpose.msra.mxu0 0.0
    %461 = vmatprep.subr.mxu0 0.0
    %462 = vmatpush1.xpose.msra.mxu0 0.0
    %463 = vmatprep.subr.mxu0 0.0
    %464 = vmatpush1.xpose.msra.mxu0 0.0
    %465 = vmatprep.subr.mxu0 0.0
    %466 = vmatpush1.xpose.msra.mxu0 0.0
    %467 = vmatprep.subr.mxu0 0.0
    %468 = vmatpush1.xpose.msra.mxu0 0.0
    %469 = vmatprep.mubr.f32.mxu0 0.0
    %v470 = vand.u32 %v147, 4294901760
    %v471 = vsub.f32 %v147, %v470
    %v472 = vand.u32 %v471, 4294901760
    %473 = vmatmul.mubr.f32.gmra.mrb[0].mxu0 %v472
    %v474 = vpop.f32.mrb[0].mxu0
    %v475 = vadd.f32 %v394, %v474
    %v476 = vpop.f32.mrb[0].mxu0
    %477 = vmatprep.mubr.f32.mxu0 0.0
    %v478 = vand.u32 %v150, 4294901760
    %v479 = vsub.f32 %v150, %v478
    %v480 = vand.u32 %v479, 4294901760
    %481 = vmatmul.mubr.f32.gmra.mrb[0].mxu0 %v480
    %v482 = vpop.f32.mrb[0].mxu0
    %v483 = vadd.f32 %v401, %v482
    %v484 = vpop.f32.mrb[0].mxu0
    %485 = vdwg.mxu0
    %486 = vmatprep.subr.mxu0 0.0
    %v487 = vand.u32 %v153, 4294901760
    %v488 = vsub.f32 %v153, %v487
    %v489 = vand.u32 %v488, 4294901760
    %490 = vmatpush1.xpose.msra.mxu0 %v489
    %491 = vmatprep.subr.mxu0 0.0
    %492 = vmatpush1.xpose.msra.mxu0 0.0
    %493 = vmatprep.subr.mxu0 0.0
    %494 = vmatpush1.xpose.msra.mxu0 0.0
    %495 = vmatprep.subr.mxu0 0.0
    %496 = vmatpush1.xpose.msra.mxu0 0.0
    %497 = vmatprep.subr.mxu0 0.0
    %498 = vmatpush1.xpose.msra.mxu0 0.0
    %499 = vmatprep.subr.mxu0 0.0
    %500 = vmatpush1.xpose.msra.mxu0 0.0
    %501 = vmatprep.subr.mxu0 0.0
    %502 = vmatpush1.xpose.msra.mxu0 0.0
    %503 = vmatprep.subr.mxu0 0.0
    %504 = vmatpush1.xpose.msra.mxu0 0.0
    %505 = vmatprep.subr.mxu0 0.0
    %506 = vmatpush1.xpose.msra.mxu0 0.0
    %507 = vmatprep.subr.mxu0 0.0
    %508 = vmatpush1.xpose.msra.mxu0 0.0
    %509 = vmatprep.subr.mxu0 0.0
    %510 = vmatpush1.xpose.msra.mxu0 0.0
    %511 = vmatprep.subr.mxu0 0.0
    %512 = vmatpush1.xpose.msra.mxu0 0.0
    %513 = vmatprep.subr.mxu0 0.0
    %514 = vmatpush1.xpose.msra.mxu0 0.0
    %515 = vmatprep.subr.mxu0 0.0
    %516 = vmatpush1.xpose.msra.mxu0 0.0
    %517 = vmatprep.subr.mxu0 0.0
    %518 = vmatpush1.xpose.msra.mxu0 0.0
    %519 = vmatprep.subr.mxu0 0.0
    %520 = vmatpush1.xpose.msra.mxu0 0.0
    %521 = vmatprep.subr.mxu0 0.0
    %522 = vmatpush1.xpose.msra.mxu0 0.0
    %523 = vmatprep.subr.mxu0 0.0
    %524 = vmatpush1.xpose.msra.mxu0 0.0
    %525 = vmatprep.subr.mxu0 0.0
    %526 = vmatpush1.xpose.msra.mxu0 0.0
    %527 = vmatprep.subr.mxu0 0.0
    %528 = vmatpush1.xpose.msra.mxu0 0.0
    %529 = vmatprep.subr.mxu0 0.0
    %530 = vmatpush1.xpose.msra.mxu0 0.0
    %531 = vmatprep.subr.mxu0 0.0
    %532 = vmatpush1.xpose.msra.mxu0 0.0
    %533 = vmatprep.subr.mxu0 0.0
    %534 = vmatpush1.xpose.msra.mxu0 0.0
    %535 = vmatprep.subr.mxu0 0.0
    %536 = vmatpush1.xpose.msra.mxu0 0.0
    %537 = vmatprep.subr.mxu0 0.0
    %538 = vmatpush1.xpose.msra.mxu0 0.0
    %539 = vmatprep.subr.mxu0 0.0
    %540 = vmatpush1.xpose.msra.mxu0 0.0
    %541 = vmatprep.subr.mxu0 0.0
    %542 = vmatpush1.xpose.msra.mxu0 0.0
    %543 = vmatprep.subr.mxu0 0.0
    %544 = vmatpush1.xpose.msra.mxu0 0.0
    %545 = vmatprep.subr.mxu0 0.0
    %546 = vmatpush1.xpose.msra.mxu0 0.0
    %547 = vmatprep.subr.mxu0 0.0
    %548 = vmatpush1.xpose.msra.mxu0 0.0
    %549 = vmatprep.subr.mxu0 0.0
    %550 = vmatpush1.xpose.msra.mxu0 0.0
    %551 = vmatprep.subr.mxu0 0.0
    %552 = vmatpush1.xpose.msra.mxu0 0.0
    %553 = vmatprep.mubr.f32.mxu0 0.0
    %v554 = vand.u32 %v147, 4294901760
    %555 = vmatmul.mubr.f32.gmra.mrb[0].mxu0 %v554
    %v556 = vpop.f32.mrb[0].mxu0
    %v557 = vadd.f32 %v475, %v556
    %v558 = vpop.f32.mrb[0].mxu0
    %559 = vmatprep.mubr.f32.mxu0 0.0
    %v560 = vand.u32 %v150, 4294901760
    %561 = vmatmul.mubr.f32.gmra.mrb[0].mxu0 %v560
    %v562 = vpop.f32.mrb[0].mxu0
    %v563 = vadd.f32 %v483, %v562
    %v564 = vpop.f32.mrb[0].mxu0
    %565 = vdwg.mxu0
    %566 = vmatprep.subr.mxu0 0.0
    %v567 = vand.u32 %v153, 4294901760
    %568 = vmatpush1.xpose.msra.mxu0 %v567
    %569 = vmatprep.subr.mxu0 0.0
    %570 = vmatpush1.xpose.msra.mxu0 0.0
    %571 = vmatprep.subr.mxu0 0.0
    %572 = vmatpush1.xpose.msra.mxu0 0.0
    %573 = vmatprep.subr.mxu0 0.0
    %574 = vmatpush1.xpose.msra.mxu0 0.0
    %575 = vmatprep.subr.mxu0 0.0
    %576 = vmatpush1.xpose.msra.mxu0 0.0
    %577 = vmatprep.subr.mxu0 0.0
    %578 = vmatpush1.xpose.msra.mxu0 0.0
    %579 = vmatprep.subr.mxu0 0.0
    %580 = vmatpush1.xpose.msra.mxu0 0.0
    %581 = vmatprep.subr.mxu0 0.0
    %582 = vmatpush1.xpose.msra.mxu0 0.0
    %583 = vmatprep.subr.mxu0 0.0
    %584 = vmatpush1.xpose.msra.mxu0 0.0
    %585 = vmatprep.subr.mxu0 0.0
    %586 = vmatpush1.xpose.msra.mxu0 0.0
    %587 = vmatprep.subr.mxu0 0.0
    %588 = vmatpush1.xpose.msra.mxu0 0.0
    %589 = vmatprep.subr.mxu0 0.0
    %590 = vmatpush1.xpose.msra.mxu0 0.0
    %591 = vmatprep.subr.mxu0 0.0
    %592 = vmatpush1.xpose.msra.mxu0 0.0
    %593 = vmatprep.subr.mxu0 0.0
    %594 = vmatpush1.xpose.msra.mxu0 0.0
    %595 = vmatprep.subr.mxu0 0.0
    %596 = vmatpush1.xpose.msra.mxu0 0.0
    %597 = vmatprep.subr.mxu0 0.0
    %598 = vmatpush1.xpose.msra.mxu0 0.0
    %599 = vmatprep.subr.mxu0 0.0
    %600 = vmatpush1.xpose.msra.mxu0 0.0
    %601 = vmatprep.subr.mxu0 0.0
    %602 = vmatpush1.xpose.msra.mxu0 0.0
    %603 = vmatprep.subr.mxu0 0.0
    %604 = vmatpush1.xpose.msra.mxu0 0.0
    %605 = vmatprep.subr.mxu0 0.0
    %606 = vmatpush1.xpose.msra.mxu0 0.0
    %607 = vmatprep.subr.mxu0 0.0
    %608 = vmatpush1.xpose.msra.mxu0 0.0
    %609 = vmatprep.subr.mxu0 0.0
    %610 = vmatpush1.xpose.msra.mxu0 0.0
    %611 = vmatprep.subr.mxu0 0.0
    %612 = vmatpush1.xpose.msra.mxu0 0.0
    %613 = vmatprep.subr.mxu0 0.0
    %614 = vmatpush1.xpose.msra.mxu0 0.0
    %615 = vmatprep.subr.mxu0 0.0
    %616 = vmatpush1.xpose.msra.mxu0 0.0
    %617 = vmatprep.subr.mxu0 0.0
    %618 = vmatpush1.xpose.msra.mxu0 0.0
    %619 = vmatprep.subr.mxu0 0.0
    %620 = vmatpush1.xpose.msra.mxu0 0.0
    %621 = vmatprep.subr.mxu0 0.0
    %622 = vmatpush1.xpose.msra.mxu0 0.0
    %623 = vmatprep.subr.mxu0 0.0
    %624 = vmatpush1.xpose.msra.mxu0 0.0
    %625 = vmatprep.subr.mxu0 0.0
    %626 = vmatpush1.xpose.msra.mxu0 0.0
    %627 = vmatprep.subr.mxu0 0.0
    %628 = vmatpush1.xpose.msra.mxu0 0.0
    %629 = vmatprep.subr.mxu0 0.0
    %630 = vmatpush1.xpose.msra.mxu0 0.0
    %631 = vmatprep.mubr.f32.mxu0 0.0
    %v632 = vand.u32 %v147, 4294901760
    %633 = vmatmul.mubr.f32.gmra.mrb[0].mxu0 %v632
    %v634 = vpop.f32.mrb[0].mxu0
    %v635 = vadd.f32 %v557, %v634
    %v636 = vpop.f32.mrb[0].mxu0
    %637 = vmatprep.mubr.f32.mxu0 0.0
    %v638 = vand.u32 %v150, 4294901760
    %639 = vmatmul.mubr.f32.gmra.mrb[0].mxu0 %v638
    %v640 = vpop.f32.mrb[0].mxu0
    %v641 = vadd.f32 %v563, %v640
    %v642 = vpop.f32.mrb[0].mxu0
    %643 = vdwg.mxu0
    %v644 = vmul.f32 %v635, 0.25
    %v645 = vmul.f32 %v641, 0.25
    %vm646 = vcmask 64512
    %v647 = vsel %vm646, %v644, -inf
    %648 = vmax.xlane.f32.xlu0 %v647
    %v649 = vpop.xlane.xlu0 %648
    %v650 = vsel %vm646, %v645, -inf
    %651 = vmax.xlane.f32.xlu0 %v650
    %v652 = vpop.xlane.xlu0 %651
    %v653 = vsub.f32 %v644, %v649
    %v654 = vsub.f32 %v645, %v652
    %v655 = vmul.f32 %v653, 1.442695
    %v656 = vpow.pop %v655
    %v657 = vmul.f32 %v654, 1.442695
    %v658 = vpow.pop %v657
    %v659 = vsel %vm646, %v656, 0.0
    %660 = vadd.xlane.f32.xlu0 %v659
    %v661 = vpop.xlane.xlu0 %660
    %v662 = vsel %vm646, %v658, 0.0
    %663 = vadd.xlane.f32.xlu0 %v662
    %v664 = vpop.xlane.xlu0 %663
    %v665 = vrcp.pop %v661
    %v666 = vmul.f32 %v656, %v665
    %v667 = vrcp.pop %v664
    %v668 = vmul.f32 %v658, %v667
    %v670 = vsel %vm646, %v666, 0
    %672 = vmatprep.subr.mxu0 0.0
    %v673 = vand.u32 %v144, 4294901760
    %674 = vmatpush1.msra.mxu0 %v673
    %675 = vmatprep.subr.mxu0 0.0
    %676 = vmatpush1.msra.mxu0 0.0
    %677 = vmatprep.subr.mxu0 0.0
    %678 = vmatpush1.msra.mxu0 0.0
    %679 = vmatprep.subr.mxu0 0.0
    %680 = vmatpush1.msra.mxu0 0.0
    %681 = vmatprep.subr.mxu0 0.0
    %682 = vmatpush1.msra.mxu0 0.0
    %683 = vmatprep.subr.mxu0 0.0
    %684 = vmatpush1.msra.mxu0 0.0
    %685 = vmatprep.subr.mxu0 0.0
    %686 = vmatpush1.msra.mxu0 0.0
    %687 = vmatprep.subr.mxu0 0.0
    %688 = vmatpush1.msra.mxu0 0.0
    %689 = vmatprep.subr.mxu0 0.0
    %690 = vmatpush1.msra.mxu0 0.0
    %691 = vmatprep.subr.mxu0 0.0
    %692 = vmatpush1.msra.mxu0 0.0
    %693 = vmatprep.subr.mxu0 0.0
    %694 = vmatpush1.msra.mxu0 0.0
    %695 = vmatprep.subr.mxu0 0.0
    %696 = vmatpush1.msra.mxu0 0.0
    %697 = vmatprep.subr.mxu0 0.0
    %698 = vmatpush1.msra.mxu0 0.0
    %699 = vmatprep.subr.mxu0 0.0
    %700 = vmatpush1.msra.mxu0 0.0
    %701 = vmatprep.subr.mxu0 0.0
    %702 = vmatpush1.msra.mxu0 0.0
    %703 = vmatprep.subr.mxu0 0.0
    %704 = vmatpush1.msra.mxu0 0.0
    %705 = vmatprep.subr.mxu0 0.0
    %706 = vmatpush1.msra.mxu0 0.0
    %707 = vmatprep.subr.mxu0 0.0
    %708 = vmatpush1.msra.mxu0 0.0
    %709 = vmatprep.subr.mxu0 0.0
    %710 = vmatpush1.msra.mxu0 0.0
    %711 = vmatprep.subr.mxu0 0.0
    %712 = vmatpush1.msra.mxu0 0.0
    %713 = vmatprep.subr.mxu0 0.0
    %714 = vmatpush1.msra.mxu0 0.0
    %715 = vmatprep.subr.mxu0 0.0
    %716 = vmatpush1.msra.mxu0 0.0
    %717 = vmatprep.subr.mxu0 0.0
    %718 = vmatpush1.msra.mxu0 0.0
    %719 = vmatprep.subr.mxu0 0.0
    %720 = vmatpush1.msra.mxu0 0.0
    %721 = vmatprep.subr.mxu0 0.0
    %722 = vmatpush1.msra.mxu0 0.0
    %723 = vmatprep.subr.mxu0 0.0
    %724 = vmatpush1.msra.mxu0 0.0
    %725 = vmatprep.subr.mxu0 0.0
    %726 = vmatpush1.msra.mxu0 0.0
    %727 = vmatprep.subr.mxu0 0.0
    %728 = vmatpush1.msra.mxu0 0.0
    %729 = vmatprep.subr.mxu0 0.0
    %730 = vmatpush1.msra.mxu0 0.0
    %731 = vmatprep.subr.mxu0 0.0
    %732 = vmatpush1.msra.mxu0 0.0
    %733 = vmatprep.subr.mxu0 0.0
    %734 = vmatpush1.msra.mxu0 0.0
    %735 = vmatprep.subr.mxu0 0.0
    %736 = vmatpush1.msra.mxu0 0.0
    %737 = vmatprep.mubr.f32.mxu0 0.0
    %v738 = vand.u32 %v670, 4294901760
    %v739 = vsub.f32 %v670, %v738
    %v740 = vand.u32 %v739, 4294901760
    %v741 = vsub.f32 %v739, %v740
    %v742 = vand.u32 %v741, 4294901760
    %743 = vmatmul.mubr.f32.gmra.mrb[0].mxu0 %v742
    %v744 = vpop.f32.mrb[0].mxu0
    %v745 = vadd.f32 0.0, %v744
    %v746 = vpop.f32.mrb[0].mxu0
    %747 = vdwg.mxu0
    %748 = vmatprep.subr.mxu0 0.0
    %v749 = vand.u32 %v144, 4294901760
    %v750 = vsub.f32 %v144, %v749
    %v751 = vand.u32 %v750, 4294901760
    %v752 = vsub.f32 %v750, %v751
    %v753 = vand.u32 %v752, 4294901760
    %754 = vmatpush1.msra.mxu0 %v753
    %755 = vmatprep.subr.mxu0 0.0
    %756 = vmatpush1.msra.mxu0 0.0
    %757 = vmatprep.subr.mxu0 0.0
    %758 = vmatpush1.msra.mxu0 0.0
    %759 = vmatprep.subr.mxu0 0.0
    %760 = vmatpush1.msra.mxu0 0.0
    %761 = vmatprep.subr.mxu0 0.0
    %762 = vmatpush1.msra.mxu0 0.0
    %763 = vmatprep.subr.mxu0 0.0
    %764 = vmatpush1.msra.mxu0 0.0
    %765 = vmatprep.subr.mxu0 0.0
    %766 = vmatpush1.msra.mxu0 0.0
    %767 = vmatprep.subr.mxu0 0.0
    %768 = vmatpush1.msra.mxu0 0.0
    %769 = vmatprep.subr.mxu0 0.0
    %770 = vmatpush1.msra.mxu0 0.0
    %771 = vmatprep.subr.mxu0 0.0
    %772 = vmatpush1.msra.mxu0 0.0
    %773 = vmatprep.subr.mxu0 0.0
    %774 = vmatpush1.msra.mxu0 0.0
    %775 = vmatprep.subr.mxu0 0.0
    %776 = vmatpush1.msra.mxu0 0.0
    %777 = vmatprep.subr.mxu0 0.0
    %778 = vmatpush1.msra.mxu0 0.0
    %779 = vmatprep.subr.mxu0 0.0
    %780 = vmatpush1.msra.mxu0 0.0
    %781 = vmatprep.subr.mxu0 0.0
    %782 = vmatpush1.msra.mxu0 0.0
    %783 = vmatprep.subr.mxu0 0.0
    %784 = vmatpush1.msra.mxu0 0.0
    %785 = vmatprep.subr.mxu0 0.0
    %786 = vmatpush1.msra.mxu0 0.0
    %787 = vmatprep.subr.mxu0 0.0
    %788 = vmatpush1.msra.mxu0 0.0
    %789 = vmatprep.subr.mxu0 0.0
    %790 = vmatpush1.msra.mxu0 0.0
    %791 = vmatprep.subr.mxu0 0.0
    %792 = vmatpush1.msra.mxu0 0.0
    %793 = vmatprep.subr.mxu0 0.0
    %794 = vmatpush1.msra.mxu0 0.0
    %795 = vmatprep.subr.mxu0 0.0
    %796 = vmatpush1.msra.mxu0 0.0
    %797 = vmatprep.subr.mxu0 0.0
    %798 = vmatpush1.msra.mxu0 0.0
    %799 = vmatprep.subr.mxu0 0.0
    %800 = vmatpush1.msra.mxu0 0.0
    %801 = vmatprep.subr.mxu0 0.0
    %802 = vmatpush1.msra.mxu0 0.0
    %803 = vmatprep.subr.mxu0 0.0
    %804 = vmatpush1.msra.mxu0 0.0
    %805 = vmatprep.subr.mxu0 0.0
    %806 = vmatpush1.msra.mxu0 0.0
    %807 = vmatprep.subr.mxu0 0.0
    %808 = vmatpush1.msra.mxu0 0.0
    %809 = vmatprep.subr.mxu0 0.0
    %810 = vmatpush1.msra.mxu0 0.0
    %811 = vmatprep.subr.mxu0 0.0
    %812 = vmatpush1.msra.mxu0 0.0
    %813 = vmatprep.subr.mxu0 0.0
    %814 = vmatpush1.msra.mxu0 0.0
    %815 = vmatprep.subr.mxu0 0.0
    %816 = vmatpush1.msra.mxu0 0.0
    %817 = vmatprep.mubr.f32.mxu0 0.0
    %v818 = vand.u32 %v670, 4294901760
    %819 = vmatmul.mubr.f32.gmra.mrb[0].mxu0 %v818
    %v820 = vpop.f32.mrb[0].mxu0
    %v821 = vadd.f32 %v745, %v820
    %v822 = vpop.f32.mrb[0].mxu0
    %823 = vdwg.mxu0
    %824 = vmatprep.subr.mxu0 0.0
    %v825 = vand.u32 %v144, 4294901760
    %v826 = vsub.f32 %v144, %v825
    %827 = vmatpush1.msra.mxu0 %v826
    %828 = vmatprep.subr.mxu0 0.0
    %829 = vmatpush1.msra.mxu0 0.0
    %830 = vmatprep.subr.mxu0 0.0
    %831 = vmatpush1.msra.mxu0 0.0
    %832 = vmatprep.subr.mxu0 0.0
    %833 = vmatpush1.msra.mxu0 0.0
    %834 = vmatprep.subr.mxu0 0.0
    %835 = vmatpush1.msra.mxu0 0.0
    %836 = vmatprep.subr.mxu0 0.0
    %837 = vmatpush1.msra.mxu0 0.0
    %838 = vmatprep.subr.mxu0 0.0
    %839 = vmatpush1.msra.mxu0 0.0
    %840 = vmatprep.subr.mxu0 0.0
    %841 = vmatpush1.msra.mxu0 0.0
    %842 = vmatprep.subr.mxu0 0.0
    %843 = vmatpush1.msra.mxu0 0.0
    %844 = vmatprep.subr.mxu0 0.0
    %845 = vmatpush1.msra.mxu0 0.0
    %846 = vmatprep.subr.mxu0 0.0
    %847 = vmatpush1.msra.mxu0 0.0
    %848 = vmatprep.subr.mxu0 0.0
    %849 = vmatpush1.msra.mxu0 0.0
    %850 = vmatprep.subr.mxu0 0.0
    %851 = vmatpush1.msra.mxu0 0.0
    %852 = vmatprep.subr.mxu0 0.0
    %853 = vmatpush1.msra.mxu0 0.0
    %854 = vmatprep.subr.mxu0 0.0
    %855 = vmatpush1.msra.mxu0 0.0
    %856 = vmatprep.subr.mxu0 0.0
    %857 = vmatpush1.msra.mxu0 0.0
    %858 = vmatprep.subr.mxu0 0.0
    %859 = vmatpush1.msra.mxu0 0.0
    %860 = vmatprep.subr.mxu0 0.0
    %861 = vmatpush1.msra.mxu0 0.0
    %862 = vmatprep.subr.mxu0 0.0
    %863 = vmatpush1.msra.mxu0 0.0
    %864 = vmatprep.subr.mxu0 0.0
    %865 = vmatpush1.msra.mxu0 0.0
    %866 = vmatprep.subr.mxu0 0.0
    %867 = vmatpush1.msra.mxu0 0.0
    %868 = vmatprep.subr.mxu0 0.0
    %869 = vmatpush1.msra.mxu0 0.0
    %870 = vmatprep.subr.mxu0 0.0
    %871 = vmatpush1.msra.mxu0 0.0
    %872 = vmatprep.subr.mxu0 0.0
    %873 = vmatpush1.msra.mxu0 0.0
    %874 = vmatprep.subr.mxu0 0.0
    %875 = vmatpush1.msra.mxu0 0.0
    %876 = vmatprep.subr.mxu0 0.0
    %877 = vmatpush1.msra.mxu0 0.0
    %878 = vmatprep.subr.mxu0 0.0
    %879 = vmatpush1.msra.mxu0 0.0
    %880 = vmatprep.subr.mxu0 0.0
    %881 = vmatpush1.msra.mxu0 0.0
    %882 = vmatprep.subr.mxu0 0.0
    %883 = vmatpush1.msra.mxu0 0.0
    %884 = vmatprep.subr.mxu0 0.0
    %885 = vmatpush1.msra.mxu0 0.0
    %886 = vmatprep.subr.mxu0 0.0
    %887 = vmatpush1.msra.mxu0 0.0
    %888 = vmatprep.subr.mxu0 0.0
    %889 = vmatpush1.msra.mxu0 0.0
    %890 = vmatprep.mubr.f32.mxu0 0.0
    %v891 = vand.u32 %v670, 4294901760
    %v892 = vsub.f32 %v670, %v891
    %893 = vmatmul.mubr.f32.gmra.mrb[0].mxu0 %v892
    %v894 = vpop.f32.mrb[0].mxu0
    %v895 = vadd.f32 %v821, %v894
    %v896 = vpop.f32.mrb[0].mxu0
    %897 = vdwg.mxu0
    %898 = vmatprep.subr.mxu0 0.0
    %v899 = vand.u32 %v144, 4294901760
    %900 = vmatpush1.msra.mxu0 %v899
    %901 = vmatprep.subr.mxu0 0.0
    %902 = vmatpush1.msra.mxu0 0.0
    %903 = vmatprep.subr.mxu0 0.0
    %904 = vmatpush1.msra.mxu0 0.0
    %905 = vmatprep.subr.mxu0 0.0
    %906 = vmatpush1.msra.mxu0 0.0
    %907 = vmatprep.subr.mxu0 0.0
    %908 = vmatpush1.msra.mxu0 0.0
    %909 = vmatprep.subr.mxu0 0.0
    %910 = vmatpush1.msra.mxu0 0.0
    %911 = vmatprep.subr.mxu0 0.0
    %912 = vmatpush1.msra.mxu0 0.0
    %913 = vmatprep.subr.mxu0 0.0
    %914 = vmatpush1.msra.mxu0 0.0
    %915 = vmatprep.subr.mxu0 0.0
    %916 = vmatpush1.msra.mxu0 0.0
    %917 = vmatprep.subr.mxu0 0.0
    %918 = vmatpush1.msra.mxu0 0.0
    %919 = vmatprep.subr.mxu0 0.0
    %920 = vmatpush1.msra.mxu0 0.0
    %921 = vmatprep.subr.mxu0 0.0
    %922 = vmatpush1.msra.mxu0 0.0
    %923 = vmatprep.subr.mxu0 0.0
    %924 = vmatpush1.msra.mxu0 0.0
    %925 = vmatprep.subr.mxu0 0.0
    %926 = vmatpush1.msra.mxu0 0.0
    %927 = vmatprep.subr.mxu0 0.0
    %928 = vmatpush1.msra.mxu0 0.0
    %929 = vmatprep.subr.mxu0 0.0
    %930 = vmatpush1.msra.mxu0 0.0
    %931 = vmatprep.subr.mxu0 0.0
    %932 = vmatpush1.msra.mxu0 0.0
    %933 = vmatprep.subr.mxu0 0.0
    %934 = vmatpush1.msra.mxu0 0.0
    %935 = vmatprep.subr.mxu0 0.0
    %936 = vmatpush1.msra.mxu0 0.0
    %937 = vmatprep.subr.mxu0 0.0
    %938 = vmatpush1.msra.mxu0 0.0
    %939 = vmatprep.subr.mxu0 0.0
    %940 = vmatpush1.msra.mxu0 0.0
    %941 = vmatprep.subr.mxu0 0.0
    %942 = vmatpush1.msra.mxu0 0.0
    %943 = vmatprep.subr.mxu0 0.0
    %944 = vmatpush1.msra.mxu0 0.0
    %945 = vmatprep.subr.mxu0 0.0
    %946 = vmatpush1.msra.mxu0 0.0
    %947 = vmatprep.subr.mxu0 0.0
    %948 = vmatpush1.msra.mxu0 0.0
    %949 = vmatprep.subr.mxu0 0.0
    %950 = vmatpush1.msra.mxu0 0.0
    %951 = vmatprep.subr.mxu0 0.0
    %952 = vmatpush1.msra.mxu0 0.0
    %953 = vmatprep.subr.mxu0 0.0
    %954 = vmatpush1.msra.mxu0 0.0
    %955 = vmatprep.subr.mxu0 0.0
    %956 = vmatpush1.msra.mxu0 0.0
    %957 = vmatprep.subr.mxu0 0.0
    %958 = vmatpush1.msra.mxu0 0.0
    %959 = vmatprep.subr.mxu0 0.0
    %960 = vmatpush1.msra.mxu0 0.0
    %961 = vmatprep.subr.mxu0 0.0
    %962 = vmatpush1.msra.mxu0 0.0
    %963 = vmatprep.mubr.f32.mxu0 0.0
    %v964 = vand.u32 %v670, 4294901760
    %v965 = vsub.f32 %v670, %v964
    %v966 = vand.u32 %v965, 4294901760
    %967 = vmatmul.mubr.f32.gmra.mrb[0].mxu0 %v966
    %v968 = vpop.f32.mrb[0].mxu0
    %v969 = vadd.f32 %v895, %v968
    %v970 = vpop.f32.mrb[0].mxu0
    %971 = vdwg.mxu0
    %972 = vmatprep.subr.mxu0 0.0
    %v973 = vand.u32 %v144, 4294901760
    %v974 = vsub.f32 %v144, %v973
    %v975 = vand.u32 %v974, 4294901760
    %976 = vmatpush1.msra.mxu0 %v975
    %977 = vmatprep.subr.mxu0 0.0
    %978 = vmatpush1.msra.mxu0 0.0
    %979 = vmatprep.subr.mxu0 0.0
    %980 = vmatpush1.msra.mxu0 0.0
    %981 = vmatprep.subr.mxu0 0.0
    %982 = vmatpush1.msra.mxu0 0.0
    %983 = vmatprep.subr.mxu0 0.0
    %984 = vmatpush1.msra.mxu0 0.0
    %985 = vmatprep.subr.mxu0 0.0
    %986 = vmatpush1.msra.mxu0 0.0
    %987 = vmatprep.subr.mxu0 0.0
    %988 = vmatpush1.msra.mxu0 0.0
    %989 = vmatprep.subr.mxu0 0.0
    %990 = vmatpush1.msra.mxu0 0.0
    %991 = vmatprep.subr.mxu0 0.0
    %992 = vmatpush1.msra.mxu0 0.0
    %993 = vmatprep.subr.mxu0 0.0
    %994 = vmatpush1.msra.mxu0 0.0
    %995 = vmatprep.subr.mxu0 0.0
    %996 = vmatpush1.msra.mxu0 0.0
    %997 = vmatprep.subr.mxu0 0.0
    %998 = vmatpush1.msra.mxu0 0.0
    %999 = vmatprep.subr.mxu0 0.0
    %1000 = vmatpush1.msra.mxu0 0.0
    %1001 = vmatprep.subr.mxu0 0.0
    %1002 = vmatpush1.msra.mxu0 0.0
    %1003 = vmatprep.subr.mxu0 0.0
    %1004 = vmatpush1.msra.mxu0 0.0
    %1005 = vmatprep.subr.mxu0 0.0
    %1006 = vmatpush1.msra.mxu0 0.0
    %1007 = vmatprep.subr.mxu0 0.0
    %1008 = vmatpush1.msra.mxu0 0.0
    %1009 = vmatprep.subr.mxu0 0.0
    %1010 = vmatpush1.msra.mxu0 0.0
    %1011 = vmatprep.subr.mxu0 0.0
    %1012 = vmatpush1.msra.mxu0 0.0
    %1013 = vmatprep.subr.mxu0 0.0
    %1014 = vmatpush1.msra.mxu0 0.0
    %1015 = vmatprep.subr.mxu0 0.0
    %1016 = vmatpush1.msra.mxu0 0.0
    %1017 = vmatprep.subr.mxu0 0.0
    %1018 = vmatpush1.msra.mxu0 0.0
    %1019 = vmatprep.subr.mxu0 0.0
    %1020 = vmatpush1.msra.mxu0 0.0
    %1021 = vmatprep.subr.mxu0 0.0
    %1022 = vmatpush1.msra.mxu0 0.0
    %1023 = vmatprep.subr.mxu0 0.0
    %1024 = vmatpush1.msra.mxu0 0.0
    %1025 = vmatprep.subr.mxu0 0.0
    %1026 = vmatpush1.msra.mxu0 0.0
    %1027 = vmatprep.subr.mxu0 0.0
    %1028 = vmatpush1.msra.mxu0 0.0
    %1029 = vmatprep.subr.mxu0 0.0
    %1030 = vmatpush1.msra.mxu0 0.0
    %1031 = vmatprep.subr.mxu0 0.0
    %1032 = vmatpush1.msra.mxu0 0.0
    %1033 = vmatprep.subr.mxu0 0.0
    %1034 = vmatpush1.msra.mxu0 0.0
    %1035 = vmatprep.subr.mxu0 0.0
    %1036 = vmatpush1.msra.mxu0 0.0
    %1037 = vmatprep.subr.mxu0 0.0
    %1038 = vmatpush1.msra.mxu0 0.0
    %1039 = vmatprep.mubr.f32.mxu0 0.0
    %v1040 = vand.u32 %v670, 4294901760
    %1041 = vmatmul.mubr.f32.gmra.mrb[0].mxu0 %v1040
    %v1042 = vpop.f32.mrb[0].mxu0
    %v1043 = vadd.f32 %v969, %v1042
    %v1044 = vpop.f32.mrb[0].mxu0
    %1045 = vdwg.mxu0
    %1046 = vmatprep.subr.mxu0 0.0
    %v1047 = vand.u32 %v144, 4294901760
    %1048 = vmatpush1.msra.mxu0 %v1047
    %1049 = vmatprep.subr.mxu0 0.0
    %1050 = vmatpush1.msra.mxu0 0.0
    %1051 = vmatprep.subr.mxu0 0.0
    %1052 = vmatpush1.msra.mxu0 0.0
    %1053 = vmatprep.subr.mxu0 0.0
    %1054 = vmatpush1.msra.mxu0 0.0
    %1055 = vmatprep.subr.mxu0 0.0
    %1056 = vmatpush1.msra.mxu0 0.0
    %1057 = vmatprep.subr.mxu0 0.0
    %1058 = vmatpush1.msra.mxu0 0.0
    %1059 = vmatprep.subr.mxu0 0.0
    %1060 = vmatpush1.msra.mxu0 0.0
    %1061 = vmatprep.subr.mxu0 0.0
    %1062 = vmatpush1.msra.mxu0 0.0
    %1063 = vmatprep.subr.mxu0 0.0
    %1064 = vmatpush1.msra.mxu0 0.0
    %1065 = vmatprep.subr.mxu0 0.0
    %1066 = vmatpush1.msra.mxu0 0.0
    %1067 = vmatprep.subr.mxu0 0.0
    %1068 = vmatpush1.msra.mxu0 0.0
    %1069 = vmatprep.subr.mxu0 0.0
    %1070 = vmatpush1.msra.mxu0 0.0
    %1071 = vmatprep.subr.mxu0 0.0
    %1072 = vmatpush1.msra.mxu0 0.0
    %1073 = vmatprep.subr.mxu0 0.0
    %1074 = vmatpush1.msra.mxu0 0.0
    %1075 = vmatprep.subr.mxu0 0.0
    %1076 = vmatpush1.msra.mxu0 0.0
    %1077 = vmatprep.subr.mxu0 0.0
    %1078 = vmatpush1.msra.mxu0 0.0
    %1079 = vmatprep.subr.mxu0 0.0
    %1080 = vmatpush1.msra.mxu0 0.0
    %1081 = vmatprep.subr.mxu0 0.0
    %1082 = vmatpush1.msra.mxu0 0.0
    %1083 = vmatprep.subr.mxu0 0.0
    %1084 = vmatpush1.msra.mxu0 0.0
    %1085 = vmatprep.subr.mxu0 0.0
    %1086 = vmatpush1.msra.mxu0 0.0
    %1087 = vmatprep.subr.mxu0 0.0
    %1088 = vmatpush1.msra.mxu0 0.0
    %1089 = vmatprep.subr.mxu0 0.0
    %1090 = vmatpush1.msra.mxu0 0.0
    %1091 = vmatprep.subr.mxu0 0.0
    %1092 = vmatpush1.msra.mxu0 0.0
    %1093 = vmatprep.subr.mxu0 0.0
    %1094 = vmatpush1.msra.mxu0 0.0
    %1095 = vmatprep.subr.mxu0 0.0
    %1096 = vmatpush1.msra.mxu0 0.0
    %1097 = vmatprep.subr.mxu0 0.0
    %1098 = vmatpush1.msra.mxu0 0.0
    %1099 = vmatprep.subr.mxu0 0.0
    %1100 = vmatpush1.msra.mxu0 0.0
    %1101 = vmatprep.subr.mxu0 0.0
    %1102 = vmatpush1.msra.mxu0 0.0
    %1103 = vmatprep.subr.mxu0 0.0
    %1104 = vmatpush1.msra.mxu0 0.0
    %1105 = vmatprep.subr.mxu0 0.0
    %1106 = vmatpush1.msra.mxu0 0.0
    %1107 = vmatprep.subr.mxu0 0.0
    %1108 = vmatpush1.msra.mxu0 0.0
    %1109 = vmatprep.subr.mxu0 0.0
    %1110 = vmatpush1.msra.mxu0 0.0
    %1111 = vmatprep.mubr.f32.mxu0 0.0
    %v1112 = vand.u32 %v670, 4294901760
    %1113 = vmatmul.mubr.f32.gmra.mrb[0].mxu0 %v1112
    %v1114 = vpop.f32.mrb[0].mxu0
    %v1115 = vadd.f32 %v1043, %v1114
    %v1116 = vpop.f32.mrb[0].mxu0
    %1117 = vdwg.mxu0
    %v1118 = vlaneseq
    %v1119 = vshrl.u32 %v1118, 7
    %v1120 = vsub.s32 0, %v1119
    %v1121 = vrot.slane %v122, %v1120
    %v1122 = vmul.f32 %v1115, %v1121
    %v1123 = vadd.f32 %v1122, 0.0
    %v1125 = vsel %vm646, %v668, 0
    %1127 = vmatprep.subr.mxu0 0.0
    %v1128 = vand.u32 %v144, 4294901760
    %1129 = vmatpush1.msra.mxu0 %v1128
    %1130 = vmatprep.subr.mxu0 0.0
    %1131 = vmatpush1.msra.mxu0 0.0
    %1132 = vmatprep.subr.mxu0 0.0
    %1133 = vmatpush1.msra.mxu0 0.0
    %1134 = vmatprep.subr.mxu0 0.0
    %1135 = vmatpush1.msra.mxu0 0.0
    %1136 = vmatprep.subr.mxu0 0.0
    %1137 = vmatpush1.msra.mxu0 0.0
    %1138 = vmatprep.subr.mxu0 0.0
    %1139 = vmatpush1.msra.mxu0 0.0
    %1140 = vmatprep.subr.mxu0 0.0
    %1141 = vmatpush1.msra.mxu0 0.0
    %1142 = vmatprep.subr.mxu0 0.0
    %1143 = vmatpush1.msra.mxu0 0.0
    %1144 = vmatprep.subr.mxu0 0.0
    %1145 = vmatpush1.msra.mxu0 0.0
    %1146 = vmatprep.subr.mxu0 0.0
    %1147 = vmatpush1.msra.mxu0 0.0
    %1148 = vmatprep.subr.mxu0 0.0
    %1149 = vmatpush1.msra.mxu0 0.0
    %1150 = vmatprep.subr.mxu0 0.0
    %1151 = vmatpush1.msra.mxu0 0.0
    %1152 = vmatprep.subr.mxu0 0.0
    %1153 = vmatpush1.msra.mxu0 0.0
    %1154 = vmatprep.subr.mxu0 0.0
    %1155 = vmatpush1.msra.mxu0 0.0
    %1156 = vmatprep.subr.mxu0 0.0
    %1157 = vmatpush1.msra.mxu0 0.0
    %1158 = vmatprep.subr.mxu0 0.0
    %1159 = vmatpush1.msra.mxu0 0.0
    %1160 = vmatprep.subr.mxu0 0.0
    %1161 = vmatpush1.msra.mxu0 0.0
    %1162 = vmatprep.subr.mxu0 0.0
    %1163 = vmatpush1.msra.mxu0 0.0
    %1164 = vmatprep.subr.mxu0 0.0
    %1165 = vmatpush1.msra.mxu0 0.0
    %1166 = vmatprep.subr.mxu0 0.0
    %1167 = vmatpush1.msra.mxu0 0.0
    %1168 = vmatprep.subr.mxu0 0.0
    %1169 = vmatpush1.msra.mxu0 0.0
    %1170 = vmatprep.subr.mxu0 0.0
    %1171 = vmatpush1.msra.mxu0 0.0
    %1172 = vmatprep.subr.mxu0 0.0
    %1173 = vmatpush1.msra.mxu0 0.0
    %1174 = vmatprep.subr.mxu0 0.0
    %1175 = vmatpush1.msra.mxu0 0.0
    %1176 = vmatprep.subr.mxu0 0.0
    %1177 = vmatpush1.msra.mxu0 0.0
    %1178 = vmatprep.subr.mxu0 0.0
    %1179 = vmatpush1.msra.mxu0 0.0
    %1180 = vmatprep.subr.mxu0 0.0
    %1181 = vmatpush1.msra.mxu0 0.0
    %1182 = vmatprep.subr.mxu0 0.0
    %1183 = vmatpush1.msra.mxu0 0.0
    %1184 = vmatprep.subr.mxu0 0.0
    %1185 = vmatpush1.msra.mxu0 0.0
    %1186 = vmatprep.subr.mxu0 0.0
    %1187 = vmatpush1.msra.mxu0 0.0
    %1188 = vmatprep.subr.mxu0 0.0
    %1189 = vmatpush1.msra.mxu0 0.0
    %1190 = vmatprep.subr.mxu0 0.0
    %1191 = vmatpush1.msra.mxu0 0.0
    %1192 = vmatprep.mubr.f32.mxu0 0.0
    %v1193 = vand.u32 %v1125, 4294901760
    %v1194 = vsub.f32 %v1125, %v1193
    %v1195 = vand.u32 %v1194, 4294901760
    %v1196 = vsub.f32 %v1194, %v1195
    %v1197 = vand.u32 %v1196, 4294901760
    %1198 = vmatmul.mubr.f32.gmra.mrb[0].mxu0 %v1197
    %v1199 = vpop.f32.mrb[0].mxu0
    %v1200 = vadd.f32 0.0, %v1199
    %v1201 = vpop.f32.mrb[0].mxu0
    %1202 = vdwg.mxu0
    %1203 = vmatprep.subr.mxu0 0.0
    %v1204 = vand.u32 %v144, 4294901760
    %v1205 = vsub.f32 %v144, %v1204
    %v1206 = vand.u32 %v1205, 4294901760
    %v1207 = vsub.f32 %v1205, %v1206
    %v1208 = vand.u32 %v1207, 4294901760
    %1209 = vmatpush1.msra.mxu0 %v1208
    %1210 = vmatprep.subr.mxu0 0.0
    %1211 = vmatpush1.msra.mxu0 0.0
    %1212 = vmatprep.subr.mxu0 0.0
    %1213 = vmatpush1.msra.mxu0 0.0
    %1214 = vmatprep.subr.mxu0 0.0
    %1215 = vmatpush1.msra.mxu0 0.0
    %1216 = vmatprep.subr.mxu0 0.0
    %1217 = vmatpush1.msra.mxu0 0.0
    %1218 = vmatprep.subr.mxu0 0.0
    %1219 = vmatpush1.msra.mxu0 0.0
    %1220 = vmatprep.subr.mxu0 0.0
    %1221 = vmatpush1.msra.mxu0 0.0
    %1222 = vmatprep.subr.mxu0 0.0
    %1223 = vmatpush1.msra.mxu0 0.0
    %1224 = vmatprep.subr.mxu0 0.0
    %1225 = vmatpush1.msra.mxu0 0.0
    %1226 = vmatprep.subr.mxu0 0.0
    %1227 = vmatpush1.msra.mxu0 0.0
    %1228 = vmatprep.subr.mxu0 0.0
    %1229 = vmatpush1.msra.mxu0 0.0
    %1230 = vmatprep.subr.mxu0 0.0
    %1231 = vmatpush1.msra.mxu0 0.0
    %1232 = vmatprep.subr.mxu0 0.0
    %1233 = vmatpush1.msra.mxu0 0.0
    %1234 = vmatprep.subr.mxu0 0.0
    %1235 = vmatpush1.msra.mxu0 0.0
    %1236 = vmatprep.subr.mxu0 0.0
    %1237 = vmatpush1.msra.mxu0 0.0
    %1238 = vmatprep.subr.mxu0 0.0
    %1239 = vmatpush1.msra.mxu0 0.0
    %1240 = vmatprep.subr.mxu0 0.0
    %1241 = vmatpush1.msra.mxu0 0.0
    %1242 = vmatprep.subr.mxu0 0.0
    %1243 = vmatpush1.msra.mxu0 0.0
    %1244 = vmatprep.subr.mxu0 0.0
    %1245 = vmatpush1.msra.mxu0 0.0
    %1246 = vmatprep.subr.mxu0 0.0
    %1247 = vmatpush1.msra.mxu0 0.0
    %1248 = vmatprep.subr.mxu0 0.0
    %1249 = vmatpush1.msra.mxu0 0.0
    %1250 = vmatprep.subr.mxu0 0.0
    %1251 = vmatpush1.msra.mxu0 0.0
    %1252 = vmatprep.subr.mxu0 0.0
    %1253 = vmatpush1.msra.mxu0 0.0
    %1254 = vmatprep.subr.mxu0 0.0
    %1255 = vmatpush1.msra.mxu0 0.0
    %1256 = vmatprep.subr.mxu0 0.0
    %1257 = vmatpush1.msra.mxu0 0.0
    %1258 = vmatprep.subr.mxu0 0.0
    %1259 = vmatpush1.msra.mxu0 0.0
    %1260 = vmatprep.subr.mxu0 0.0
    %1261 = vmatpush1.msra.mxu0 0.0
    %1262 = vmatprep.subr.mxu0 0.0
    %1263 = vmatpush1.msra.mxu0 0.0
    %1264 = vmatprep.subr.mxu0 0.0
    %1265 = vmatpush1.msra.mxu0 0.0
    %1266 = vmatprep.subr.mxu0 0.0
    %1267 = vmatpush1.msra.mxu0 0.0
    %1268 = vmatprep.subr.mxu0 0.0
    %1269 = vmatpush1.msra.mxu0 0.0
    %1270 = vmatprep.subr.mxu0 0.0
    %1271 = vmatpush1.msra.mxu0 0.0
    %1272 = vmatprep.mubr.f32.mxu0 0.0
    %v1273 = vand.u32 %v1125, 4294901760
    %1274 = vmatmul.mubr.f32.gmra.mrb[0].mxu0 %v1273
    %v1275 = vpop.f32.mrb[0].mxu0
    %v1276 = vadd.f32 %v1200, %v1275
    %v1277 = vpop.f32.mrb[0].mxu0
    %1278 = vdwg.mxu0
    %1279 = vmatprep.subr.mxu0 0.0
    %v1280 = vand.u32 %v144, 4294901760
    %v1281 = vsub.f32 %v144, %v1280
    %1282 = vmatpush1.msra.mxu0 %v1281
    %1283 = vmatprep.subr.mxu0 0.0
    %1284 = vmatpush1.msra.mxu0 0.0
    %1285 = vmatprep.subr.mxu0 0.0
    %1286 = vmatpush1.msra.mxu0 0.0
    %1287 = vmatprep.subr.mxu0 0.0
    %1288 = vmatpush1.msra.mxu0 0.0
    %1289 = vmatprep.subr.mxu0 0.0
    %1290 = vmatpush1.msra.mxu0 0.0
    %1291 = vmatprep.subr.mxu0 0.0
    %1292 = vmatpush1.msra.mxu0 0.0
    %1293 = vmatprep.subr.mxu0 0.0
    %1294 = vmatpush1.msra.mxu0 0.0
    %1295 = vmatprep.subr.mxu0 0.0
    %1296 = vmatpush1.msra.mxu0 0.0
    %1297 = vmatprep.subr.mxu0 0.0
    %1298 = vmatpush1.msra.mxu0 0.0
    %1299 = vmatprep.subr.mxu0 0.0
    %1300 = vmatpush1.msra.mxu0 0.0
    %1301 = vmatprep.subr.mxu0 0.0
    %1302 = vmatpush1.msra.mxu0 0.0
    %1303 = vmatprep.subr.mxu0 0.0
    %1304 = vmatpush1.msra.mxu0 0.0
    %1305 = vmatprep.subr.mxu0 0.0
    %1306 = vmatpush1.msra.mxu0 0.0
    %1307 = vmatprep.subr.mxu0 0.0
    %1308 = vmatpush1.msra.mxu0 0.0
    %1309 = vmatprep.subr.mxu0 0.0
    %1310 = vmatpush1.msra.mxu0 0.0
    %1311 = vmatprep.subr.mxu0 0.0
    %1312 = vmatpush1.msra.mxu0 0.0
    %1313 = vmatprep.subr.mxu0 0.0
    %1314 = vmatpush1.msra.mxu0 0.0
    %1315 = vmatprep.subr.mxu0 0.0
    %1316 = vmatpush1.msra.mxu0 0.0
    %1317 = vmatprep.subr.mxu0 0.0
    %1318 = vmatpush1.msra.mxu0 0.0
    %1319 = vmatprep.subr.mxu0 0.0
    %1320 = vmatpush1.msra.mxu0 0.0
    %1321 = vmatprep.subr.mxu0 0.0
    %1322 = vmatpush1.msra.mxu0 0.0
    %1323 = vmatprep.subr.mxu0 0.0
    %1324 = vmatpush1.msra.mxu0 0.0
    %1325 = vmatprep.subr.mxu0 0.0
    %1326 = vmatpush1.msra.mxu0 0.0
    %1327 = vmatprep.subr.mxu0 0.0
    %1328 = vmatpush1.msra.mxu0 0.0
    %1329 = vmatprep.subr.mxu0 0.0
    %1330 = vmatpush1.msra.mxu0 0.0
    %1331 = vmatprep.subr.mxu0 0.0
    %1332 = vmatpush1.msra.mxu0 0.0
    %1333 = vmatprep.subr.mxu0 0.0
    %1334 = vmatpush1.msra.mxu0 0.0
    %1335 = vmatprep.subr.mxu0 0.0
    %1336 = vmatpush1.msra.mxu0 0.0
    %1337 = vmatprep.subr.mxu0 0.0
    %1338 = vmatpush1.msra.mxu0 0.0
    %1339 = vmatprep.subr.mxu0 0.0
    %1340 = vmatpush1.msra.mxu0 0.0
    %1341 = vmatprep.subr.mxu0 0.0
    %1342 = vmatpush1.msra.mxu0 0.0
    %1343 = vmatprep.subr.mxu0 0.0
    %1344 = vmatpush1.msra.mxu0 0.0
    %1345 = vmatprep.mubr.f32.mxu0 0.0
    %v1346 = vand.u32 %v1125, 4294901760
    %v1347 = vsub.f32 %v1125, %v1346
    %1348 = vmatmul.mubr.f32.gmra.mrb[0].mxu0 %v1347
    %v1349 = vpop.f32.mrb[0].mxu0
    %v1350 = vadd.f32 %v1276, %v1349
    %v1351 = vpop.f32.mrb[0].mxu0
    %1352 = vdwg.mxu0
    %1353 = vmatprep.subr.mxu0 0.0
    %v1354 = vand.u32 %v144, 4294901760
    %1355 = vmatpush1.msra.mxu0 %v1354
    %1356 = vmatprep.subr.mxu0 0.0
    %1357 = vmatpush1.msra.mxu0 0.0
    %1358 = vmatprep.subr.mxu0 0.0
    %1359 = vmatpush1.msra.mxu0 0.0
    %1360 = vmatprep.subr.mxu0 0.0
    %1361 = vmatpush1.msra.mxu0 0.0
    %1362 = vmatprep.subr.mxu0 0.0
    %1363 = vmatpush1.msra.mxu0 0.0
    %1364 = vmatprep.subr.mxu0 0.0
    %1365 = vmatpush1.msra.mxu0 0.0
    %1366 = vmatprep.subr.mxu0 0.0
    %1367 = vmatpush1.msra.mxu0 0.0
    %1368 = vmatprep.subr.mxu0 0.0
    %1369 = vmatpush1.msra.mxu0 0.0
    %1370 = vmatprep.subr.mxu0 0.0
    %1371 = vmatpush1.msra.mxu0 0.0
    %1372 = vmatprep.subr.mxu0 0.0
    %1373 = vmatpush1.msra.mxu0 0.0
    %1374 = vmatprep.subr.mxu0 0.0
    %1375 = vmatpush1.msra.mxu0 0.0
    %1376 = vmatprep.subr.mxu0 0.0
    %1377 = vmatpush1.msra.mxu0 0.0
    %1378 = vmatprep.subr.mxu0 0.0
    %1379 = vmatpush1.msra.mxu0 0.0
    %1380 = vmatprep.subr.mxu0 0.0
    %1381 = vmatpush1.msra.mxu0 0.0
    %1382 = vmatprep.subr.mxu0 0.0
    %1383 = vmatpush1.msra.mxu0 0.0
    %1384 = vmatprep.subr.mxu0 0.0
    %1385 = vmatpush1.msra.mxu0 0.0
    %1386 = vmatprep.subr.mxu0 0.0
    %1387 = vmatpush1.msra.mxu0 0.0
    %1388 = vmatprep.subr.mxu0 0.0
    %1389 = vmatpush1.msra.mxu0 0.0
    %1390 = vmatprep.subr.mxu0 0.0
    %1391 = vmatpush1.msra.mxu0 0.0
    %1392 = vmatprep.subr.mxu0 0.0
    %1393 = vmatpush1.msra.mxu0 0.0
    %1394 = vmatprep.subr.mxu0 0.0
    %1395 = vmatpush1.msra.mxu0 0.0
    %1396 = vmatprep.subr.mxu0 0.0
    %1397 = vmatpush1.msra.mxu0 0.0
    %1398 = vmatprep.subr.mxu0 0.0
    %1399 = vmatpush1.msra.mxu0 0.0
    %1400 = vmatprep.subr.mxu0 0.0
    %1401 = vmatpush1.msra.mxu0 0.0
    %1402 = vmatprep.subr.mxu0 0.0
    %1403 = vmatpush1.msra.mxu0 0.0
    %1404 = vmatprep.subr.mxu0 0.0
    %1405 = vmatpush1.msra.mxu0 0.0
    %1406 = vmatprep.subr.mxu0 0.0
    %1407 = vmatpush1.msra.mxu0 0.0
    %1408 = vmatprep.subr.mxu0 0.0
    %1409 = vmatpush1.msra.mxu0 0.0
    %1410 = vmatprep.subr.mxu0 0.0
    %1411 = vmatpush1.msra.mxu0 0.0
    %1412 = vmatprep.subr.mxu0 0.0
    %1413 = vmatpush1.msra.mxu0 0.0
    %1414 = vmatprep.subr.mxu0 0.0
    %1415 = vmatpush1.msra.mxu0 0.0
    %1416 = vmatprep.subr.mxu0 0.0
    %1417 = vmatpush1.msra.mxu0 0.0
    %1418 = vmatprep.mubr.f32.mxu0 0.0
    %v1419 = vand.u32 %v1125, 4294901760
    %v1420 = vsub.f32 %v1125, %v1419
    %v1421 = vand.u32 %v1420, 4294901760
    %1422 = vmatmul.mubr.f32.gmra.mrb[0].mxu0 %v1421
    %v1423 = vpop.f32.mrb[0].mxu0
    %v1424 = vadd.f32 %v1350, %v1423
    %v1425 = vpop.f32.mrb[0].mxu0
    %1426 = vdwg.mxu0
    %1427 = vmatprep.subr.mxu0 0.0
    %v1428 = vand.u32 %v144, 4294901760
    %v1429 = vsub.f32 %v144, %v1428
    %v1430 = vand.u32 %v1429, 4294901760
    %1431 = vmatpush1.msra.mxu0 %v1430
    %1432 = vmatprep.subr.mxu0 0.0
    %1433 = vmatpush1.msra.mxu0 0.0
    %1434 = vmatprep.subr.mxu0 0.0
    %1435 = vmatpush1.msra.mxu0 0.0
    %1436 = vmatprep.subr.mxu0 0.0
    %1437 = vmatpush1.msra.mxu0 0.0
    %1438 = vmatprep.subr.mxu0 0.0
    %1439 = vmatpush1.msra.mxu0 0.0
    %1440 = vmatprep.subr.mxu0 0.0
    %1441 = vmatpush1.msra.mxu0 0.0
    %1442 = vmatprep.subr.mxu0 0.0
    %1443 = vmatpush1.msra.mxu0 0.0
    %1444 = vmatprep.subr.mxu0 0.0
    %1445 = vmatpush1.msra.mxu0 0.0
    %1446 = vmatprep.subr.mxu0 0.0
    %1447 = vmatpush1.msra.mxu0 0.0
    %1448 = vmatprep.subr.mxu0 0.0
    %1449 = vmatpush1.msra.mxu0 0.0
    %1450 = vmatprep.subr.mxu0 0.0
    %1451 = vmatpush1.msra.mxu0 0.0
    %1452 = vmatprep.subr.mxu0 0.0
    %1453 = vmatpush1.msra.mxu0 0.0
    %1454 = vmatprep.subr.mxu0 0.0
    %1455 = vmatpush1.msra.mxu0 0.0
    %1456 = vmatprep.subr.mxu0 0.0
    %1457 = vmatpush1.msra.mxu0 0.0
    %1458 = vmatprep.subr.mxu0 0.0
    %1459 = vmatpush1.msra.mxu0 0.0
    %1460 = vmatprep.subr.mxu0 0.0
    %1461 = vmatpush1.msra.mxu0 0.0
    %1462 = vmatprep.subr.mxu0 0.0
    %1463 = vmatpush1.msra.mxu0 0.0
    %1464 = vmatprep.subr.mxu0 0.0
    %1465 = vmatpush1.msra.mxu0 0.0
    %1466 = vmatprep.subr.mxu0 0.0
    %1467 = vmatpush1.msra.mxu0 0.0
    %1468 = vmatprep.subr.mxu0 0.0
    %1469 = vmatpush1.msra.mxu0 0.0
    %1470 = vmatprep.subr.mxu0 0.0
    %1471 = vmatpush1.msra.mxu0 0.0
    %1472 = vmatprep.subr.mxu0 0.0
    %1473 = vmatpush1.msra.mxu0 0.0
    %1474 = vmatprep.subr.mxu0 0.0
    %1475 = vmatpush1.msra.mxu0 0.0
    %1476 = vmatprep.subr.mxu0 0.0
    %1477 = vmatpush1.msra.mxu0 0.0
    %1478 = vmatprep.subr.mxu0 0.0
    %1479 = vmatpush1.msra.mxu0 0.0
    %1480 = vmatprep.subr.mxu0 0.0
    %1481 = vmatpush1.msra.mxu0 0.0
    %1482 = vmatprep.subr.mxu0 0.0
    %1483 = vmatpush1.msra.mxu0 0.0
    %1484 = vmatprep.subr.mxu0 0.0
    %1485 = vmatpush1.msra.mxu0 0.0
    %1486 = vmatprep.subr.mxu0 0.0
    %1487 = vmatpush1.msra.mxu0 0.0
    %1488 = vmatprep.subr.mxu0 0.0
    %1489 = vmatpush1.msra.mxu0 0.0
    %1490 = vmatprep.subr.mxu0 0.0
    %1491 = vmatpush1.msra.mxu0 0.0
    %1492 = vmatprep.subr.mxu0 0.0
    %1493 = vmatpush1.msra.mxu0 0.0
    %1494 = vmatprep.mubr.f32.mxu0 0.0
    %v1495 = vand.u32 %v1125, 4294901760
    %1496 = vmatmul.mubr.f32.gmra.mrb[0].mxu0 %v1495
    %v1497 = vpop.f32.mrb[0].mxu0
    %v1498 = vadd.f32 %v1424, %v1497
    %v1499 = vpop.f32.mrb[0].mxu0
    %1500 = vdwg.mxu0
    %1501 = vmatprep.subr.mxu0 0.0
    %v1502 = vand.u32 %v144, 4294901760
    %1503 = vmatpush1.msra.mxu0 %v1502
    %1504 = vmatprep.subr.mxu0 0.0
    %1505 = vmatpush1.msra.mxu0 0.0
    %1506 = vmatprep.subr.mxu0 0.0
    %1507 = vmatpush1.msra.mxu0 0.0
    %1508 = vmatprep.subr.mxu0 0.0
    %1509 = vmatpush1.msra.mxu0 0.0
    %1510 = vmatprep.subr.mxu0 0.0
    %1511 = vmatpush1.msra.mxu0 0.0
    %1512 = vmatprep.subr.mxu0 0.0
    %1513 = vmatpush1.msra.mxu0 0.0
    %1514 = vmatprep.subr.mxu0 0.0
    %1515 = vmatpush1.msra.mxu0 0.0
    %1516 = vmatprep.subr.mxu0 0.0
    %1517 = vmatpush1.msra.mxu0 0.0
    %1518 = vmatprep.subr.mxu0 0.0
    %1519 = vmatpush1.msra.mxu0 0.0
    %1520 = vmatprep.subr.mxu0 0.0
    %1521 = vmatpush1.msra.mxu0 0.0
    %1522 = vmatprep.subr.mxu0 0.0
    %1523 = vmatpush1.msra.mxu0 0.0
    %1524 = vmatprep.subr.mxu0 0.0
    %1525 = vmatpush1.msra.mxu0 0.0
    %1526 = vmatprep.subr.mxu0 0.0
    %1527 = vmatpush1.msra.mxu0 0.0
    %1528 = vmatprep.subr.mxu0 0.0
    %1529 = vmatpush1.msra.mxu0 0.0
    %1530 = vmatprep.subr.mxu0 0.0
    %1531 = vmatpush1.msra.mxu0 0.0
    %1532 = vmatprep.subr.mxu0 0.0
    %1533 = vmatpush1.msra.mxu0 0.0
    %1534 = vmatprep.subr.mxu0 0.0
    %1535 = vmatpush1.msra.mxu0 0.0
    %1536 = vmatprep.subr.mxu0 0.0
    %1537 = vmatpush1.msra.mxu0 0.0
    %1538 = vmatprep.subr.mxu0 0.0
    %1539 = vmatpush1.msra.mxu0 0.0
    %1540 = vmatprep.subr.mxu0 0.0
    %1541 = vmatpush1.msra.mxu0 0.0
    %1542 = vmatprep.subr.mxu0 0.0
    %1543 = vmatpush1.msra.mxu0 0.0
    %1544 = vmatprep.subr.mxu0 0.0
    %1545 = vmatpush1.msra.mxu0 0.0
    %1546 = vmatprep.subr.mxu0 0.0
    %1547 = vmatpush1.msra.mxu0 0.0
    %1548 = vmatprep.subr.mxu0 0.0
    %1549 = vmatpush1.msra.mxu0 0.0
    %1550 = vmatprep.subr.mxu0 0.0
    %1551 = vmatpush1.msra.mxu0 0.0
    %1552 = vmatprep.subr.mxu0 0.0
    %1553 = vmatpush1.msra.mxu0 0.0
    %1554 = vmatprep.subr.mxu0 0.0
    %1555 = vmatpush1.msra.mxu0 0.0
    %1556 = vmatprep.subr.mxu0 0.0
    %1557 = vmatpush1.msra.mxu0 0.0
    %1558 = vmatprep.subr.mxu0 0.0
    %1559 = vmatpush1.msra.mxu0 0.0
    %1560 = vmatprep.subr.mxu0 0.0
    %1561 = vmatpush1.msra.mxu0 0.0
    %1562 = vmatprep.subr.mxu0 0.0
    %1563 = vmatpush1.msra.mxu0 0.0
    %1564 = vmatprep.subr.mxu0 0.0
    %1565 = vmatpush1.msra.mxu0 0.0
    %1566 = vmatprep.mubr.f32.mxu0 0.0
    %v1567 = vand.u32 %v1125, 4294901760
    %1568 = vmatmul.mubr.f32.gmra.mrb[0].mxu0 %v1567
    %v1569 = vpop.f32.mrb[0].mxu0
    %v1570 = vadd.f32 %v1498, %v1569
    %v1571 = vpop.f32.mrb[0].mxu0
    %1572 = vdwg.mxu0
    %v1573 = vlaneseq
    %v1574 = vshrl.u32 %v1573, 7
    %v1575 = vsub.s32 1, %v1574
    %v1576 = vrot.slane %v122, %v1575
    %v1577 = vmul.f32 %v1570, %v1576
    %v1578 = vadd.f32 %v1123, %v1577
    %v1579 = vsel %vm145, %v1578, 0.0
    %1580 = vadd.xlane.f32.xlu0 %v1579
    %v1581 = vpop.xlane.xlu0 %1580
    %v1582 = vrcp.pop 32.0
    %v1583 = vmul.f32 %v1581, %v1582
    %v1584 = vsub.f32 %v1578, %v1583
    %v1585 = vmul.f32 %v1584, %v1584
    %v1586 = vsel %vm145, %v1585, 0.0
    %1587 = vadd.xlane.f32.xlu0 %v1586
    %v1588 = vpop.xlane.xlu0 %1587
    %v1589 = vmul.f32 %v1588, %v1582
    %v1590 = vadd.f32 %v1589, 1e-12
    %v1591 = vrsqrt.pop %v1590
    %v1592 = vmul.f32 %v1584, %v1591
    %v1594 = vlaneseq
    %v1595 = vshrl.u32 %v1594, 7
    %v1596 = vsub.s32 0, %v1595
    %v1597 = vrot.slane %v120, %v1596
    %v1599 = vmul.f32 %v1592, %v1597
    %v1601 = vlaneseq
    %v1602 = vshrl.u32 %v1601, 7
    %v1603 = vsub.s32 0, %v1602
    %v1604 = vrot.slane %v121, %v1603
    %v1606 = vadd.f32 %v1599, %v1604
    %s1607 = scalar_lea.vmem [#allocation2], 8
    %v1608 = vld [vmem:[%s1607] sm:$0xff]
    %s1609 = scalar_lea.vmem [#allocation4], 8
    %v1610 = vld [vmem:[%s1609] sm:$0xff]
    %v1612 = vsel %vm145, %v1608, 0
    %1614 = vmatprep.subr.mxu0 0.0
    %v1615 = vand.u32 %v1612, 4294901760
    %1616 = vmatpush1.xpose.msra.mxu0 %v1615
    %1617 = vmatprep.subr.mxu0 0.0
    %1618 = vmatpush1.xpose.msra.mxu0 0.0
    %1619 = vmatprep.subr.mxu0 0.0
    %1620 = vmatpush1.xpose.msra.mxu0 0.0
    %1621 = vmatprep.subr.mxu0 0.0
    %1622 = vmatpush1.xpose.msra.mxu0 0.0
    %1623 = vmatprep.subr.mxu0 0.0
    %1624 = vmatpush1.xpose.msra.mxu0 0.0
    %1625 = vmatprep.subr.mxu0 0.0
    %1626 = vmatpush1.xpose.msra.mxu0 0.0
    %1627 = vmatprep.subr.mxu0 0.0
    %1628 = vmatpush1.xpose.msra.mxu0 0.0
    %1629 = vmatprep.subr.mxu0 0.0
    %1630 = vmatpush1.xpose.msra.mxu0 0.0
    %1631 = vmatprep.subr.mxu0 0.0
    %1632 = vmatpush1.xpose.msra.mxu0 0.0
    %1633 = vmatprep.subr.mxu0 0.0
    %1634 = vmatpush1.xpose.msra.mxu0 0.0
    %1635 = vmatprep.subr.mxu0 0.0
    %1636 = vmatpush1.xpose.msra.mxu0 0.0
    %1637 = vmatprep.subr.mxu0 0.0
    %1638 = vmatpush1.xpose.msra.mxu0 0.0
    %1639 = vmatprep.subr.mxu0 0.0
    %1640 = vmatpush1.xpose.msra.mxu0 0.0
    %1641 = vmatprep.subr.mxu0 0.0
    %1642 = vmatpush1.xpose.msra.mxu0 0.0
    %1643 = vmatprep.subr.mxu0 0.0
    %1644 = vmatpush1.xpose.msra.mxu0 0.0
    %1645 = vmatprep.subr.mxu0 0.0
    %1646 = vmatpush1.xpose.msra.mxu0 0.0
    %1647 = vmatprep.subr.mxu0 0.0
    %1648 = vmatpush1.xpose.msra.mxu0 0.0
    %1649 = vmatprep.subr.mxu0 0.0
    %1650 = vmatpush1.xpose.msra.mxu0 0.0
    %1651 = vmatprep.subr.mxu0 0.0
    %1652 = vmatpush1.xpose.msra.mxu0 0.0
    %1653 = vmatprep.subr.mxu0 0.0
    %1654 = vmatpush1.xpose.msra.mxu0 0.0
    %1655 = vmatprep.subr.mxu0 0.0
    %1656 = vmatpush1.xpose.msra.mxu0 0.0
    %1657 = vmatprep.subr.mxu0 0.0
    %1658 = vmatpush1.xpose.msra.mxu0 0.0
    %1659 = vmatprep.subr.mxu0 0.0
    %1660 = vmatpush1.xpose.msra.mxu0 0.0
    %1661 = vmatprep.subr.mxu0 0.0
    %1662 = vmatpush1.xpose.msra.mxu0 0.0
    %1663 = vmatprep.subr.mxu0 0.0
    %1664 = vmatpush1.xpose.msra.mxu0 0.0
    %1665 = vmatprep.subr.mxu0 0.0
    %1666 = vmatpush1.xpose.msra.mxu0 0.0
    %1667 = vmatprep.subr.mxu0 0.0
    %1668 = vmatpush1.xpose.msra.mxu0 0.0
    %1669 = vmatprep.subr.mxu0 0.0
    %1670 = vmatpush1.xpose.msra.mxu0 0.0
    %1671 = vmatprep.subr.mxu0 0.0
    %1672 = vmatpush1.xpose.msra.mxu0 0.0
    %1673 = vmatprep.subr.mxu0 0.0
    %1674 = vmatpush1.xpose.msra.mxu0 0.0
    %1675 = vmatprep.subr.mxu0 0.0
    %1676 = vmatpush1.xpose.msra.mxu0 0.0
    %1677 = vmatprep.subr.mxu0 0.0
    %1678 = vmatpush1.xpose.msra.mxu0 0.0
    %1679 = vmatprep.mubr.f32.mxu0 0.0
    %v1680 = vand.u32 %v147, 4294901760
    %v1681 = vsub.f32 %v147, %v1680
    %v1682 = vand.u32 %v1681, 4294901760
    %v1683 = vsub.f32 %v1681, %v1682
    %v1684 = vand.u32 %v1683, 4294901760
    %1685 = vmatmul.mubr.f32.gmra.mrb[0].mxu0 %v1684
    %v1686 = vpop.f32.mrb[0].mxu0
    %v1687 = vadd.f32 0.0, %v1686
    %v1688 = vpop.f32.mrb[0].mxu0
    %1689 = vmatprep.mubr.f32.mxu0 0.0
    %v1690 = vand.u32 %v150, 4294901760
    %v1691 = vsub.f32 %v150, %v1690
    %v1692 = vand.u32 %v1691, 4294901760
    %v1693 = vsub.f32 %v1691, %v1692
    %v1694 = vand.u32 %v1693, 4294901760
    %1695 = vmatmul.mubr.f32.gmra.mrb[0].mxu0 %v1694
    %v1696 = vpop.f32.mrb[0].mxu0
    %v1697 = vadd.f32 0.0, %v1696
    %v1698 = vpop.f32.mrb[0].mxu0
    %1699 = vdwg.mxu0
    %1700 = vmatprep.subr.mxu0 0.0
    %v1701 = vand.u32 %v1612, 4294901760
    %v1702 = vsub.f32 %v1612, %v1701
    %v1703 = vand.u32 %v1702, 4294901760
    %v1704 = vsub.f32 %v1702, %v1703
    %v1705 = vand.u32 %v1704, 4294901760
    %1706 = vmatpush1.xpose.msra.mxu0 %v1705
    %1707 = vmatprep.subr.mxu0 0.0
    %1708 = vmatpush1.xpose.msra.mxu0 0.0
    %1709 = vmatprep.subr.mxu0 0.0
    %1710 = vmatpush1.xpose.msra.mxu0 0.0
    %1711 = vmatprep.subr.mxu0 0.0
    %1712 = vmatpush1.xpose.msra.mxu0 0.0
    %1713 = vmatprep.subr.mxu0 0.0
    %1714 = vmatpush1.xpose.msra.mxu0 0.0
    %1715 = vmatprep.subr.mxu0 0.0
    %1716 = vmatpush1.xpose.msra.mxu0 0.0
    %1717 = vmatprep.subr.mxu0 0.0
    %1718 = vmatpush1.xpose.msra.mxu0 0.0
    %1719 = vmatprep.subr.mxu0 0.0
    %1720 = vmatpush1.xpose.msra.mxu0 0.0
    %1721 = vmatprep.subr.mxu0 0.0
    %1722 = vmatpush1.xpose.msra.mxu0 0.0
    %1723 = vmatprep.subr.mxu0 0.0
    %1724 = vmatpush1.xpose.msra.mxu0 0.0
    %1725 = vmatprep.subr.mxu0 0.0
    %1726 = vmatpush1.xpose.msra.mxu0 0.0
    %1727 = vmatprep.subr.mxu0 0.0
    %1728 = vmatpush1.xpose.msra.mxu0 0.0
    %1729 = vmatprep.subr.mxu0 0.0
    %1730 = vmatpush1.xpose.msra.mxu0 0.0
    %1731 = vmatprep.subr.mxu0 0.0
    %1732 = vmatpush1.xpose.msra.mxu0 0.0
    %1733 = vmatprep.subr.mxu0 0.0
    %1734 = vmatpush1.xpose.msra.mxu0 0.0
    %1735 = vmatprep.subr.mxu0 0.0
    %1736 = vmatpush1.xpose.msra.mxu0 0.0
    %1737 = vmatprep.subr.mxu0 0.0
    %1738 = vmatpush1.xpose.msra.mxu0 0.0
    %1739 = vmatprep.subr.mxu0 0.0
    %1740 = vmatpush1.xpose.msra.mxu0 0.0
    %1741 = vmatprep.subr.mxu0 0.0
    %1742 = vmatpush1.xpose.msra.mxu0 0.0
    %1743 = vmatprep.subr.mxu0 0.0
    %1744 = vmatpush1.xpose.msra.mxu0 0.0
    %1745 = vmatprep.subr.mxu0 0.0
    %1746 = vmatpush1.xpose.msra.mxu0 0.0
    %1747 = vmatprep.subr.mxu0 0.0
    %1748 = vmatpush1.xpose.msra.mxu0 0.0
    %1749 = vmatprep.subr.mxu0 0.0
    %1750 = vmatpush1.xpose.msra.mxu0 0.0
    %1751 = vmatprep.subr.mxu0 0.0
    %1752 = vmatpush1.xpose.msra.mxu0 0.0
    %1753 = vmatprep.subr.mxu0 0.0
    %1754 = vmatpush1.xpose.msra.mxu0 0.0
    %1755 = vmatprep.subr.mxu0 0.0
    %1756 = vmatpush1.xpose.msra.mxu0 0.0
    %1757 = vmatprep.subr.mxu0 0.0
    %1758 = vmatpush1.xpose.msra.mxu0 0.0
    %1759 = vmatprep.subr.mxu0 0.0
    %1760 = vmatpush1.xpose.msra.mxu0 0.0
    %1761 = vmatprep.subr.mxu0 0.0
    %1762 = vmatpush1.xpose.msra.mxu0 0.0
    %1763 = vmatprep.subr.mxu0 0.0
    %1764 = vmatpush1.xpose.msra.mxu0 0.0
    %1765 = vmatprep.subr.mxu0 0.0
    %1766 = vmatpush1.xpose.msra.mxu0 0.0
    %1767 = vmatprep.subr.mxu0 0.0
    %1768 = vmatpush1.xpose.msra.mxu0 0.0
    %1769 = vmatprep.mubr.f32.mxu0 0.0
    %v1770 = vand.u32 %v147, 4294901760
    %1771 = vmatmul.mubr.f32.gmra.mrb[0].mxu0 %v1770
    %v1772 = vpop.f32.mrb[0].mxu0
    %v1773 = vadd.f32 %v1687, %v1772
    %v1774 = vpop.f32.mrb[0].mxu0
    %1775 = vmatprep.mubr.f32.mxu0 0.0
    %v1776 = vand.u32 %v150, 4294901760
    %1777 = vmatmul.mubr.f32.gmra.mrb[0].mxu0 %v1776
    %v1778 = vpop.f32.mrb[0].mxu0
    %v1779 = vadd.f32 %v1697, %v1778
    %v1780 = vpop.f32.mrb[0].mxu0
    %1781 = vdwg.mxu0
    %1782 = vmatprep.subr.mxu0 0.0
    %v1783 = vand.u32 %v1612, 4294901760
    %v1784 = vsub.f32 %v1612, %v1783
    %1785 = vmatpush1.xpose.msra.mxu0 %v1784
    %1786 = vmatprep.subr.mxu0 0.0
    %1787 = vmatpush1.xpose.msra.mxu0 0.0
    %1788 = vmatprep.subr.mxu0 0.0
    %1789 = vmatpush1.xpose.msra.mxu0 0.0
    %1790 = vmatprep.subr.mxu0 0.0
    %1791 = vmatpush1.xpose.msra.mxu0 0.0
    %1792 = vmatprep.subr.mxu0 0.0
    %1793 = vmatpush1.xpose.msra.mxu0 0.0
    %1794 = vmatprep.subr.mxu0 0.0
    %1795 = vmatpush1.xpose.msra.mxu0 0.0
    %1796 = vmatprep.subr.mxu0 0.0
    %1797 = vmatpush1.xpose.msra.mxu0 0.0
    %1798 = vmatprep.subr.mxu0 0.0
    %1799 = vmatpush1.xpose.msra.mxu0 0.0
    %1800 = vmatprep.subr.mxu0 0.0
    %1801 = vmatpush1.xpose.msra.mxu0 0.0
    %1802 = vmatprep.subr.mxu0 0.0
    %1803 = vmatpush1.xpose.msra.mxu0 0.0
    %1804 = vmatprep.subr.mxu0 0.0
    %1805 = vmatpush1.xpose.msra.mxu0 0.0
    %1806 = vmatprep.subr.mxu0 0.0
    %1807 = vmatpush1.xpose.msra.mxu0 0.0
    %1808 = vmatprep.subr.mxu0 0.0
    %1809 = vmatpush1.xpose.msra.mxu0 0.0
    %1810 = vmatprep.subr.mxu0 0.0
    %1811 = vmatpush1.xpose.msra.mxu0 0.0
    %1812 = vmatprep.subr.mxu0 0.0
    %1813 = vmatpush1.xpose.msra.mxu0 0.0
    %1814 = vmatprep.subr.mxu0 0.0
    %1815 = vmatpush1.xpose.msra.mxu0 0.0
    %1816 = vmatprep.subr.mxu0 0.0
    %1817 = vmatpush1.xpose.msra.mxu0 0.0
    %1818 = vmatprep.subr.mxu0 0.0
    %1819 = vmatpush1.xpose.msra.mxu0 0.0
    %1820 = vmatprep.subr.mxu0 0.0
    %1821 = vmatpush1.xpose.msra.mxu0 0.0
    %1822 = vmatprep.subr.mxu0 0.0
    %1823 = vmatpush1.xpose.msra.mxu0 0.0
    %1824 = vmatprep.subr.mxu0 0.0
    %1825 = vmatpush1.xpose.msra.mxu0 0.0
    %1826 = vmatprep.subr.mxu0 0.0
    %1827 = vmatpush1.xpose.msra.mxu0 0.0
    %1828 = vmatprep.subr.mxu0 0.0
    %1829 = vmatpush1.xpose.msra.mxu0 0.0
    %1830 = vmatprep.subr.mxu0 0.0
    %1831 = vmatpush1.xpose.msra.mxu0 0.0
    %1832 = vmatprep.subr.mxu0 0.0
    %1833 = vmatpush1.xpose.msra.mxu0 0.0
    %1834 = vmatprep.subr.mxu0 0.0
    %1835 = vmatpush1.xpose.msra.mxu0 0.0
    %1836 = vmatprep.subr.mxu0 0.0
    %1837 = vmatpush1.xpose.msra.mxu0 0.0
    %1838 = vmatprep.subr.mxu0 0.0
    %1839 = vmatpush1.xpose.msra.mxu0 0.0
    %1840 = vmatprep.subr.mxu0 0.0
    %1841 = vmatpush1.xpose.msra.mxu0 0.0
    %1842 = vmatprep.subr.mxu0 0.0
    %1843 = vmatpush1.xpose.msra.mxu0 0.0
    %1844 = vmatprep.subr.mxu0 0.0
    %1845 = vmatpush1.xpose.msra.mxu0 0.0
    %1846 = vmatprep.subr.mxu0 0.0
    %1847 = vmatpush1.xpose.msra.mxu0 0.0
    %1848 = vmatprep.mubr.f32.mxu0 0.0
    %v1849 = vand.u32 %v147, 4294901760
    %v1850 = vsub.f32 %v147, %v1849
    %1851 = vmatmul.mubr.f32.gmra.mrb[0].mxu0 %v1850
    %v1852 = vpop.f32.mrb[0].mxu0
    %v1853 = vadd.f32 %v1773, %v1852
    %v1854 = vpop.f32.mrb[0].mxu0
    %1855 = vmatprep.mubr.f32.mxu0 0.0
    %v1856 = vand.u32 %v150, 4294901760
    %v1857 = vsub.f32 %v150, %v1856
    %1858 = vmatmul.mubr.f32.gmra.mrb[0].mxu0 %v1857
    %v1859 = vpop.f32.mrb[0].mxu0
    %v1860 = vadd.f32 %v1779, %v1859
    %v1861 = vpop.f32.mrb[0].mxu0
    %1862 = vdwg.mxu0
    %1863 = vmatprep.subr.mxu0 0.0
    %v1864 = vand.u32 %v1612, 4294901760
    %1865 = vmatpush1.xpose.msra.mxu0 %v1864
    %1866 = vmatprep.subr.mxu0 0.0
    %1867 = vmatpush1.xpose.msra.mxu0 0.0
    %1868 = vmatprep.subr.mxu0 0.0
    %1869 = vmatpush1.xpose.msra.mxu0 0.0
    %1870 = vmatprep.subr.mxu0 0.0
    %1871 = vmatpush1.xpose.msra.mxu0 0.0
    %1872 = vmatprep.subr.mxu0 0.0
    %1873 = vmatpush1.xpose.msra.mxu0 0.0
    %1874 = vmatprep.subr.mxu0 0.0
    %1875 = vmatpush1.xpose.msra.mxu0 0.0
    %1876 = vmatprep.subr.mxu0 0.0
    %1877 = vmatpush1.xpose.msra.mxu0 0.0
    %1878 = vmatprep.subr.mxu0 0.0
    %1879 = vmatpush1.xpose.msra.mxu0 0.0
    %1880 = vmatprep.subr.mxu0 0.0
    %1881 = vmatpush1.xpose.msra.mxu0 0.0
    %1882 = vmatprep.subr.mxu0 0.0
    %1883 = vmatpush1.xpose.msra.mxu0 0.0
    %1884 = vmatprep.subr.mxu0 0.0
    %1885 = vmatpush1.xpose.msra.mxu0 0.0
    %1886 = vmatprep.subr.mxu0 0.0
    %1887 = vmatpush1.xpose.msra.mxu0 0.0
    %1888 = vmatprep.subr.mxu0 0.0
    %1889 = vmatpush1.xpose.msra.mxu0 0.0
    %1890 = vmatprep.subr.mxu0 0.0
    %1891 = vmatpush1.xpose.msra.mxu0 0.0
    %1892 = vmatprep.subr.mxu0 0.0
    %1893 = vmatpush1.xpose.msra.mxu0 0.0
    %1894 = vmatprep.subr.mxu0 0.0
    %1895 = vmatpush1.xpose.msra.mxu0 0.0
    %1896 = vmatprep.subr.mxu0 0.0
    %1897 = vmatpush1.xpose.msra.mxu0 0.0
    %1898 = vmatprep.subr.mxu0 0.0
    %1899 = vmatpush1.xpose.msra.mxu0 0.0
    %1900 = vmatprep.subr.mxu0 0.0
    %1901 = vmatpush1.xpose.msra.mxu0 0.0
    %1902 = vmatprep.subr.mxu0 0.0
    %1903 = vmatpush1.xpose.msra.mxu0 0.0
    %1904 = vmatprep.subr.mxu0 0.0
    %1905 = vmatpush1.xpose.msra.mxu0 0.0
    %1906 = vmatprep.subr.mxu0 0.0
    %1907 = vmatpush1.xpose.msra.mxu0 0.0
    %1908 = vmatprep.subr.mxu0 0.0
    %1909 = vmatpush1.xpose.msra.mxu0 0.0
    %1910 = vmatprep.subr.mxu0 0.0
    %1911 = vmatpush1.xpose.msra.mxu0 0.0
    %1912 = vmatprep.subr.mxu0 0.0
    %1913 = vmatpush1.xpose.msra.mxu0 0.0
    %1914 = vmatprep.subr.mxu0 0.0
    %1915 = vmatpush1.xpose.msra.mxu0 0.0
    %1916 = vmatprep.subr.mxu0 0.0
    %1917 = vmatpush1.xpose.msra.mxu0 0.0
    %1918 = vmatprep.subr.mxu0 0.0
    %1919 = vmatpush1.xpose.msra.mxu0 0.0
    %1920 = vmatprep.subr.mxu0 0.0
    %1921 = vmatpush1.xpose.msra.mxu0 0.0
    %1922 = vmatprep.subr.mxu0 0.0
    %1923 = vmatpush1.xpose.msra.mxu0 0.0
    %1924 = vmatprep.subr.mxu0 0.0
    %1925 = vmatpush1.xpose.msra.mxu0 0.0
    %1926 = vmatprep.subr.mxu0 0.0
    %1927 = vmatpush1.xpose.msra.mxu0 0.0
    %1928 = vmatprep.mubr.f32.mxu0 0.0
    %v1929 = vand.u32 %v147, 4294901760
    %v1930 = vsub.f32 %v147, %v1929
    %v1931 = vand.u32 %v1930, 4294901760
    %1932 = vmatmul.mubr.f32.gmra.mrb[0].mxu0 %v1931
    %v1933 = vpop.f32.mrb[0].mxu0
    %v1934 = vadd.f32 %v1853, %v1933
    %v1935 = vpop.f32.mrb[0].mxu0
    %1936 = vmatprep.mubr.f32.mxu0 0.0
    %v1937 = vand.u32 %v150, 4294901760
    %v1938 = vsub.f32 %v150, %v1937
    %v1939 = vand.u32 %v1938, 4294901760
    %1940 = vmatmul.mubr.f32.gmra.mrb[0].mxu0 %v1939
    %v1941 = vpop.f32.mrb[0].mxu0
    %v1942 = vadd.f32 %v1860, %v1941
    %v1943 = vpop.f32.mrb[0].mxu0
    %1944 = vdwg.mxu0
    %1945 = vmatprep.subr.mxu0 0.0
    %v1946 = vand.u32 %v1612, 4294901760
    %v1947 = vsub.f32 %v1612, %v1946
    %v1948 = vand.u32 %v1947, 4294901760
    %1949 = vmatpush1.xpose.msra.mxu0 %v1948
    %1950 = vmatprep.subr.mxu0 0.0
    %1951 = vmatpush1.xpose.msra.mxu0 0.0
    %1952 = vmatprep.subr.mxu0 0.0
    %1953 = vmatpush1.xpose.msra.mxu0 0.0
    %1954 = vmatprep.subr.mxu0 0.0
    %1955 = vmatpush1.xpose.msra.mxu0 0.0
    %1956 = vmatprep.subr.mxu0 0.0
    %1957 = vmatpush1.xpose.msra.mxu0 0.0
    %1958 = vmatprep.subr.mxu0 0.0
    %1959 = vmatpush1.xpose.msra.mxu0 0.0
    %1960 = vmatprep.subr.mxu0 0.0
    %1961 = vmatpush1.xpose.msra.mxu0 0.0
    %1962 = vmatprep.subr.mxu0 0.0
    %1963 = vmatpush1.xpose.msra.mxu0 0.0
    %1964 = vmatprep.subr.mxu0 0.0
    %1965 = vmatpush1.xpose.msra.mxu0 0.0
    %1966 = vmatprep.subr.mxu0 0.0
    %1967 = vmatpush1.xpose.msra.mxu0 0.0
    %1968 = vmatprep.subr.mxu0 0.0
    %1969 = vmatpush1.xpose.msra.mxu0 0.0
    %1970 = vmatprep.subr.mxu0 0.0
    %1971 = vmatpush1.xpose.msra.mxu0 0.0
    %1972 = vmatprep.subr.mxu0 0.0
    %1973 = vmatpush1.xpose.msra.mxu0 0.0
    %1974 = vmatprep.subr.mxu0 0.0
    %1975 = vmatpush1.xpose.msra.mxu0 0.0
    %1976 = vmatprep.subr.mxu0 0.0
    %1977 = vmatpush1.xpose.msra.mxu0 0.0
    %1978 = vmatprep.subr.mxu0 0.0
    %1979 = vmatpush1.xpose.msra.mxu0 0.0
    %1980 = vmatprep.subr.mxu0 0.0
    %1981 = vmatpush1.xpose.msra.mxu0 0.0
    %1982 = vmatprep.subr.mxu0 0.0
    %1983 = vmatpush1.xpose.msra.mxu0 0.0
    %1984 = vmatprep.subr.mxu0 0.0
    %1985 = vmatpush1.xpose.msra.mxu0 0.0
    %1986 = vmatprep.subr.mxu0 0.0
    %1987 = vmatpush1.xpose.msra.mxu0 0.0
    %1988 = vmatprep.subr.mxu0 0.0
    %1989 = vmatpush1.xpose.msra.mxu0 0.0
    %1990 = vmatprep.subr.mxu0 0.0
    %1991 = vmatpush1.xpose.msra.mxu0 0.0
    %1992 = vmatprep.subr.mxu0 0.0
    %1993 = vmatpush1.xpose.msra.mxu0 0.0
    %1994 = vmatprep.subr.mxu0 0.0
    %1995 = vmatpush1.xpose.msra.mxu0 0.0
    %1996 = vmatprep.subr.mxu0 0.0
    %1997 = vmatpush1.xpose.msra.mxu0 0.0
    %1998 = vmatprep.subr.mxu0 0.0
    %1999 = vmatpush1.xpose.msra.mxu0 0.0
    %2000 = vmatprep.subr.mxu0 0.0
    %2001 = vmatpush1.xpose.msra.mxu0 0.0
    %2002 = vmatprep.subr.mxu0 0.0
    %2003 = vmatpush1.xpose.msra.mxu0 0.0
    %2004 = vmatprep.subr.mxu0 0.0
    %2005 = vmatpush1.xpose.msra.mxu0 0.0
    %2006 = vmatprep.subr.mxu0 0.0
    %2007 = vmatpush1.xpose.msra.mxu0 0.0
    %2008 = vmatprep.subr.mxu0 0.0
    %2009 = vmatpush1.xpose.msra.mxu0 0.0
    %2010 = vmatprep.subr.mxu0 0.0
    %2011 = vmatpush1.xpose.msra.mxu0 0.0
    %2012 = vmatprep.mubr.f32.mxu0 0.0
    %v2013 = vand.u32 %v147, 4294901760
    %2014 = vmatmul.mubr.f32.gmra.mrb[0].mxu0 %v2013
    %v2015 = vpop.f32.mrb[0].mxu0
    %v2016 = vadd.f32 %v1934, %v2015
    %v2017 = vpop.f32.mrb[0].mxu0
    %2018 = vmatprep.mubr.f32.mxu0 0.0
    %v2019 = vand.u32 %v150, 4294901760
    %2020 = vmatmul.mubr.f32.gmra.mrb[0].mxu0 %v2019
    %v2021 = vpop.f32.mrb[0].mxu0
    %v2022 = vadd.f32 %v1942, %v2021
    %v2023 = vpop.f32.mrb[0].mxu0
    %2024 = vdwg.mxu0
    %2025 = vmatprep.subr.mxu0 0.0
    %v2026 = vand.u32 %v1612, 4294901760
    %2027 = vmatpush1.xpose.msra.mxu0 %v2026
    %2028 = vmatprep.subr.mxu0 0.0
    %2029 = vmatpush1.xpose.msra.mxu0 0.0
    %2030 = vmatprep.subr.mxu0 0.0
    %2031 = vmatpush1.xpose.msra.mxu0 0.0
    %2032 = vmatprep.subr.mxu0 0.0
    %2033 = vmatpush1.xpose.msra.mxu0 0.0
    %2034 = vmatprep.subr.mxu0 0.0
    %2035 = vmatpush1.xpose.msra.mxu0 0.0
    %2036 = vmatprep.subr.mxu0 0.0
    %2037 = vmatpush1.xpose.msra.mxu0 0.0
    %2038 = vmatprep.subr.mxu0 0.0
    %2039 = vmatpush1.xpose.msra.mxu0 0.0
    %2040 = vmatprep.subr.mxu0 0.0
    %2041 = vmatpush1.xpose.msra.mxu0 0.0
    %2042 = vmatprep.subr.mxu0 0.0
    %2043 = vmatpush1.xpose.msra.mxu0 0.0
    %2044 = vmatprep.subr.mxu0 0.0
    %2045 = vmatpush1.xpose.msra.mxu0 0.0
    %2046 = vmatprep.subr.mxu0 0.0
    %2047 = vmatpush1.xpose.msra.mxu0 0.0
    %2048 = vmatprep.subr.mxu0 0.0
    %2049 = vmatpush1.xpose.msra.mxu0 0.0
    %2050 = vmatprep.subr.mxu0 0.0
    %2051 = vmatpush1.xpose.msra.mxu0 0.0
    %2052 = vmatprep.subr.mxu0 0.0
    %2053 = vmatpush1.xpose.msra.mxu0 0.0
    %2054 = vmatprep.subr.mxu0 0.0
    %2055 = vmatpush1.xpose.msra.mxu0 0.0
    %2056 = vmatprep.subr.mxu0 0.0
    %2057 = vmatpush1.xpose.msra.mxu0 0.0
    %2058 = vmatprep.subr.mxu0 0.0
    %2059 = vmatpush1.xpose.msra.mxu0 0.0
    %2060 = vmatprep.subr.mxu0 0.0
    %2061 = vmatpush1.xpose.msra.mxu0 0.0
    %2062 = vmatprep.subr.mxu0 0.0
    %2063 = vmatpush1.xpose.msra.mxu0 0.0
    %2064 = vmatprep.subr.mxu0 0.0
    %2065 = vmatpush1.xpose.msra.mxu0 0.0
    %2066 = vmatprep.subr.mxu0 0.0
    %2067 = vmatpush1.xpose.msra.mxu0 0.0
    %2068 = vmatprep.subr.mxu0 0.0
    %2069 = vmatpush1.xpose.msra.mxu0 0.0
    %2070 = vmatprep.subr.mxu0 0.0
    %2071 = vmatpush1.xpose.msra.mxu0 0.0
    %2072 = vmatprep.subr.mxu0 0.0
    %2073 = vmatpush1.xpose.msra.mxu0 0.0
    %2074 = vmatprep.subr.mxu0 0.0
    %2075 = vmatpush1.xpose.msra.mxu0 0.0
    %2076 = vmatprep.subr.mxu0 0.0
    %2077 = vmatpush1.xpose.msra.mxu0 0.0
    %2078 = vmatprep.subr.mxu0 0.0
    %2079 = vmatpush1.xpose.msra.mxu0 0.0
    %2080 = vmatprep.subr.mxu0 0.0
    %2081 = vmatpush1.xpose.msra.mxu0 0.0
    %2082 = vmatprep.subr.mxu0 0.0
    %2083 = vmatpush1.xpose.msra.mxu0 0.0
    %2084 = vmatprep.subr.mxu0 0.0
    %2085 = vmatpush1.xpose.msra.mxu0 0.0
    %2086 = vmatprep.subr.mxu0 0.0
    %2087 = vmatpush1.xpose.msra.mxu0 0.0
    %2088 = vmatprep.subr.mxu0 0.0
    %2089 = vmatpush1.xpose.msra.mxu0 0.0
    %2090 = vmatprep.mubr.f32.mxu0 0.0
    %v2091 = vand.u32 %v147, 4294901760
    %2092 = vmatmul.mubr.f32.gmra.mrb[0].mxu0 %v2091
    %v2093 = vpop.f32.mrb[0].mxu0
    %v2094 = vadd.f32 %v2016, %v2093
    %v2095 = vpop.f32.mrb[0].mxu0
    %2096 = vmatprep.mubr.f32.mxu0 0.0
    %v2097 = vand.u32 %v150, 4294901760
    %2098 = vmatmul.mubr.f32.gmra.mrb[0].mxu0 %v2097
    %v2099 = vpop.f32.mrb[0].mxu0
    %v2100 = vadd.f32 %v2022, %v2099
    %v2101 = vpop.f32.mrb[0].mxu0
    %2102 = vdwg.mxu0
    %v2103 = vmul.f32 %v2094, 0.25
    %v2104 = vmul.f32 %v2100, 0.25
    %v2105 = vsel %vm646, %v2103, -inf
    %2106 = vmax.xlane.f32.xlu0 %v2105
    %v2107 = vpop.xlane.xlu0 %2106
    %v2108 = vsel %vm646, %v2104, -inf
    %2109 = vmax.xlane.f32.xlu0 %v2108
    %v2110 = vpop.xlane.xlu0 %2109
    %v2111 = vsub.f32 %v2103, %v2107
    %v2112 = vsub.f32 %v2104, %v2110
    %v2113 = vmul.f32 %v2111, 1.442695
    %v2114 = vpow.pop %v2113
    %v2115 = vmul.f32 %v2112, 1.442695
    %v2116 = vpow.pop %v2115
    %v2117 = vsel %vm646, %v2114, 0.0
    %2118 = vadd.xlane.f32.xlu0 %v2117
    %v2119 = vpop.xlane.xlu0 %2118
    %v2120 = vsel %vm646, %v2116, 0.0
    %2121 = vadd.xlane.f32.xlu0 %v2120
    %v2122 = vpop.xlane.xlu0 %2121
    %v2123 = vrcp.pop %v2119
    %v2124 = vmul.f32 %v2114, %v2123
    %v2125 = vrcp.pop %v2122
    %v2126 = vmul.f32 %v2116, %v2125
    %v2128 = vsel %vm646, %v2124, 0
    %2130 = vmatprep.subr.mxu0 0.0
    %v2131 = vand.u32 %v1610, 4294901760
    %2132 = vmatpush1.msra.mxu0 %v2131
    %2133 = vmatprep.subr.mxu0 0.0
    %2134 = vmatpush1.msra.mxu0 0.0
    %2135 = vmatprep.subr.mxu0 0.0
    %2136 = vmatpush1.msra.mxu0 0.0
    %2137 = vmatprep.subr.mxu0 0.0
    %2138 = vmatpush1.msra.mxu0 0.0
    %2139 = vmatprep.subr.mxu0 0.0
    %2140 = vmatpush1.msra.mxu0 0.0
    %2141 = vmatprep.subr.mxu0 0.0
    %2142 = vmatpush1.msra.mxu0 0.0
    %2143 = vmatprep.subr.mxu0 0.0
    %2144 = vmatpush1.msra.mxu0 0.0
    %2145 = vmatprep.subr.mxu0 0.0
    %2146 = vmatpush1.msra.mxu0 0.0
    %2147 = vmatprep.subr.mxu0 0.0
    %2148 = vmatpush1.msra.mxu0 0.0
    %2149 = vmatprep.subr.mxu0 0.0
    %2150 = vmatpush1.msra.mxu0 0.0
    %2151 = vmatprep.subr.mxu0 0.0
    %2152 = vmatpush1.msra.mxu0 0.0
    %2153 = vmatprep.subr.mxu0 0.0
    %2154 = vmatpush1.msra.mxu0 0.0
    %2155 = vmatprep.subr.mxu0 0.0
    %2156 = vmatpush1.msra.mxu0 0.0
    %2157 = vmatprep.subr.mxu0 0.0
    %2158 = vmatpush1.msra.mxu0 0.0
    %2159 = vmatprep.subr.mxu0 0.0
    %2160 = vmatpush1.msra.mxu0 0.0
    %2161 = vmatprep.subr.mxu0 0.0
    %2162 = vmatpush1.msra.mxu0 0.0
    %2163 = vmatprep.subr.mxu0 0.0
    %2164 = vmatpush1.msra.mxu0 0.0
    %2165 = vmatprep.subr.mxu0 0.0
    %2166 = vmatpush1.msra.mxu0 0.0
    %2167 = vmatprep.subr.mxu0 0.0
    %2168 = vmatpush1.msra.mxu0 0.0
    %2169 = vmatprep.subr.mxu0 0.0
    %2170 = vmatpush1.msra.mxu0 0.0
    %2171 = vmatprep.subr.mxu0 0.0
    %2172 = vmatpush1.msra.mxu0 0.0
    %2173 = vmatprep.subr.mxu0 0.0
    %2174 = vmatpush1.msra.mxu0 0.0
    %2175 = vmatprep.subr.mxu0 0.0
    %2176 = vmatpush1.msra.mxu0 0.0
    %2177 = vmatprep.subr.mxu0 0.0
    %2178 = vmatpush1.msra.mxu0 0.0
    %2179 = vmatprep.subr.mxu0 0.0
    %2180 = vmatpush1.msra.mxu0 0.0
    %2181 = vmatprep.subr.mxu0 0.0
    %2182 = vmatpush1.msra.mxu0 0.0
    %2183 = vmatprep.subr.mxu0 0.0
    %2184 = vmatpush1.msra.mxu0 0.0
    %2185 = vmatprep.subr.mxu0 0.0
    %2186 = vmatpush1.msra.mxu0 0.0
    %2187 = vmatprep.subr.mxu0 0.0
    %2188 = vmatpush1.msra.mxu0 0.0
    %2189 = vmatprep.subr.mxu0 0.0
    %2190 = vmatpush1.msra.mxu0 0.0
    %2191 = vmatprep.subr.mxu0 0.0
    %2192 = vmatpush1.msra.mxu0 0.0
    %2193 = vmatprep.subr.mxu0 0.0
    %2194 = vmatpush1.msra.mxu0 0.0
    %2195 = vmatprep.mubr.f32.mxu0 0.0
    %v2196 = vand.u32 %v2128, 4294901760
    %v2197 = vsub.f32 %v2128, %v2196
    %v2198 = vand.u32 %v2197, 4294901760
    %v2199 = vsub.f32 %v2197, %v2198
    %v2200 = vand.u32 %v2199, 4294901760
    %2201 = vmatmul.mubr.f32.gmra.mrb[0].mxu0 %v2200
    %v2202 = vpop.f32.mrb[0].mxu0
    %v2203 = vadd.f32 0.0, %v2202
    %v2204 = vpop.f32.mrb[0].mxu0
    %2205 = vdwg.mxu0
    %2206 = vmatprep.subr.mxu0 0.0
    %v2207 = vand.u32 %v1610, 4294901760
    %v2208 = vsub.f32 %v1610, %v2207
    %v2209 = vand.u32 %v2208, 4294901760
    %v2210 = vsub.f32 %v2208, %v2209
    %v2211 = vand.u32 %v2210, 4294901760
    %2212 = vmatpush1.msra.mxu0 %v2211
    %2213 = vmatprep.subr.mxu0 0.0
    %2214 = vmatpush1.msra.mxu0 0.0
    %2215 = vmatprep.subr.mxu0 0.0
    %2216 = vmatpush1.msra.mxu0 0.0
    %2217 = vmatprep.subr.mxu0 0.0
    %2218 = vmatpush1.msra.mxu0 0.0
    %2219 = vmatprep.subr.mxu0 0.0
    %2220 = vmatpush1.msra.mxu0 0.0
    %2221 = vmatprep.subr.mxu0 0.0
    %2222 = vmatpush1.msra.mxu0 0.0
    %2223 = vmatprep.subr.mxu0 0.0
    %2224 = vmatpush1.msra.mxu0 0.0
    %2225 = vmatprep.subr.mxu0 0.0
    %2226 = vmatpush1.msra.mxu0 0.0
    %2227 = vmatprep.subr.mxu0 0.0
    %2228 = vmatpush1.msra.mxu0 0.0
    %2229 = vmatprep.subr.mxu0 0.0
    %2230 = vmatpush1.msra.mxu0 0.0
    %2231 = vmatprep.subr.mxu0 0.0
    %2232 = vmatpush1.msra.mxu0 0.0
    %2233 = vmatprep.subr.mxu0 0.0
    %2234 = vmatpush1.msra.mxu0 0.0
    %2235 = vmatprep.subr.mxu0 0.0
    %2236 = vmatpush1.msra.mxu0 0.0
    %2237 = vmatprep.subr.mxu0 0.0
    %2238 = vmatpush1.msra.mxu0 0.0
    %2239 = vmatprep.subr.mxu0 0.0
    %2240 = vmatpush1.msra.mxu0 0.0
    %2241 = vmatprep.subr.mxu0 0.0
    %2242 = vmatpush1.msra.mxu0 0.0
    %2243 = vmatprep.subr.mxu0 0.0
    %2244 = vmatpush1.msra.mxu0 0.0
    %2245 = vmatprep.subr.mxu0 0.0
    %2246 = vmatpush1.msra.mxu0 0.0
    %2247 = vmatprep.subr.mxu0 0.0
    %2248 = vmatpush1.msra.mxu0 0.0
    %2249 = vmatprep.subr.mxu0 0.0
    %2250 = vmatpush1.msra.mxu0 0.0
    %2251 = vmatprep.subr.mxu0 0.0
    %2252 = vmatpush1.msra.mxu0 0.0
    %2253 = vmatprep.subr.mxu0 0.0
    %2254 = vmatpush1.msra.mxu0 0.0
    %2255 = vmatprep.subr.mxu0 0.0
    %2256 = vmatpush1.msra.mxu0 0.0
    %2257 = vmatprep.subr.mxu0 0.0
    %2258 = vmatpush1.msra.mxu0 0.0
    %2259 = vmatprep.subr.mxu0 0.0
    %2260 = vmatpush1.msra.mxu0 0.0
    %2261 = vmatprep.subr.mxu0 0.0
    %2262 = vmatpush1.msra.mxu0 0.0
    %2263 = vmatprep.subr.mxu0 0.0
    %2264 = vmatpush1.msra.mxu0 0.0
    %2265 = vmatprep.subr.mxu0 0.0
    %2266 = vmatpush1.msra.mxu0 0.0
    %2267 = vmatprep.subr.mxu0 0.0
    %2268 = vmatpush1.msra.mxu0 0.0
    %2269 = vmatprep.subr.mxu0 0.0
    %2270 = vmatpush1.msra.mxu0 0.0
    %2271 = vmatprep.subr.mxu0 0.0
    %2272 = vmatpush1.msra.mxu0 0.0
    %2273 = vmatprep.subr.mxu0 0.0
    %2274 = vmatpush1.msra.mxu0 0.0
    %2275 = vmatprep.mubr.f32.mxu0 0.0
    %v2276 = vand.u32 %v2128, 4294901760
    %2277 = vmatmul.mubr.f32.gmra.mrb[0].mxu0 %v2276
    %v2278 = vpop.f32.mrb[0].mxu0
    %v2279 = vadd.f32 %v2203, %v2278
    %v2280 = vpop.f32.mrb[0].mxu0
    %2281 = vdwg.mxu0
    %2282 = vmatprep.subr.mxu0 0.0
    %v2283 = vand.u32 %v1610, 4294901760
    %v2284 = vsub.f32 %v1610, %v2283
    %2285 = vmatpush1.msra.mxu0 %v2284
    %2286 = vmatprep.subr.mxu0 0.0
    %2287 = vmatpush1.msra.mxu0 0.0
    %2288 = vmatprep.subr.mxu0 0.0
    %2289 = vmatpush1.msra.mxu0 0.0
    %2290 = vmatprep.subr.mxu0 0.0
    %2291 = vmatpush1.msra.mxu0 0.0
    %2292 = vmatprep.subr.mxu0 0.0
    %2293 = vmatpush1.msra.mxu0 0.0
    %2294 = vmatprep.subr.mxu0 0.0
    %2295 = vmatpush1.msra.mxu0 0.0
    %2296 = vmatprep.subr.mxu0 0.0
    %2297 = vmatpush1.msra.mxu0 0.0
    %2298 = vmatprep.subr.mxu0 0.0
    %2299 = vmatpush1.msra.mxu0 0.0
    %2300 = vmatprep.subr.mxu0 0.0
    %2301 = vmatpush1.msra.mxu0 0.0
    %2302 = vmatprep.subr.mxu0 0.0
    %2303 = vmatpush1.msra.mxu0 0.0
    %2304 = vmatprep.subr.mxu0 0.0
    %2305 = vmatpush1.msra.mxu0 0.0
    %2306 = vmatprep.subr.mxu0 0.0
    %2307 = vmatpush1.msra.mxu0 0.0
    %2308 = vmatprep.subr.mxu0 0.0
    %2309 = vmatpush1.msra.mxu0 0.0
    %2310 = vmatprep.subr.mxu0 0.0
    %2311 = vmatpush1.msra.mxu0 0.0
    %2312 = vmatprep.subr.mxu0 0.0
    %2313 = vmatpush1.msra.mxu0 0.0
    %2314 = vmatprep.subr.mxu0 0.0
    %2315 = vmatpush1.msra.mxu0 0.0
    %2316 = vmatprep.subr.mxu0 0.0
    %2317 = vmatpush1.msra.mxu0 0.0
    %2318 = vmatprep.subr.mxu0 0.0
    %2319 = vmatpush1.msra.mxu0 0.0
    %2320 = vmatprep.subr.mxu0 0.0
    %2321 = vmatpush1.msra.mxu0 0.0
    %2322 = vmatprep.subr.mxu0 0.0
    %2323 = vmatpush1.msra.mxu0 0.0
    %2324 = vmatprep.subr.mxu0 0.0
    %2325 = vmatpush1.msra.mxu0 0.0
    %2326 = vmatprep.subr.mxu0 0.0
    %2327 = vmatpush1.msra.mxu0 0.0
    %2328 = vmatprep.subr.mxu0 0.0
    %2329 = vmatpush1.msra.mxu0 0.0
    %2330 = vmatprep.subr.mxu0 0.0
    %2331 = vmatpush1.msra.mxu0 0.0
    %2332 = vmatprep.subr.mxu0 0.0
    %2333 = vmatpush1.msra.mxu0 0.0
    %2334 = vmatprep.subr.mxu0 0.0
    %2335 = vmatpush1.msra.mxu0 0.0
    %2336 = vmatprep.subr.mxu0 0.0
    %2337 = vmatpush1.msra.mxu0 0.0
    %2338 = vmatprep.subr.mxu0 0.0
    %2339 = vmatpush1.msra.mxu0 0.0
    %2340 = vmatprep.subr.mxu0 0.0
    %2341 = vmatpush1.msra.mxu0 0.0
    %2342 = vmatprep.subr.mxu0 0.0
    %2343 = vmatpush1.msra.mxu0 0.0
    %2344 = vmatprep.subr.mxu0 0.0
    %2345 = vmatpush1.msra.mxu0 0.0
    %2346 = vmatprep.subr.mxu0 0.0
    %2347 = vmatpush1.msra.mxu0 0.0
    %2348 = vmatprep.mubr.f32.mxu0 0.0
    %v2349 = vand.u32 %v2128, 4294901760
    %v2350 = vsub.f32 %v2128, %v2349
    %2351 = vmatmul.mubr.f32.gmra.mrb[0].mxu0 %v2350
    %v2352 = vpop.f32.mrb[0].mxu0
    %v2353 = vadd.f32 %v2279, %v2352
    %v2354 = vpop.f32.mrb[0].mxu0
    %2355 = vdwg.mxu0
    %2356 = vmatprep.subr.mxu0 0.0
    %v2357 = vand.u32 %v1610, 4294901760
    %2358 = vmatpush1.msra.mxu0 %v2357
    %2359 = vmatprep.subr.mxu0 0.0
    %2360 = vmatpush1.msra.mxu0 0.0
    %2361 = vmatprep.subr.mxu0 0.0
    %2362 = vmatpush1.msra.mxu0 0.0
    %2363 = vmatprep.subr.mxu0 0.0
    %2364 = vmatpush1.msra.mxu0 0.0
    %2365 = vmatprep.subr.mxu0 0.0
    %2366 = vmatpush1.msra.mxu0 0.0
    %2367 = vmatprep.subr.mxu0 0.0
    %2368 = vmatpush1.msra.mxu0 0.0
    %2369 = vmatprep.subr.mxu0 0.0
    %2370 = vmatpush1.msra.mxu0 0.0
    %2371 = vmatprep.subr.mxu0 0.0
    %2372 = vmatpush1.msra.mxu0 0.0
    %2373 = vmatprep.subr.mxu0 0.0
    %2374 = vmatpush1.msra.mxu0 0.0
    %2375 = vmatprep.subr.mxu0 0.0
    %2376 = vmatpush1.msra.mxu0 0.0
    %2377 = vmatprep.subr.mxu0 0.0
    %2378 = vmatpush1.msra.mxu0 0.0
    %2379 = vmatprep.subr.mxu0 0.0
    %2380 = vmatpush1.msra.mxu0 0.0
    %2381 = vmatprep.subr.mxu0 0.0
    %2382 = vmatpush1.msra.mxu0 0.0
    %2383 = vmatprep.subr.mxu0 0.0
    %2384 = vmatpush1.msra.mxu0 0.0
    %2385 = vmatprep.subr.mxu0 0.0
    %2386 = vmatpush1.msra.mxu0 0.0
    %2387 = vmatprep.subr.mxu0 0.0
    %2388 = vmatpush1.msra.mxu0 0.0
    %2389 = vmatprep.subr.mxu0 0.0
    %2390 = vmatpush1.msra.mxu0 0.0
    %2391 = vmatprep.subr.mxu0 0.0
    %2392 = vmatpush1.msra.mxu0 0.0
    %2393 = vmatprep.subr.mxu0 0.0
    %2394 = vmatpush1.msra.mxu0 0.0
    %2395 = vmatprep.subr.mxu0 0.0
    %2396 = vmatpush1.msra.mxu0 0.0
    %2397 = vmatprep.subr.mxu0 0.0
    %2398 = vmatpush1.msra.mxu0 0.0
    %2399 = vmatprep.subr.mxu0 0.0
    %2400 = vmatpush1.msra.mxu0 0.0
    %2401 = vmatprep.subr.mxu0 0.0
    %2402 = vmatpush1.msra.mxu0 0.0
    %2403 = vmatprep.subr.mxu0 0.0
    %2404 = vmatpush1.msra.mxu0 0.0
    %2405 = vmatprep.subr.mxu0 0.0
    %2406 = vmatpush1.msra.mxu0 0.0
    %2407 = vmatprep.subr.mxu0 0.0
    %2408 = vmatpush1.msra.mxu0 0.0
    %2409 = vmatprep.subr.mxu0 0.0
    %2410 = vmatpush1.msra.mxu0 0.0
    %2411 = vmatprep.subr.mxu0 0.0
    %2412 = vmatpush1.msra.mxu0 0.0
    %2413 = vmatprep.subr.mxu0 0.0
    %2414 = vmatpush1.msra.mxu0 0.0
    %2415 = vmatprep.subr.mxu0 0.0
    %2416 = vmatpush1.msra.mxu0 0.0
    %2417 = vmatprep.subr.mxu0 0.0
    %2418 = vmatpush1.msra.mxu0 0.0
    %2419 = vmatprep.subr.mxu0 0.0
    %2420 = vmatpush1.msra.mxu0 0.0
    %2421 = vmatprep.mubr.f32.mxu0 0.0
    %v2422 = vand.u32 %v2128, 4294901760
    %v2423 = vsub.f32 %v2128, %v2422
    %v2424 = vand.u32 %v2423, 4294901760
    %2425 = vmatmul.mubr.f32.gmra.mrb[0].mxu0 %v2424
    %v2426 = vpop.f32.mrb[0].mxu0
    %v2427 = vadd.f32 %v2353, %v2426
    %v2428 = vpop.f32.mrb[0].mxu0
    %2429 = vdwg.mxu0
    %2430 = vmatprep.subr.mxu0 0.0
    %v2431 = vand.u32 %v1610, 4294901760
    %v2432 = vsub.f32 %v1610, %v2431
    %v2433 = vand.u32 %v2432, 4294901760
    %2434 = vmatpush1.msra.mxu0 %v2433
    %2435 = vmatprep.subr.mxu0 0.0
    %2436 = vmatpush1.msra.mxu0 0.0
    %2437 = vmatprep.subr.mxu0 0.0
    %2438 = vmatpush1.msra.mxu0 0.0
    %2439 = vmatprep.subr.mxu0 0.0
    %2440 = vmatpush1.msra.mxu0 0.0
    %2441 = vmatprep.subr.mxu0 0.0
    %2442 = vmatpush1.msra.mxu0 0.0
    %2443 = vmatprep.subr.mxu0 0.0
    %2444 = vmatpush1.msra.mxu0 0.0
    %2445 = vmatprep.subr.mxu0 0.0
    %2446 = vmatpush1.msra.mxu0 0.0
    %2447 = vmatprep.subr.mxu0 0.0
    %2448 = vmatpush1.msra.mxu0 0.0
    %2449 = vmatprep.subr.mxu0 0.0
    %2450 = vmatpush1.msra.mxu0 0.0
    %2451 = vmatprep.subr.mxu0 0.0
    %2452 = vmatpush1.msra.mxu0 0.0
    %2453 = vmatprep.subr.mxu0 0.0
    %2454 = vmatpush1.msra.mxu0 0.0
    %2455 = vmatprep.subr.mxu0 0.0
    %2456 = vmatpush1.msra.mxu0 0.0
    %2457 = vmatprep.subr.mxu0 0.0
    %2458 = vmatpush1.msra.mxu0 0.0
    %2459 = vmatprep.subr.mxu0 0.0
    %2460 = vmatpush1.msra.mxu0 0.0
    %2461 = vmatprep.subr.mxu0 0.0
    %2462 = vmatpush1.msra.mxu0 0.0
    %2463 = vmatprep.subr.mxu0 0.0
    %2464 = vmatpush1.msra.mxu0 0.0
    %2465 = vmatprep.subr.mxu0 0.0
    %2466 = vmatpush1.msra.mxu0 0.0
    %2467 = vmatprep.subr.mxu0 0.0
    %2468 = vmatpush1.msra.mxu0 0.0
    %2469 = vmatprep.subr.mxu0 0.0
    %2470 = vmatpush1.msra.mxu0 0.0
    %2471 = vmatprep.subr.mxu0 0.0
    %2472 = vmatpush1.msra.mxu0 0.0
    %2473 = vmatprep.subr.mxu0 0.0
    %2474 = vmatpush1.msra.mxu0 0.0
    %2475 = vmatprep.subr.mxu0 0.0
    %2476 = vmatpush1.msra.mxu0 0.0
    %2477 = vmatprep.subr.mxu0 0.0
    %2478 = vmatpush1.msra.mxu0 0.0
    %2479 = vmatprep.subr.mxu0 0.0
    %2480 = vmatpush1.msra.mxu0 0.0
    %2481 = vmatprep.subr.mxu0 0.0
    %2482 = vmatpush1.msra.mxu0 0.0
    %2483 = vmatprep.subr.mxu0 0.0
    %2484 = vmatpush1.msra.mxu0 0.0
    %2485 = vmatprep.subr.mxu0 0.0
    %2486 = vmatpush1.msra.mxu0 0.0
    %2487 = vmatprep.subr.mxu0 0.0
    %2488 = vmatpush1.msra.mxu0 0.0
    %2489 = vmatprep.subr.mxu0 0.0
    %2490 = vmatpush1.msra.mxu0 0.0
    %2491 = vmatprep.subr.mxu0 0.0
    %2492 = vmatpush1.msra.mxu0 0.0
    %2493 = vmatprep.subr.mxu0 0.0
    %2494 = vmatpush1.msra.mxu0 0.0
    %2495 = vmatprep.subr.mxu0 0.0
    %2496 = vmatpush1.msra.mxu0 0.0
    %2497 = vmatprep.mubr.f32.mxu0 0.0
    %v2498 = vand.u32 %v2128, 4294901760
    %2499 = vmatmul.mubr.f32.gmra.mrb[0].mxu0 %v2498
    %v2500 = vpop.f32.mrb[0].mxu0
    %v2501 = vadd.f32 %v2427, %v2500
    %v2502 = vpop.f32.mrb[0].mxu0
    %2503 = vdwg.mxu0
    %2504 = vmatprep.subr.mxu0 0.0
    %v2505 = vand.u32 %v1610, 4294901760
    %2506 = vmatpush1.msra.mxu0 %v2505
    %2507 = vmatprep.subr.mxu0 0.0
    %2508 = vmatpush1.msra.mxu0 0.0
    %2509 = vmatprep.subr.mxu0 0.0
    %2510 = vmatpush1.msra.mxu0 0.0
    %2511 = vmatprep.subr.mxu0 0.0
    %2512 = vmatpush1.msra.mxu0 0.0
    %2513 = vmatprep.subr.mxu0 0.0
    %2514 = vmatpush1.msra.mxu0 0.0
    %2515 = vmatprep.subr.mxu0 0.0
    %2516 = vmatpush1.msra.mxu0 0.0
    %2517 = vmatprep.subr.mxu0 0.0
    %2518 = vmatpush1.msra.mxu0 0.0
    %2519 = vmatprep.subr.mxu0 0.0
    %2520 = vmatpush1.msra.mxu0 0.0
    %2521 = vmatprep.subr.mxu0 0.0
    %2522 = vmatpush1.msra.mxu0 0.0
    %2523 = vmatprep.subr.mxu0 0.0
    %2524 = vmatpush1.msra.mxu0 0.0
    %2525 = vmatprep.subr.mxu0 0.0
    %2526 = vmatpush1.msra.mxu0 0.0
    %2527 = vmatprep.subr.mxu0 0.0
    %2528 = vmatpush1.msra.mxu0 0.0
    %2529 = vmatprep.subr.mxu0 0.0
    %2530 = vmatpush1.msra.mxu0 0.0
    %2531 = vmatprep.subr.mxu0 0.0
    %2532 = vmatpush1.msra.mxu0 0.0
    %2533 = vmatprep.subr.mxu0 0.0
    %2534 = vmatpush1.msra.mxu0 0.0
    %2535 = vmatprep.subr.mxu0 0.0
    %2536 = vmatpush1.msra.mxu0 0.0
    %2537 = vmatprep.subr.mxu0 0.0
    %2538 = vmatpush1.msra.mxu0 0.0
    %2539 = vmatprep.subr.mxu0 0.0
    %2540 = vmatpush1.msra.mxu0 0.0
    %2541 = vmatprep.subr.mxu0 0.0
    %2542 = vmatpush1.msra.mxu0 0.0
    %2543 = vmatprep.subr.mxu0 0.0
    %2544 = vmatpush1.msra.mxu0 0.0
    %2545 = vmatprep.subr.mxu0 0.0
    %2546 = vmatpush1.msra.mxu0 0.0
    %2547 = vmatprep.subr.mxu0 0.0
    %2548 = vmatpush1.msra.mxu0 0.0
    %2549 = vmatprep.subr.mxu0 0.0
    %2550 = vmatpush1.msra.mxu0 0.0
    %2551 = vmatprep.subr.mxu0 0.0
    %2552 = vmatpush1.msra.mxu0 0.0
    %2553 = vmatprep.subr.mxu0 0.0
    %2554 = vmatpush1.msra.mxu0 0.0
    %2555 = vmatprep.subr.mxu0 0.0
    %2556 = vmatpush1.msra.mxu0 0.0
    %2557 = vmatprep.subr.mxu0 0.0
    %2558 = vmatpush1.msra.mxu0 0.0
    %2559 = vmatprep.subr.mxu0 0.0
    %2560 = vmatpush1.msra.mxu0 0.0
    %2561 = vmatprep.subr.mxu0 0.0
    %2562 = vmatpush1.msra.mxu0 0.0
    %2563 = vmatprep.subr.mxu0 0.0
    %2564 = vmatpush1.msra.mxu0 0.0
    %2565 = vmatprep.subr.mxu0 0.0
    %2566 = vmatpush1.msra.mxu0 0.0
    %2567 = vmatprep.subr.mxu0 0.0
    %2568 = vmatpush1.msra.mxu0 0.0
    %2569 = vmatprep.mubr.f32.mxu0 0.0
    %v2570 = vand.u32 %v2128, 4294901760
    %2571 = vmatmul.mubr.f32.gmra.mrb[0].mxu0 %v2570
    %v2572 = vpop.f32.mrb[0].mxu0
    %v2573 = vadd.f32 %v2501, %v2572
    %v2574 = vpop.f32.mrb[0].mxu0
    %2575 = vdwg.mxu0
    %v2576 = vmul.f32 %v2573, %v1121
    %v2577 = vadd.f32 %v2576, 0.0
    %v2579 = vsel %vm646, %v2126, 0
    %2581 = vmatprep.subr.mxu0 0.0
    %v2582 = vand.u32 %v1610, 4294901760
    %2583 = vmatpush1.msra.mxu0 %v2582
    %2584 = vmatprep.subr.mxu0 0.0
    %2585 = vmatpush1.msra.mxu0 0.0
    %2586 = vmatprep.subr.mxu0 0.0
    %2587 = vmatpush1.msra.mxu0 0.0
    %2588 = vmatprep.subr.mxu0 0.0
    %2589 = vmatpush1.msra.mxu0 0.0
    %2590 = vmatprep.subr.mxu0 0.0
    %2591 = vmatpush1.msra.mxu0 0.0
    %2592 = vmatprep.subr.mxu0 0.0
    %2593 = vmatpush1.msra.mxu0 0.0
    %2594 = vmatprep.subr.mxu0 0.0
    %2595 = vmatpush1.msra.mxu0 0.0
    %2596 = vmatprep.subr.mxu0 0.0
    %2597 = vmatpush1.msra.mxu0 0.0
    %2598 = vmatprep.subr.mxu0 0.0
    %2599 = vmatpush1.msra.mxu0 0.0
    %2600 = vmatprep.subr.mxu0 0.0
    %2601 = vmatpush1.msra.mxu0 0.0
    %2602 = vmatprep.subr.mxu0 0.0
    %2603 = vmatpush1.msra.mxu0 0.0
    %2604 = vmatprep.subr.mxu0 0.0
    %2605 = vmatpush1.msra.mxu0 0.0
    %2606 = vmatprep.subr.mxu0 0.0
    %2607 = vmatpush1.msra.mxu0 0.0
    %2608 = vmatprep.subr.mxu0 0.0
    %2609 = vmatpush1.msra.mxu0 0.0
    %2610 = vmatprep.subr.mxu0 0.0
    %2611 = vmatpush1.msra.mxu0 0.0
    %2612 = vmatprep.subr.mxu0 0.0
    %2613 = vmatpush1.msra.mxu0 0.0
    %2614 = vmatprep.subr.mxu0 0.0
    %2615 = vmatpush1.msra.mxu0 0.0
    %2616 = vmatprep.subr.mxu0 0.0
    %2617 = vmatpush1.msra.mxu0 0.0
    %2618 = vmatprep.subr.mxu0 0.0
    %2619 = vmatpush1.msra.mxu0 0.0
    %2620 = vmatprep.subr.mxu0 0.0
    %2621 = vmatpush1.msra.mxu0 0.0
    %2622 = vmatprep.subr.mxu0 0.0
    %2623 = vmatpush1.msra.mxu0 0.0
    %2624 = vmatprep.subr.mxu0 0.0
    %2625 = vmatpush1.msra.mxu0 0.0
    %2626 = vmatprep.subr.mxu0 0.0
    %2627 = vmatpush1.msra.mxu0 0.0
    %2628 = vmatprep.subr.mxu0 0.0
    %2629 = vmatpush1.msra.mxu0 0.0
    %2630 = vmatprep.subr.mxu0 0.0
    %2631 = vmatpush1.msra.mxu0 0.0
    %2632 = vmatprep.subr.mxu0 0.0
    %2633 = vmatpush1.msra.mxu0 0.0
    %2634 = vmatprep.subr.mxu0 0.0
    %2635 = vmatpush1.msra.mxu0 0.0
    %2636 = vmatprep.subr.mxu0 0.0
    %2637 = vmatpush1.msra.mxu0 0.0
    %2638 = vmatprep.subr.mxu0 0.0
    %2639 = vmatpush1.msra.mxu0 0.0
    %2640 = vmatprep.subr.mxu0 0.0
    %2641 = vmatpush1.msra.mxu0 0.0
    %2642 = vmatprep.subr.mxu0 0.0
    %2643 = vmatpush1.msra.mxu0 0.0
    %2644 = vmatprep.subr.mxu0 0.0
    %2645 = vmatpush1.msra.mxu0 0.0
    %2646 = vmatprep.mubr.f32.mxu0 0.0
    %v2647 = vand.u32 %v2579, 4294901760
    %v2648 = vsub.f32 %v2579, %v2647
    %v2649 = vand.u32 %v2648, 4294901760
    %v2650 = vsub.f32 %v2648, %v2649
    %v2651 = vand.u32 %v2650, 4294901760
    %2652 = vmatmul.mubr.f32.gmra.mrb[0].mxu0 %v2651
    %v2653 = vpop.f32.mrb[0].mxu0
    %v2654 = vadd.f32 0.0, %v2653
    %v2655 = vpop.f32.mrb[0].mxu0
    %2656 = vdwg.mxu0
    %2657 = vmatprep.subr.mxu0 0.0
    %v2658 = vand.u32 %v1610, 4294901760
    %v2659 = vsub.f32 %v1610, %v2658
    %v2660 = vand.u32 %v2659, 4294901760
    %v2661 = vsub.f32 %v2659, %v2660
    %v2662 = vand.u32 %v2661, 4294901760
    %2663 = vmatpush1.msra.mxu0 %v2662
    %2664 = vmatprep.subr.mxu0 0.0
    %2665 = vmatpush1.msra.mxu0 0.0
    %2666 = vmatprep.subr.mxu0 0.0
    %2667 = vmatpush1.msra.mxu0 0.0
    %2668 = vmatprep.subr.mxu0 0.0
    %2669 = vmatpush1.msra.mxu0 0.0
    %2670 = vmatprep.subr.mxu0 0.0
    %2671 = vmatpush1.msra.mxu0 0.0
    %2672 = vmatprep.subr.mxu0 0.0
    %2673 = vmatpush1.msra.mxu0 0.0
    %2674 = vmatprep.subr.mxu0 0.0
    %2675 = vmatpush1.msra.mxu0 0.0
    %2676 = vmatprep.subr.mxu0 0.0
    %2677 = vmatpush1.msra.mxu0 0.0
    %2678 = vmatprep.subr.mxu0 0.0
    %2679 = vmatpush1.msra.mxu0 0.0
    %2680 = vmatprep.subr.mxu0 0.0
    %2681 = vmatpush1.msra.mxu0 0.0
    %2682 = vmatprep.subr.mxu0 0.0
    %2683 = vmatpush1.msra.mxu0 0.0
    %2684 = vmatprep.subr.mxu0 0.0
    %2685 = vmatpush1.msra.mxu0 0.0
    %2686 = vmatprep.subr.mxu0 0.0
    %2687 = vmatpush1.msra.mxu0 0.0
    %2688 = vmatprep.subr.mxu0 0.0
    %2689 = vmatpush1.msra.mxu0 0.0
    %2690 = vmatprep.subr.mxu0 0.0
    %2691 = vmatpush1.msra.mxu0 0.0
    %2692 = vmatprep.subr.mxu0 0.0
    %2693 = vmatpush1.msra.mxu0 0.0
    %2694 = vmatprep.subr.mxu0 0.0
    %2695 = vmatpush1.msra.mxu0 0.0
    %2696 = vmatprep.subr.mxu0 0.0
    %2697 = vmatpush1.msra.mxu0 0.0
    %2698 = vmatprep.subr.mxu0 0.0
    %2699 = vmatpush1.msra.mxu0 0.0
    %2700 = vmatprep.subr.mxu0 0.0
    %2701 = vmatpush1.msra.mxu0 0.0
    %2702 = vmatprep.subr.mxu0 0.0
    %2703 = vmatpush1.msra.mxu0 0.0
    %2704 = vmatprep.subr.mxu0 0.0
    %2705 = vmatpush1.msra.mxu0 0.0
    %2706 = vmatprep.subr.mxu0 0.0
    %2707 = vmatpush1.msra.mxu0 0.0
    %2708 = vmatprep.subr.mxu0 0.0
    %2709 = vmatpush1.msra.mxu0 0.0
    %2710 = vmatprep.subr.mxu0 0.0
    %2711 = vmatpush1.msra.mxu0 0.0
    %2712 = vmatprep.subr.mxu0 0.0
    %2713 = vmatpush1.msra.mxu0 0.0
    %2714 = vmatprep.subr.mxu0 0.0
    %2715 = vmatpush1.msra.mxu0 0.0
    %2716 = vmatprep.subr.mxu0 0.0
    %2717 = vmatpush1.msra.mxu0 0.0
    %2718 = vmatprep.subr.mxu0 0.0
    %2719 = vmatpush1.msra.mxu0 0.0
    %2720 = vmatprep.subr.mxu0 0.0
    %2721 = vmatpush1.msra.mxu0 0.0
    %2722 = vmatprep.subr.mxu0 0.0
    %2723 = vmatpush1.msra.mxu0 0.0
    %2724 = vmatprep.subr.mxu0 0.0
    %2725 = vmatpush1.msra.mxu0 0.0
    %2726 = vmatprep.mubr.f32.mxu0 0.0
    %v2727 = vand.u32 %v2579, 4294901760
    %2728 = vmatmul.mubr.f32.gmra.mrb[0].mxu0 %v2727
    %v2729 = vpop.f32.mrb[0].mxu0
    %v2730 = vadd.f32 %v2654, %v2729
    %v2731 = vpop.f32.mrb[0].mxu0
    %2732 = vdwg.mxu0
    %2733 = vmatprep.subr.mxu0 0.0
    %v2734 = vand.u32 %v1610, 4294901760
    %v2735 = vsub.f32 %v1610, %v2734
    %2736 = vmatpush1.msra.mxu0 %v2735
    %2737 = vmatprep.subr.mxu0 0.0
    %2738 = vmatpush1.msra.mxu0 0.0
    %2739 = vmatprep.subr.mxu0 0.0
    %2740 = vmatpush1.msra.mxu0 0.0
    %2741 = vmatprep.subr.mxu0 0.0
    %2742 = vmatpush1.msra.mxu0 0.0
    %2743 = vmatprep.subr.mxu0 0.0
    %2744 = vmatpush1.msra.mxu0 0.0
    %2745 = vmatprep.subr.mxu0 0.0
    %2746 = vmatpush1.msra.mxu0 0.0
    %2747 = vmatprep.subr.mxu0 0.0
    %2748 = vmatpush1.msra.mxu0 0.0
    %2749 = vmatprep.subr.mxu0 0.0
    %2750 = vmatpush1.msra.mxu0 0.0
    %2751 = vmatprep.subr.mxu0 0.0
    %2752 = vmatpush1.msra.mxu0 0.0
    %2753 = vmatprep.subr.mxu0 0.0
    %2754 = vmatpush1.msra.mxu0 0.0
    %2755 = vmatprep.subr.mxu0 0.0
    %2756 = vmatpush1.msra.mxu0 0.0
    %2757 = vmatprep.subr.mxu0 0.0
    %2758 = vmatpush1.msra.mxu0 0.0
    %2759 = vmatprep.subr.mxu0 0.0
    %2760 = vmatpush1.msra.mxu0 0.0
    %2761 = vmatprep.subr.mxu0 0.0
    %2762 = vmatpush1.msra.mxu0 0.0
    %2763 = vmatprep.subr.mxu0 0.0
    %2764 = vmatpush1.msra.mxu0 0.0
    %2765 = vmatprep.subr.mxu0 0.0
    %2766 = vmatpush1.msra.mxu0 0.0
    %2767 = vmatprep.subr.mxu0 0.0
    %2768 = vmatpush1.msra.mxu0 0.0
    %2769 = vmatprep.subr.mxu0 0.0
    %2770 = vmatpush1.msra.mxu0 0.0
    %2771 = vmatprep.subr.mxu0 0.0
    %2772 = vmatpush1.msra.mxu0 0.0
    %2773 = vmatprep.subr.mxu0 0.0
    %2774 = vmatpush1.msra.mxu0 0.0
    %2775 = vmatprep.subr.mxu0 0.0
    %2776 = vmatpush1.msra.mxu0 0.0
    %2777 = vmatprep.subr.mxu0 0.0
    %2778 = vmatpush1.msra.mxu0 0.0
    %2779 = vmatprep.subr.mxu0 0.0
    %2780 = vmatpush1.msra.mxu0 0.0
    %2781 = vmatprep.subr.mxu0 0.0
    %2782 = vmatpush1.msra.mxu0 0.0
    %2783 = vmatprep.subr.mxu0 0.0
    %2784 = vmatpush1.msra.mxu0 0.0
    %2785 = vmatprep.subr.mxu0 0.0
    %2786 = vmatpush1.msra.mxu0 0.0
    %2787 = vmatprep.subr.mxu0 0.0
    %2788 = vmatpush1.msra.mxu0 0.0
    %2789 = vmatprep.subr.mxu0 0.0
    %2790 = vmatpush1.msra.mxu0 0.0
    %2791 = vmatprep.subr.mxu0 0.0
    %2792 = vmatpush1.msra.mxu0 0.0
    %2793 = vmatprep.subr.mxu0 0.0
    %2794 = vmatpush1.msra.mxu0 0.0
    %2795 = vmatprep.subr.mxu0 0.0
    %2796 = vmatpush1.msra.mxu0 0.0
    %2797 = vmatprep.subr.mxu0 0.0
    %2798 = vmatpush1.msra.mxu0 0.0
    %2799 = vmatprep.mubr.f32.mxu0 0.0
    %v2800 = vand.u32 %v2579, 4294901760
    %v2801 = vsub.f32 %v2579, %v2800
    %2802 = vmatmul.mubr.f32.gmra.mrb[0].mxu0 %v2801
    %v2803 = vpop.f32.mrb[0].mxu0
    %v2804 = vadd.f32 %v2730, %v2803
    %v2805 = vpop.f32.mrb[0].mxu0
    %2806 = vdwg.mxu0
    %2807 = vmatprep.subr.mxu0 0.0
    %v2808 = vand.u32 %v1610, 4294901760
    %2809 = vmatpush1.msra.mxu0 %v2808
    %2810 = vmatprep.subr.mxu0 0.0
    %2811 = vmatpush1.msra.mxu0 0.0
    %2812 = vmatprep.subr.mxu0 0.0
    %2813 = vmatpush1.msra.mxu0 0.0
    %2814 = vmatprep.subr.mxu0 0.0
    %2815 = vmatpush1.msra.mxu0 0.0
    %2816 = vmatprep.subr.mxu0 0.0
    %2817 = vmatpush1.msra.mxu0 0.0
    %2818 = vmatprep.subr.mxu0 0.0
    %2819 = vmatpush1.msra.mxu0 0.0
    %2820 = vmatprep.subr.mxu0 0.0
    %2821 = vmatpush1.msra.mxu0 0.0
    %2822 = vmatprep.subr.mxu0 0.0
    %2823 = vmatpush1.msra.mxu0 0.0
    %2824 = vmatprep.subr.mxu0 0.0
    %2825 = vmatpush1.msra.mxu0 0.0
    %2826 = vmatprep.subr.mxu0 0.0
    %2827 = vmatpush1.msra.mxu0 0.0
    %2828 = vmatprep.subr.mxu0 0.0
    %2829 = vmatpush1.msra.mxu0 0.0
    %2830 = vmatprep.subr.mxu0 0.0
    %2831 = vmatpush1.msra.mxu0 0.0
    %2832 = vmatprep.subr.mxu0 0.0
    %2833 = vmatpush1.msra.mxu0 0.0
    %2834 = vmatprep.subr.mxu0 0.0
    %2835 = vmatpush1.msra.mxu0 0.0
    %2836 = vmatprep.subr.mxu0 0.0
    %2837 = vmatpush1.msra.mxu0 0.0
    %2838 = vmatprep.subr.mxu0 0.0
    %2839 = vmatpush1.msra.mxu0 0.0
    %2840 = vmatprep.subr.mxu0 0.0
    %2841 = vmatpush1.msra.mxu0 0.0
    %2842 = vmatprep.subr.mxu0 0.0
    %2843 = vmatpush1.msra.mxu0 0.0
    %2844 = vmatprep.subr.mxu0 0.0
    %2845 = vmatpush1.msra.mxu0 0.0
    %2846 = vmatprep.subr.mxu0 0.0
    %2847 = vmatpush1.msra.mxu0 0.0
    %2848 = vmatprep.subr.mxu0 0.0
    %2849 = vmatpush1.msra.mxu0 0.0
    %2850 = vmatprep.subr.mxu0 0.0
    %2851 = vmatpush1.msra.mxu0 0.0
    %2852 = vmatprep.subr.mxu0 0.0
    %2853 = vmatpush1.msra.mxu0 0.0
    %2854 = vmatprep.subr.mxu0 0.0
    %2855 = vmatpush1.msra.mxu0 0.0
    %2856 = vmatprep.subr.mxu0 0.0
    %2857 = vmatpush1.msra.mxu0 0.0
    %2858 = vmatprep.subr.mxu0 0.0
    %2859 = vmatpush1.msra.mxu0 0.0
    %2860 = vmatprep.subr.mxu0 0.0
    %2861 = vmatpush1.msra.mxu0 0.0
    %2862 = vmatprep.subr.mxu0 0.0
    %2863 = vmatpush1.msra.mxu0 0.0
    %2864 = vmatprep.subr.mxu0 0.0
    %2865 = vmatpush1.msra.mxu0 0.0
    %2866 = vmatprep.subr.mxu0 0.0
    %2867 = vmatpush1.msra.mxu0 0.0
    %2868 = vmatprep.subr.mxu0 0.0
    %2869 = vmatpush1.msra.mxu0 0.0
    %2870 = vmatprep.subr.mxu0 0.0
    %2871 = vmatpush1.msra.mxu0 0.0
    %2872 = vmatprep.mubr.f32.mxu0 0.0
    %v2873 = vand.u32 %v2579, 4294901760
    %v2874 = vsub.f32 %v2579, %v2873
    %v2875 = vand.u32 %v2874, 4294901760
    %2876 = vmatmul.mubr.f32.gmra.mrb[0].mxu0 %v2875
    %v2877 = vpop.f32.mrb[0].mxu0
    %v2878 = vadd.f32 %v2804, %v2877
    %v2879 = vpop.f32.mrb[0].mxu0
    %2880 = vdwg.mxu0
    %2881 = vmatprep.subr.mxu0 0.0
    %v2882 = vand.u32 %v1610, 4294901760
    %v2883 = vsub.f32 %v1610, %v2882
    %v2884 = vand.u32 %v2883, 4294901760
    %2885 = vmatpush1.msra.mxu0 %v2884
    %2886 = vmatprep.subr.mxu0 0.0
    %2887 = vmatpush1.msra.mxu0 0.0
    %2888 = vmatprep.subr.mxu0 0.0
    %2889 = vmatpush1.msra.mxu0 0.0
    %2890 = vmatprep.subr.mxu0 0.0
    %2891 = vmatpush1.msra.mxu0 0.0
    %2892 = vmatprep.subr.mxu0 0.0
    %2893 = vmatpush1.msra.mxu0 0.0
    %2894 = vmatprep.subr.mxu0 0.0
    %2895 = vmatpush1.msra.mxu0 0.0
    %2896 = vmatprep.subr.mxu0 0.0
    %2897 = vmatpush1.msra.mxu0 0.0
    %2898 = vmatprep.subr.mxu0 0.0
    %2899 = vmatpush1.msra.mxu0 0.0
    %2900 = vmatprep.subr.mxu0 0.0
    %2901 = vmatpush1.msra.mxu0 0.0
    %2902 = vmatprep.subr.mxu0 0.0
    %2903 = vmatpush1.msra.mxu0 0.0
    %2904 = vmatprep.subr.mxu0 0.0
    %2905 = vmatpush1.msra.mxu0 0.0
    %2906 = vmatprep.subr.mxu0 0.0
    %2907 = vmatpush1.msra.mxu0 0.0
    %2908 = vmatprep.subr.mxu0 0.0
    %2909 = vmatpush1.msra.mxu0 0.0
    %2910 = vmatprep.subr.mxu0 0.0
    %2911 = vmatpush1.msra.mxu0 0.0
    %2912 = vmatprep.subr.mxu0 0.0
    %2913 = vmatpush1.msra.mxu0 0.0
    %2914 = vmatprep.subr.mxu0 0.0
    %2915 = vmatpush1.msra.mxu0 0.0
    %2916 = vmatprep.subr.mxu0 0.0
    %2917 = vmatpush1.msra.mxu0 0.0
    %2918 = vmatprep.subr.mxu0 0.0
    %2919 = vmatpush1.msra.mxu0 0.0
    %2920 = vmatprep.subr.mxu0 0.0
    %2921 = vmatpush1.msra.mxu0 0.0
    %2922 = vmatprep.subr.mxu0 0.0
    %2923 = vmatpush1.msra.mxu0 0.0
    %2924 = vmatprep.subr.mxu0 0.0
    %2925 = vmatpush1.msra.mxu0 0.0
    %2926 = vmatprep.subr.mxu0 0.0
    %2927 = vmatpush1.msra.mxu0 0.0
    %2928 = vmatprep.subr.mxu0 0.0
    %2929 = vmatpush1.msra.mxu0 0.0
    %2930 = vmatprep.subr.mxu0 0.0
    %2931 = vmatpush1.msra.mxu0 0.0
    %2932 = vmatprep.subr.mxu0 0.0
    %2933 = vmatpush1.msra.mxu0 0.0
    %2934 = vmatprep.subr.mxu0 0.0
    %2935 = vmatpush1.msra.mxu0 0.0
    %2936 = vmatprep.subr.mxu0 0.0
    %2937 = vmatpush1.msra.mxu0 0.0
    %2938 = vmatprep.subr.mxu0 0.0
    %2939 = vmatpush1.msra.mxu0 0.0
    %2940 = vmatprep.subr.mxu0 0.0
    %2941 = vmatpush1.msra.mxu0 0.0
    %2942 = vmatprep.subr.mxu0 0.0
    %2943 = vmatpush1.msra.mxu0 0.0
    %2944 = vmatprep.subr.mxu0 0.0
    %2945 = vmatpush1.msra.mxu0 0.0
    %2946 = vmatprep.subr.mxu0 0.0
    %2947 = vmatpush1.msra.mxu0 0.0
    %2948 = vmatprep.mubr.f32.mxu0 0.0
    %v2949 = vand.u32 %v2579, 4294901760
    %2950 = vmatmul.mubr.f32.gmra.mrb[0].mxu0 %v2949
    %v2951 = vpop.f32.mrb[0].mxu0
    %v2952 = vadd.f32 %v2878, %v2951
    %v2953 = vpop.f32.mrb[0].mxu0
    %2954 = vdwg.mxu0
    %2955 = vmatprep.subr.mxu0 0.0
    %v2956 = vand.u32 %v1610, 4294901760
    %2957 = vmatpush1.msra.mxu0 %v2956
    %2958 = vmatprep.subr.mxu0 0.0
    %2959 = vmatpush1.msra.mxu0 0.0
    %2960 = vmatprep.subr.mxu0 0.0
    %2961 = vmatpush1.msra.mxu0 0.0
    %2962 = vmatprep.subr.mxu0 0.0
    %2963 = vmatpush1.msra.mxu0 0.0
    %2964 = vmatprep.subr.mxu0 0.0
    %2965 = vmatpush1.msra.mxu0 0.0
    %2966 = vmatprep.subr.mxu0 0.0
    %2967 = vmatpush1.msra.mxu0 0.0
    %2968 = vmatprep.subr.mxu0 0.0
    %2969 = vmatpush1.msra.mxu0 0.0
    %2970 = vmatprep.subr.mxu0 0.0
    %2971 = vmatpush1.msra.mxu0 0.0
    %2972 = vmatprep.subr.mxu0 0.0
    %2973 = vmatpush1.msra.mxu0 0.0
    %2974 = vmatprep.subr.mxu0 0.0
    %2975 = vmatpush1.msra.mxu0 0.0
    %2976 = vmatprep.subr.mxu0 0.0
    %2977 = vmatpush1.msra.mxu0 0.0
    %2978 = vmatprep.subr.mxu0 0.0
    %2979 = vmatpush1.msra.mxu0 0.0
    %2980 = vmatprep.subr.mxu0 0.0
    %2981 = vmatpush1.msra.mxu0 0.0
    %2982 = vmatprep.subr.mxu0 0.0
    %2983 = vmatpush1.msra.mxu0 0.0
    %2984 = vmatprep.subr.mxu0 0.0
    %2985 = vmatpush1.msra.mxu0 0.0
    %2986 = vmatprep.subr.mxu0 0.0
    %2987 = vmatpush1.msra.mxu0 0.0
    %2988 = vmatprep.subr.mxu0 0.0
    %2989 = vmatpush1.msra.mxu0 0.0
    %2990 = vmatprep.subr.mxu0 0.0
    %2991 = vmatpush1.msra.mxu0 0.0
    %2992 = vmatprep.subr.mxu0 0.0
    %2993 = vmatpush1.msra.mxu0 0.0
    %2994 = vmatprep.subr.mxu0 0.0
    %2995 = vmatpush1.msra.mxu0 0.0
    %2996 = vmatprep.subr.mxu0 0.0
    %2997 = vmatpush1.msra.mxu0 0.0
    %2998 = vmatprep.subr.mxu0 0.0
    %2999 = vmatpush1.msra.mxu0 0.0
    %3000 = vmatprep.subr.mxu0 0.0
    %3001 = vmatpush1.msra.mxu0 0.0
    %3002 = vmatprep.subr.mxu0 0.0
    %3003 = vmatpush1.msra.mxu0 0.0
    %3004 = vmatprep.subr.mxu0 0.0
    %3005 = vmatpush1.msra.mxu0 0.0
    %3006 = vmatprep.subr.mxu0 0.0
    %3007 = vmatpush1.msra.mxu0 0.0
    %3008 = vmatprep.subr.mxu0 0.0
    %3009 = vmatpush1.msra.mxu0 0.0
    %3010 = vmatprep.subr.mxu0 0.0
    %3011 = vmatpush1.msra.mxu0 0.0
    %3012 = vmatprep.subr.mxu0 0.0
    %3013 = vmatpush1.msra.mxu0 0.0
    %3014 = vmatprep.subr.mxu0 0.0
    %3015 = vmatpush1.msra.mxu0 0.0
    %3016 = vmatprep.subr.mxu0 0.0
    %3017 = vmatpush1.msra.mxu0 0.0
    %3018 = vmatprep.subr.mxu0 0.0
    %3019 = vmatpush1.msra.mxu0 0.0
    %3020 = vmatprep.mubr.f32.mxu0 0.0
    %v3021 = vand.u32 %v2579, 4294901760
    %3022 = vmatmul.mubr.f32.gmra.mrb[0].mxu0 %v3021
    %v3023 = vpop.f32.mrb[0].mxu0
    %v3024 = vadd.f32 %v2952, %v3023
    %v3025 = vpop.f32.mrb[0].mxu0
    %3026 = vdwg.mxu0
    %v3027 = vmul.f32 %v3024, %v1576
    %v3028 = vadd.f32 %v2577, %v3027
    %v3029 = vsel %vm145, %v3028, 0.0
    %3030 = vadd.xlane.f32.xlu0 %v3029
    %v3031 = vpop.xlane.xlu0 %3030
    %v3032 = vmul.f32 %v3031, %v1582
    %v3033 = vsub.f32 %v3028, %v3032
    %v3034 = vmul.f32 %v3033, %v3033
    %v3035 = vsel %vm145, %v3034, 0.0
    %3036 = vadd.xlane.f32.xlu0 %v3035
    %v3037 = vpop.xlane.xlu0 %3036
    %v3038 = vmul.f32 %v3037, %v1582
    %v3039 = vadd.f32 %v3038, 1e-12
    %v3040 = vrsqrt.pop %v3039
    %v3041 = vmul.f32 %v3033, %v3040
    %v3042 = vmul.f32 %v3041, %v1597
    %v3043 = vadd.f32 %v3042, %v1604
    %v3045 = vsel %vm145, %v1606, 0
    %v3048 = vsel %vm145, %v3043, 0
    %v3050 = vand.u32 %v126, 4294901760
    %3051 = vmatprep.subr.mxu0 %v3050
    %v3052 = vand.u32 %v125, 4294901760
    %3053 = vmatpush1.msra.mxu0 %v3052
    %v3054 = vand.u32 %v128, 4294901760
    %3055 = vmatprep.subr.mxu0 %v3054
    %v3056 = vand.u32 %v127, 4294901760
    %3057 = vmatpush1.msra.mxu0 %v3056
    %v3058 = vand.u32 %v130, 4294901760
    %3059 = vmatprep.subr.mxu0 %v3058
    %v3060 = vand.u32 %v129, 4294901760
    %3061 = vmatpush1.msra.mxu0 %v3060
    %v3062 = vand.u32 %v132, 4294901760
    %3063 = vmatprep.subr.mxu0 %v3062
    %v3064 = vand.u32 %v131, 4294901760
    %3065 = vmatpush1.msra.mxu0 %v3064
    %3066 = vmatprep.subr.mxu0 0.0
    %3067 = vmatpush1.msra.mxu0 0.0
    %3068 = vmatprep.subr.mxu0 0.0
    %3069 = vmatpush1.msra.mxu0 0.0
    %3070 = vmatprep.subr.mxu0 0.0
    %3071 = vmatpush1.msra.mxu0 0.0
    %3072 = vmatprep.subr.mxu0 0.0
    %3073 = vmatpush1.msra.mxu0 0.0
    %3074 = vmatprep.subr.mxu0 0.0
    %3075 = vmatpush1.msra.mxu0 0.0
    %3076 = vmatprep.subr.mxu0 0.0
    %3077 = vmatpush1.msra.mxu0 0.0
    %3078 = vmatprep.subr.mxu0 0.0
    %3079 = vmatpush1.msra.mxu0 0.0
    %3080 = vmatprep.subr.mxu0 0.0
    %3081 = vmatpush1.msra.mxu0 0.0
    %3082 = vmatprep.subr.mxu0 0.0
    %3083 = vmatpush1.msra.mxu0 0.0
    %3084 = vmatprep.subr.mxu0 0.0
    %3085 = vmatpush1.msra.mxu0 0.0
    %3086 = vmatprep.subr.mxu0 0.0
    %3087 = vmatpush1.msra.mxu0 0.0
    %3088 = vmatprep.subr.mxu0 0.0
    %3089 = vmatpush1.msra.mxu0 0.0
    %3090 = vmatprep.subr.mxu0 0.0
    %3091 = vmatpush1.msra.mxu0 0.0
    %3092 = vmatprep.subr.mxu0 0.0
    %3093 = vmatpush1.msra.mxu0 0.0
    %3094 = vmatprep.subr.mxu0 0.0
    %3095 = vmatpush1.msra.mxu0 0.0
    %3096 = vmatprep.subr.mxu0 0.0
    %3097 = vmatpush1.msra.mxu0 0.0
    %3098 = vmatprep.subr.mxu0 0.0
    %3099 = vmatpush1.msra.mxu0 0.0
    %3100 = vmatprep.subr.mxu0 0.0
    %3101 = vmatpush1.msra.mxu0 0.0
    %3102 = vmatprep.subr.mxu0 0.0
    %3103 = vmatpush1.msra.mxu0 0.0
    %3104 = vmatprep.subr.mxu0 0.0
    %3105 = vmatpush1.msra.mxu0 0.0
    %3106 = vmatprep.subr.mxu0 0.0
    %3107 = vmatpush1.msra.mxu0 0.0
    %3108 = vmatprep.subr.mxu0 0.0
    %3109 = vmatpush1.msra.mxu0 0.0
    %3110 = vmatprep.subr.mxu0 0.0
    %3111 = vmatpush1.msra.mxu0 0.0
    %3112 = vmatprep.subr.mxu0 0.0
    %3113 = vmatpush1.msra.mxu0 0.0
    %3114 = vmatprep.subr.mxu0 0.0
    %3115 = vmatpush1.msra.mxu0 0.0
    %3116 = vmatprep.subr.mxu0 0.0
    %3117 = vmatpush1.msra.mxu0 0.0
    %3118 = vmatprep.subr.mxu0 0.0
    %3119 = vmatpush1.msra.mxu0 0.0
    %3120 = vmatprep.subr.mxu0 0.0
    %3121 = vmatpush1.msra.mxu0 0.0
    %3122 = vmatprep.mubr.f32.mxu0 0.0
    %v3123 = vand.u32 %v3045, 4294901760
    %v3124 = vsub.f32 %v3045, %v3123
    %v3125 = vand.u32 %v3124, 4294901760
    %v3126 = vsub.f32 %v3124, %v3125
    %v3127 = vand.u32 %v3126, 4294901760
    %3128 = vmatmul.mubr.f32.gmra.mrb[0].mxu0 %v3127
    %v3129 = vpop.f32.mrb[0].mxu0
    %v3130 = vadd.f32 0.0, %v3129
    %v3131 = vpop.f32.mrb[0].mxu0
    %v3132 = vadd.f32 0.0, %v3131
    %3133 = vmatprep.mubr.f32.mxu0 0.0
    %v3134 = vand.u32 %v3048, 4294901760
    %v3135 = vsub.f32 %v3048, %v3134
    %v3136 = vand.u32 %v3135, 4294901760
    %v3137 = vsub.f32 %v3135, %v3136
    %v3138 = vand.u32 %v3137, 4294901760
    %3139 = vmatmul.mubr.f32.gmra.mrb[0].mxu0 %v3138
    %v3140 = vpop.f32.mrb[0].mxu0
    %v3141 = vadd.f32 0.0, %v3140
    %v3142 = vpop.f32.mrb[0].mxu0
    %v3143 = vadd.f32 0.0, %v3142
    %3144 = vdwg.mxu0
    %v3145 = vand.u32 %v126, 4294901760
    %v3146 = vsub.f32 %v126, %v3145
    %v3147 = vand.u32 %v3146, 4294901760
    %v3148 = vsub.f32 %v3146, %v3147
    %v3149 = vand.u32 %v3148, 4294901760
    %3150 = vmatprep.subr.mxu0 %v3149
    %v3151 = vand.u32 %v125, 4294901760
    %v3152 = vsub.f32 %v125, %v3151
    %v3153 = vand.u32 %v3152, 4294901760
    %v3154 = vsub.f32 %v3152, %v3153
    %v3155 = vand.u32 %v3154, 4294901760
    %3156 = vmatpush1.msra.mxu0 %v3155
    %v3157 = vand.u32 %v128, 4294901760
    %v3158 = vsub.f32 %v128, %v3157
    %v3159 = vand.u32 %v3158, 4294901760
    %v3160 = vsub.f32 %v3158, %v3159
    %v3161 = vand.u32 %v3160, 4294901760
    %3162 = vmatprep.subr.mxu0 %v3161
    %v3163 = vand.u32 %v127, 4294901760
    %v3164 = vsub.f32 %v127, %v3163
    %v3165 = vand.u32 %v3164, 4294901760
    %v3166 = vsub.f32 %v3164, %v3165
    %v3167 = vand.u32 %v3166, 4294901760
    %3168 = vmatpush1.msra.mxu0 %v3167
    %v3169 = vand.u32 %v130, 4294901760
    %v3170 = vsub.f32 %v130, %v3169
    %v3171 = vand.u32 %v3170, 4294901760
    %v3172 = vsub.f32 %v3170, %v3171
    %v3173 = vand.u32 %v3172, 4294901760
    %3174 = vmatprep.subr.mxu0 %v3173
    %v3175 = vand.u32 %v129, 4294901760
    %v3176 = vsub.f32 %v129, %v3175
    %v3177 = vand.u32 %v3176, 4294901760
    %v3178 = vsub.f32 %v3176, %v3177
    %v3179 = vand.u32 %v3178, 4294901760
    %3180 = vmatpush1.msra.mxu0 %v3179
    %v3181 = vand.u32 %v132, 4294901760
    %v3182 = vsub.f32 %v132, %v3181
    %v3183 = vand.u32 %v3182, 4294901760
    %v3184 = vsub.f32 %v3182, %v3183
    %v3185 = vand.u32 %v3184, 4294901760
    %3186 = vmatprep.subr.mxu0 %v3185
    %v3187 = vand.u32 %v131, 4294901760
    %v3188 = vsub.f32 %v131, %v3187
    %v3189 = vand.u32 %v3188, 4294901760
    %v3190 = vsub.f32 %v3188, %v3189
    %v3191 = vand.u32 %v3190, 4294901760
    %3192 = vmatpush1.msra.mxu0 %v3191
    %3193 = vmatprep.subr.mxu0 0.0
    %3194 = vmatpush1.msra.mxu0 0.0
    %3195 = vmatprep.subr.mxu0 0.0
    %3196 = vmatpush1.msra.mxu0 0.0
    %3197 = vmatprep.subr.mxu0 0.0
    %3198 = vmatpush1.msra.mxu0 0.0
    %3199 = vmatprep.subr.mxu0 0.0
    %3200 = vmatpush1.msra.mxu0 0.0
    %3201 = vmatprep.subr.mxu0 0.0
    %3202 = vmatpush1.msra.mxu0 0.0
    %3203 = vmatprep.subr.mxu0 0.0
    %3204 = vmatpush1.msra.mxu0 0.0
    %3205 = vmatprep.subr.mxu0 0.0
    %3206 = vmatpush1.msra.mxu0 0.0
    %3207 = vmatprep.subr.mxu0 0.0
    %3208 = vmatpush1.msra.mxu0 0.0
    %3209 = vmatprep.subr.mxu0 0.0
    %3210 = vmatpush1.msra.mxu0 0.0
    %3211 = vmatprep.subr.mxu0 0.0
    %3212 = vmatpush1.msra.mxu0 0.0
    %3213 = vmatprep.subr.mxu0 0.0
    %3214 = vmatpush1.msra.mxu0 0.0
    %3215 = vmatprep.subr.mxu0 0.0
    %3216 = vmatpush1.msra.mxu0 0.0
    %3217 = vmatprep.subr.mxu0 0.0
    %3218 = vmatpush1.msra.mxu0 0.0
    %3219 = vmatprep.subr.mxu0 0.0
    %3220 = vmatpush1.msra.mxu0 0.0
    %3221 = vmatprep.subr.mxu0 0.0
    %3222 = vmatpush1.msra.mxu0 0.0
    %3223 = vmatprep.subr.mxu0 0.0
    %3224 = vmatpush1.msra.mxu0 0.0
    %3225 = vmatprep.subr.mxu0 0.0
    %3226 = vmatpush1.msra.mxu0 0.0
    %3227 = vmatprep.subr.mxu0 0.0
    %3228 = vmatpush1.msra.mxu0 0.0
    %3229 = vmatprep.subr.mxu0 0.0
    %3230 = vmatpush1.msra.mxu0 0.0
    %3231 = vmatprep.subr.mxu0 0.0
    %3232 = vmatpush1.msra.mxu0 0.0
    %3233 = vmatprep.subr.mxu0 0.0
    %3234 = vmatpush1.msra.mxu0 0.0
    %3235 = vmatprep.subr.mxu0 0.0
    %3236 = vmatpush1.msra.mxu0 0.0
    %3237 = vmatprep.subr.mxu0 0.0
    %3238 = vmatpush1.msra.mxu0 0.0
    %3239 = vmatprep.subr.mxu0 0.0
    %3240 = vmatpush1.msra.mxu0 0.0
    %3241 = vmatprep.subr.mxu0 0.0
    %3242 = vmatpush1.msra.mxu0 0.0
    %3243 = vmatprep.subr.mxu0 0.0
    %3244 = vmatpush1.msra.mxu0 0.0
    %3245 = vmatprep.subr.mxu0 0.0
    %3246 = vmatpush1.msra.mxu0 0.0
    %3247 = vmatprep.subr.mxu0 0.0
    %3248 = vmatpush1.msra.mxu0 0.0
    %3249 = vmatprep.mubr.f32.mxu0 0.0
    %v3250 = vand.u32 %v3045, 4294901760
    %3251 = vmatmul.mubr.f32.gmra.mrb[0].mxu0 %v3250
    %v3252 = vpop.f32.mrb[0].mxu0
    %v3253 = vadd.f32 %v3130, %v3252
    %v3254 = vpop.f32.mrb[0].mxu0
    %v3255 = vadd.f32 %v3132, %v3254
    %3256 = vmatprep.mubr.f32.mxu0 0.0
    %v3257 = vand.u32 %v3048, 4294901760
    %3258 = vmatmul.mubr.f32.gmra.mrb[0].mxu0 %v3257
    %v3259 = vpop.f32.mrb[0].mxu0
    %v3260 = vadd.f32 %v3141, %v3259
    %v3261 = vpop.f32.mrb[0].mxu0
    %v3262 = vadd.f32 %v3143, %v3261
    %3263 = vdwg.mxu0
    %v3264 = vand.u32 %v126, 4294901760
    %v3265 = vsub.f32 %v126, %v3264
    %3266 = vmatprep.subr.mxu0 %v3265
    %v3267 = vand.u32 %v125, 4294901760
    %v3268 = vsub.f32 %v125, %v3267
    %3269 = vmatpush1.msra.mxu0 %v3268
    %v3270 = vand.u32 %v128, 4294901760
    %v3271 = vsub.f32 %v128, %v3270
    %3272 = vmatprep.subr.mxu0 %v3271
    %v3273 = vand.u32 %v127, 4294901760
    %v3274 = vsub.f32 %v127, %v3273
    %3275 = vmatpush1.msra.mxu0 %v3274
    %v3276 = vand.u32 %v130, 4294901760
    %v3277 = vsub.f32 %v130, %v3276
    %3278 = vmatprep.subr.mxu0 %v3277
    %v3279 = vand.u32 %v129, 4294901760
    %v3280 = vsub.f32 %v129, %v3279
    %3281 = vmatpush1.msra.mxu0 %v3280
    %v3282 = vand.u32 %v132, 4294901760
    %v3283 = vsub.f32 %v132, %v3282
    %3284 = vmatprep.subr.mxu0 %v3283
    %v3285 = vand.u32 %v131, 4294901760
    %v3286 = vsub.f32 %v131, %v3285
    %3287 = vmatpush1.msra.mxu0 %v3286
    %3288 = vmatprep.subr.mxu0 0.0
    %3289 = vmatpush1.msra.mxu0 0.0
    %3290 = vmatprep.subr.mxu0 0.0
    %3291 = vmatpush1.msra.mxu0 0.0
    %3292 = vmatprep.subr.mxu0 0.0
    %3293 = vmatpush1.msra.mxu0 0.0
    %3294 = vmatprep.subr.mxu0 0.0
    %3295 = vmatpush1.msra.mxu0 0.0
    %3296 = vmatprep.subr.mxu0 0.0
    %3297 = vmatpush1.msra.mxu0 0.0
    %3298 = vmatprep.subr.mxu0 0.0
    %3299 = vmatpush1.msra.mxu0 0.0
    %3300 = vmatprep.subr.mxu0 0.0
    %3301 = vmatpush1.msra.mxu0 0.0
    %3302 = vmatprep.subr.mxu0 0.0
    %3303 = vmatpush1.msra.mxu0 0.0
    %3304 = vmatprep.subr.mxu0 0.0
    %3305 = vmatpush1.msra.mxu0 0.0
    %3306 = vmatprep.subr.mxu0 0.0
    %3307 = vmatpush1.msra.mxu0 0.0
    %3308 = vmatprep.subr.mxu0 0.0
    %3309 = vmatpush1.msra.mxu0 0.0
    %3310 = vmatprep.subr.mxu0 0.0
    %3311 = vmatpush1.msra.mxu0 0.0
    %3312 = vmatprep.subr.mxu0 0.0
    %3313 = vmatpush1.msra.mxu0 0.0
    %3314 = vmatprep.subr.mxu0 0.0
    %3315 = vmatpush1.msra.mxu0 0.0
    %3316 = vmatprep.subr.mxu0 0.0
    %3317 = vmatpush1.msra.mxu0 0.0
    %3318 = vmatprep.subr.mxu0 0.0
    %3319 = vmatpush1.msra.mxu0 0.0
    %3320 = vmatprep.subr.mxu0 0.0
    %3321 = vmatpush1.msra.mxu0 0.0
    %3322 = vmatprep.subr.mxu0 0.0
    %3323 = vmatpush1.msra.mxu0 0.0
    %3324 = vmatprep.subr.mxu0 0.0
    %3325 = vmatpush1.msra.mxu0 0.0
    %3326 = vmatprep.subr.mxu0 0.0
    %3327 = vmatpush1.msra.mxu0 0.0
    %3328 = vmatprep.subr.mxu0 0.0
    %3329 = vmatpush1.msra.mxu0 0.0
    %3330 = vmatprep.subr.mxu0 0.0
    %3331 = vmatpush1.msra.mxu0 0.0
    %3332 = vmatprep.subr.mxu0 0.0
    %3333 = vmatpush1.msra.mxu0 0.0
    %3334 = vmatprep.subr.mxu0 0.0
    %3335 = vmatpush1.msra.mxu0 0.0
    %3336 = vmatprep.subr.mxu0 0.0
    %3337 = vmatpush1.msra.mxu0 0.0
    %3338 = vmatprep.subr.mxu0 0.0
    %3339 = vmatpush1.msra.mxu0 0.0
    %3340 = vmatprep.subr.mxu0 0.0
    %3341 = vmatpush1.msra.mxu0 0.0
    %3342 = vmatprep.subr.mxu0 0.0
    %3343 = vmatpush1.msra.mxu0 0.0
    %3344 = vmatprep.mubr.f32.mxu0 0.0
    %v3345 = vand.u32 %v3045, 4294901760
    %v3346 = vsub.f32 %v3045, %v3345
    %3347 = vmatmul.mubr.f32.gmra.mrb[0].mxu0 %v3346
    %v3348 = vpop.f32.mrb[0].mxu0
    %v3349 = vadd.f32 %v3253, %v3348
    %v3350 = vpop.f32.mrb[0].mxu0
    %v3351 = vadd.f32 %v3255, %v3350
    %3352 = vmatprep.mubr.f32.mxu0 0.0
    %v3353 = vand.u32 %v3048, 4294901760
    %v3354 = vsub.f32 %v3048, %v3353
    %3355 = vmatmul.mubr.f32.gmra.mrb[0].mxu0 %v3354
    %v3356 = vpop.f32.mrb[0].mxu0
    %v3357 = vadd.f32 %v3260, %v3356
    %v3358 = vpop.f32.mrb[0].mxu0
    %v3359 = vadd.f32 %v3262, %v3358
    %3360 = vdwg.mxu0
    %v3361 = vand.u32 %v126, 4294901760
    %3362 = vmatprep.subr.mxu0 %v3361
    %v3363 = vand.u32 %v125, 4294901760
    %3364 = vmatpush1.msra.mxu0 %v3363
    %v3365 = vand.u32 %v128, 4294901760
    %3366 = vmatprep.subr.mxu0 %v3365
    %v3367 = vand.u32 %v127, 4294901760
    %3368 = vmatpush1.msra.mxu0 %v3367
    %v3369 = vand.u32 %v130, 4294901760
    %3370 = vmatprep.subr.mxu0 %v3369
    %v3371 = vand.u32 %v129, 4294901760
    %3372 = vmatpush1.msra.mxu0 %v3371
    %v3373 = vand.u32 %v132, 4294901760
    %3374 = vmatprep.subr.mxu0 %v3373
    %v3375 = vand.u32 %v131, 4294901760
    %3376 = vmatpush1.msra.mxu0 %v3375
    %3377 = vmatprep.subr.mxu0 0.0
    %3378 = vmatpush1.msra.mxu0 0.0
    %3379 = vmatprep.subr.mxu0 0.0
    %3380 = vmatpush1.msra.mxu0 0.0
    %3381 = vmatprep.subr.mxu0 0.0
    %3382 = vmatpush1.msra.mxu0 0.0
    %3383 = vmatprep.subr.mxu0 0.0
    %3384 = vmatpush1.msra.mxu0 0.0
    %3385 = vmatprep.subr.mxu0 0.0
    %3386 = vmatpush1.msra.mxu0 0.0
    %3387 = vmatprep.subr.mxu0 0.0
    %3388 = vmatpush1.msra.mxu0 0.0
    %3389 = vmatprep.subr.mxu0 0.0
    %3390 = vmatpush1.msra.mxu0 0.0
    %3391 = vmatprep.subr.mxu0 0.0
    %3392 = vmatpush1.msra.mxu0 0.0
    %3393 = vmatprep.subr.mxu0 0.0
    %3394 = vmatpush1.msra.mxu0 0.0
    %3395 = vmatprep.subr.mxu0 0.0
    %3396 = vmatpush1.msra.mxu0 0.0
    %3397 = vmatprep.subr.mxu0 0.0
    %3398 = vmatpush1.msra.mxu0 0.0
    %3399 = vmatprep.subr.mxu0 0.0
    %3400 = vmatpush1.msra.mxu0 0.0
    %3401 = vmatprep.subr.mxu0 0.0
    %3402 = vmatpush1.msra.mxu0 0.0
    %3403 = vmatprep.subr.mxu0 0.0
    %3404 = vmatpush1.msra.mxu0 0.0
    %3405 = vmatprep.subr.mxu0 0.0
    %3406 = vmatpush1.msra.mxu0 0.0
    %3407 = vmatprep.subr.mxu0 0.0
    %3408 = vmatpush1.msra.mxu0 0.0
    %3409 = vmatprep.subr.mxu0 0.0
    %3410 = vmatpush1.msra.mxu0 0.0
    %3411 = vmatprep.subr.mxu0 0.0
    %3412 = vmatpush1.msra.mxu0 0.0
    %3413 = vmatprep.subr.mxu0 0.0
    %3414 = vmatpush1.msra.mxu0 0.0
    %3415 = vmatprep.subr.mxu0 0.0
    %3416 = vmatpush1.msra.mxu0 0.0
    %3417 = vmatprep.subr.mxu0 0.0
    %3418 = vmatpush1.msra.mxu0 0.0
    %3419 = vmatprep.subr.mxu0 0.0
    %3420 = vmatpush1.msra.mxu0 0.0
    %3421 = vmatprep.subr.mxu0 0.0
    %3422 = vmatpush1.msra.mxu0 0.0
    %3423 = vmatprep.subr.mxu0 0.0
    %3424 = vmatpush1.msra.mxu0 0.0
    %3425 = vmatprep.subr.mxu0 0.0
    %3426 = vmatpush1.msra.mxu0 0.0
    %3427 = vmatprep.subr.mxu0 0.0
    %3428 = vmatpush1.msra.mxu0 0.0
    %3429 = vmatprep.subr.mxu0 0.0
    %3430 = vmatpush1.msra.mxu0 0.0
    %3431 = vmatprep.subr.mxu0 0.0
    %3432 = vmatpush1.msra.mxu0 0.0
    %3433 = vmatprep.mubr.f32.mxu0 0.0
    %v3434 = vand.u32 %v3045, 4294901760
    %v3435 = vsub.f32 %v3045, %v3434
    %v3436 = vand.u32 %v3435, 4294901760
    %3437 = vmatmul.mubr.f32.gmra.mrb[0].mxu0 %v3436
    %v3438 = vpop.f32.mrb[0].mxu0
    %v3439 = vadd.f32 %v3349, %v3438
    %v3440 = vpop.f32.mrb[0].mxu0
    %v3441 = vadd.f32 %v3351, %v3440
    %3442 = vmatprep.mubr.f32.mxu0 0.0
    %v3443 = vand.u32 %v3048, 4294901760
    %v3444 = vsub.f32 %v3048, %v3443
    %v3445 = vand.u32 %v3444, 4294901760
    %3446 = vmatmul.mubr.f32.gmra.mrb[0].mxu0 %v3445
    %v3447 = vpop.f32.mrb[0].mxu0
    %v3448 = vadd.f32 %v3357, %v3447
    %v3449 = vpop.f32.mrb[0].mxu0
    %v3450 = vadd.f32 %v3359, %v3449
    %3451 = vdwg.mxu0
    %v3452 = vand.u32 %v126, 4294901760
    %v3453 = vsub.f32 %v126, %v3452
    %v3454 = vand.u32 %v3453, 4294901760
    %3455 = vmatprep.subr.mxu0 %v3454
    %v3456 = vand.u32 %v125, 4294901760
    %v3457 = vsub.f32 %v125, %v3456
    %v3458 = vand.u32 %v3457, 4294901760
    %3459 = vmatpush1.msra.mxu0 %v3458
    %v3460 = vand.u32 %v128, 4294901760
    %v3461 = vsub.f32 %v128, %v3460
    %v3462 = vand.u32 %v3461, 4294901760
    %3463 = vmatprep.subr.mxu0 %v3462
    %v3464 = vand.u32 %v127, 4294901760
    %v3465 = vsub.f32 %v127, %v3464
    %v3466 = vand.u32 %v3465, 4294901760
    %3467 = vmatpush1.msra.mxu0 %v3466
    %v3468 = vand.u32 %v130, 4294901760
    %v3469 = vsub.f32 %v130, %v3468
    %v3470 = vand.u32 %v3469, 4294901760
    %3471 = vmatprep.subr.mxu0 %v3470
    %v3472 = vand.u32 %v129, 4294901760
    %v3473 = vsub.f32 %v129, %v3472
    %v3474 = vand.u32 %v3473, 4294901760
    %3475 = vmatpush1.msra.mxu0 %v3474
    %v3476 = vand.u32 %v132, 4294901760
    %v3477 = vsub.f32 %v132, %v3476
    %v3478 = vand.u32 %v3477, 4294901760
    %3479 = vmatprep.subr.mxu0 %v3478
    %v3480 = vand.u32 %v131, 4294901760
    %v3481 = vsub.f32 %v131, %v3480
    %v3482 = vand.u32 %v3481, 4294901760
    %3483 = vmatpush1.msra.mxu0 %v3482
    %3484 = vmatprep.subr.mxu0 0.0
    %3485 = vmatpush1.msra.mxu0 0.0
    %3486 = vmatprep.subr.mxu0 0.0
    %3487 = vmatpush1.msra.mxu0 0.0
    %3488 = vmatprep.subr.mxu0 0.0
    %3489 = vmatpush1.msra.mxu0 0.0
    %3490 = vmatprep.subr.mxu0 0.0
    %3491 = vmatpush1.msra.mxu0 0.0
    %3492 = vmatprep.subr.mxu0 0.0
    %3493 = vmatpush1.msra.mxu0 0.0
    %3494 = vmatprep.subr.mxu0 0.0
    %3495 = vmatpush1.msra.mxu0 0.0
    %3496 = vmatprep.subr.mxu0 0.0
    %3497 = vmatpush1.msra.mxu0 0.0
    %3498 = vmatprep.subr.mxu0 0.0
    %3499 = vmatpush1.msra.mxu0 0.0
    %3500 = vmatprep.subr.mxu0 0.0
    %3501 = vmatpush1.msra.mxu0 0.0
    %3502 = vmatprep.subr.mxu0 0.0
    %3503 = vmatpush1.msra.mxu0 0.0
    %3504 = vmatprep.subr.mxu0 0.0
    %3505 = vmatpush1.msra.mxu0 0.0
    %3506 = vmatprep.subr.mxu0 0.0
    %3507 = vmatpush1.msra.mxu0 0.0
    %3508 = vmatprep.subr.mxu0 0.0
    %3509 = vmatpush1.msra.mxu0 0.0
    %3510 = vmatprep.subr.mxu0 0.0
    %3511 = vmatpush1.msra.mxu0 0.0
    %3512 = vmatprep.subr.mxu0 0.0
    %3513 = vmatpush1.msra.mxu0 0.0
    %3514 = vmatprep.subr.mxu0 0.0
    %3515 = vmatpush1.msra.mxu0 0.0
    %3516 = vmatprep.subr.mxu0 0.0
    %3517 = vmatpush1.msra.mxu0 0.0
    %3518 = vmatprep.subr.mxu0 0.0
    %3519 = vmatpush1.msra.mxu0 0.0
    %3520 = vmatprep.subr.mxu0 0.0
    %3521 = vmatpush1.msra.mxu0 0.0
    %3522 = vmatprep.subr.mxu0 0.0
    %3523 = vmatpush1.msra.mxu0 0.0
    %3524 = vmatprep.subr.mxu0 0.0
    %3525 = vmatpush1.msra.mxu0 0.0
    %3526 = vmatprep.subr.mxu0 0.0
    %3527 = vmatpush1.msra.mxu0 0.0
    %3528 = vmatprep.subr.mxu0 0.0
    %3529 = vmatpush1.msra.mxu0 0.0
    %3530 = vmatprep.subr.mxu0 0.0
    %3531 = vmatpush1.msra.mxu0 0.0
    %3532 = vmatprep.subr.mxu0 0.0
    %3533 = vmatpush1.msra.mxu0 0.0
    %3534 = vmatprep.subr.mxu0 0.0
    %3535 = vmatpush1.msra.mxu0 0.0
    %3536 = vmatprep.subr.mxu0 0.0
    %3537 = vmatpush1.msra.mxu0 0.0
    %3538 = vmatprep.subr.mxu0 0.0
    %3539 = vmatpush1.msra.mxu0 0.0
    %3540 = vmatprep.mubr.f32.mxu0 0.0
    %v3541 = vand.u32 %v3045, 4294901760
    %3542 = vmatmul.mubr.f32.gmra.mrb[0].mxu0 %v3541
    %v3543 = vpop.f32.mrb[0].mxu0
    %v3544 = vadd.f32 %v3439, %v3543
    %v3545 = vpop.f32.mrb[0].mxu0
    %v3546 = vadd.f32 %v3441, %v3545
    %3547 = vmatprep.mubr.f32.mxu0 0.0
    %v3548 = vand.u32 %v3048, 4294901760
    %3549 = vmatmul.mubr.f32.gmra.mrb[0].mxu0 %v3548
    %v3550 = vpop.f32.mrb[0].mxu0
    %v3551 = vadd.f32 %v3448, %v3550
    %v3552 = vpop.f32.mrb[0].mxu0
    %v3553 = vadd.f32 %v3450, %v3552
    %3554 = vdwg.mxu0
    %v3555 = vand.u32 %v126, 4294901760
    %3556 = vmatprep.subr.mxu0 %v3555
    %v3557 = vand.u32 %v125, 4294901760
    %3558 = vmatpush1.msra.mxu0 %v3557
    %v3559 = vand.u32 %v128, 4294901760
    %3560 = vmatprep.subr.mxu0 %v3559
    %v3561 = vand.u32 %v127, 4294901760
    %3562 = vmatpush1.msra.mxu0 %v3561
    %v3563 = vand.u32 %v130, 4294901760
    %3564 = vmatprep.subr.mxu0 %v3563
    %v3565 = vand.u32 %v129, 4294901760
    %3566 = vmatpush1.msra.mxu0 %v3565
    %v3567 = vand.u32 %v132, 4294901760
    %3568 = vmatprep.subr.mxu0 %v3567
    %v3569 = vand.u32 %v131, 4294901760
    %3570 = vmatpush1.msra.mxu0 %v3569
    %3571 = vmatprep.subr.mxu0 0.0
    %3572 = vmatpush1.msra.mxu0 0.0
    %3573 = vmatprep.subr.mxu0 0.0
    %3574 = vmatpush1.msra.mxu0 0.0
    %3575 = vmatprep.subr.mxu0 0.0
    %3576 = vmatpush1.msra.mxu0 0.0
    %3577 = vmatprep.subr.mxu0 0.0
    %3578 = vmatpush1.msra.mxu0 0.0
    %3579 = vmatprep.subr.mxu0 0.0
    %3580 = vmatpush1.msra.mxu0 0.0
    %3581 = vmatprep.subr.mxu0 0.0
    %3582 = vmatpush1.msra.mxu0 0.0
    %3583 = vmatprep.subr.mxu0 0.0
    %3584 = vmatpush1.msra.mxu0 0.0
    %3585 = vmatprep.subr.mxu0 0.0
    %3586 = vmatpush1.msra.mxu0 0.0
    %3587 = vmatprep.subr.mxu0 0.0
    %3588 = vmatpush1.msra.mxu0 0.0
    %3589 = vmatprep.subr.mxu0 0.0
    %3590 = vmatpush1.msra.mxu0 0.0
    %3591 = vmatprep.subr.mxu0 0.0
    %3592 = vmatpush1.msra.mxu0 0.0
    %3593 = vmatprep.subr.mxu0 0.0
    %3594 = vmatpush1.msra.mxu0 0.0
    %3595 = vmatprep.subr.mxu0 0.0
    %3596 = vmatpush1.msra.mxu0 0.0
    %3597 = vmatprep.subr.mxu0 0.0
    %3598 = vmatpush1.msra.mxu0 0.0
    %3599 = vmatprep.subr.mxu0 0.0
    %3600 = vmatpush1.msra.mxu0 0.0
    %3601 = vmatprep.subr.mxu0 0.0
    %3602 = vmatpush1.msra.mxu0 0.0
    %3603 = vmatprep.subr.mxu0 0.0
    %3604 = vmatpush1.msra.mxu0 0.0
    %3605 = vmatprep.subr.mxu0 0.0
    %3606 = vmatpush1.msra.mxu0 0.0
    %3607 = vmatprep.subr.mxu0 0.0
    %3608 = vmatpush1.msra.mxu0 0.0
    %3609 = vmatprep.subr.mxu0 0.0
    %3610 = vmatpush1.msra.mxu0 0.0
    %3611 = vmatprep.subr.mxu0 0.0
    %3612 = vmatpush1.msra.mxu0 0.0
    %3613 = vmatprep.subr.mxu0 0.0
    %3614 = vmatpush1.msra.mxu0 0.0
    %3615 = vmatprep.subr.mxu0 0.0
    %3616 = vmatpush1.msra.mxu0 0.0
    %3617 = vmatprep.subr.mxu0 0.0
    %3618 = vmatpush1.msra.mxu0 0.0
    %3619 = vmatprep.subr.mxu0 0.0
    %3620 = vmatpush1.msra.mxu0 0.0
    %3621 = vmatprep.subr.mxu0 0.0
    %3622 = vmatpush1.msra.mxu0 0.0
    %3623 = vmatprep.subr.mxu0 0.0
    %3624 = vmatpush1.msra.mxu0 0.0
    %3625 = vmatprep.subr.mxu0 0.0
    %3626 = vmatpush1.msra.mxu0 0.0
    %3627 = vmatprep.mubr.f32.mxu0 0.0
    %v3628 = vand.u32 %v3045, 4294901760
    %3629 = vmatmul.mubr.f32.gmra.mrb[0].mxu0 %v3628
    %v3630 = vpop.f32.mrb[0].mxu0
    %v3631 = vadd.f32 %v3544, %v3630
    %v3632 = vpop.f32.mrb[0].mxu0
    %v3633 = vadd.f32 %v3546, %v3632
    %3634 = vmatprep.mubr.f32.mxu0 0.0
    %v3635 = vand.u32 %v3048, 4294901760
    %3636 = vmatmul.mubr.f32.gmra.mrb[0].mxu0 %v3635
    %v3637 = vpop.f32.mrb[0].mxu0
    %v3638 = vadd.f32 %v3551, %v3637
    %v3639 = vpop.f32.mrb[0].mxu0
    %v3640 = vadd.f32 %v3553, %v3639
    %3641 = vdwg.mxu0
    %v3642 = vand.u32 %v134, 4294901760
    %3643 = vmatprep.subr.mxu0 %v3642
    %v3644 = vand.u32 %v133, 4294901760
    %3645 = vmatpush1.msra.mxu0 %v3644
    %v3646 = vand.u32 %v136, 4294901760
    %3647 = vmatprep.subr.mxu0 %v3646
    %v3648 = vand.u32 %v135, 4294901760
    %3649 = vmatpush1.msra.mxu0 %v3648
    %v3650 = vand.u32 %v138, 4294901760
    %3651 = vmatprep.subr.mxu0 %v3650
    %v3652 = vand.u32 %v137, 4294901760
    %3653 = vmatpush1.msra.mxu0 %v3652
    %v3654 = vand.u32 %v140, 4294901760
    %3655 = vmatprep.subr.mxu0 %v3654
    %v3656 = vand.u32 %v139, 4294901760
    %3657 = vmatpush1.msra.mxu0 %v3656
    %3658 = vmatprep.subr.mxu0 0.0
    %3659 = vmatpush1.msra.mxu0 0.0
    %3660 = vmatprep.subr.mxu0 0.0
    %3661 = vmatpush1.msra.mxu0 0.0
    %3662 = vmatprep.subr.mxu0 0.0
    %3663 = vmatpush1.msra.mxu0 0.0
    %3664 = vmatprep.subr.mxu0 0.0
    %3665 = vmatpush1.msra.mxu0 0.0
    %3666 = vmatprep.subr.mxu0 0.0
    %3667 = vmatpush1.msra.mxu0 0.0
    %3668 = vmatprep.subr.mxu0 0.0
    %3669 = vmatpush1.msra.mxu0 0.0
    %3670 = vmatprep.subr.mxu0 0.0
    %3671 = vmatpush1.msra.mxu0 0.0
    %3672 = vmatprep.subr.mxu0 0.0
    %3673 = vmatpush1.msra.mxu0 0.0
    %3674 = vmatprep.subr.mxu0 0.0
    %3675 = vmatpush1.msra.mxu0 0.0
    %3676 = vmatprep.subr.mxu0 0.0
    %3677 = vmatpush1.msra.mxu0 0.0
    %3678 = vmatprep.subr.mxu0 0.0
    %3679 = vmatpush1.msra.mxu0 0.0
    %3680 = vmatprep.subr.mxu0 0.0
    %3681 = vmatpush1.msra.mxu0 0.0
    %3682 = vmatprep.subr.mxu0 0.0
    %3683 = vmatpush1.msra.mxu0 0.0
    %3684 = vmatprep.subr.mxu0 0.0
    %3685 = vmatpush1.msra.mxu0 0.0
    %3686 = vmatprep.subr.mxu0 0.0
    %3687 = vmatpush1.msra.mxu0 0.0
    %3688 = vmatprep.subr.mxu0 0.0
    %3689 = vmatpush1.msra.mxu0 0.0
    %3690 = vmatprep.subr.mxu0 0.0
    %3691 = vmatpush1.msra.mxu0 0.0
    %3692 = vmatprep.subr.mxu0 0.0
    %3693 = vmatpush1.msra.mxu0 0.0
    %3694 = vmatprep.subr.mxu0 0.0
    %3695 = vmatpush1.msra.mxu0 0.0
    %3696 = vmatprep.subr.mxu0 0.0
    %3697 = vmatpush1.msra.mxu0 0.0
    %3698 = vmatprep.subr.mxu0 0.0
    %3699 = vmatpush1.msra.mxu0 0.0
    %3700 = vmatprep.subr.mxu0 0.0
    %3701 = vmatpush1.msra.mxu0 0.0
    %3702 = vmatprep.subr.mxu0 0.0
    %3703 = vmatpush1.msra.mxu0 0.0
    %3704 = vmatprep.subr.mxu0 0.0
    %3705 = vmatpush1.msra.mxu0 0.0
    %3706 = vmatprep.subr.mxu0 0.0
    %3707 = vmatpush1.msra.mxu0 0.0
    %3708 = vmatprep.subr.mxu0 0.0
    %3709 = vmatpush1.msra.mxu0 0.0
    %3710 = vmatprep.subr.mxu0 0.0
    %3711 = vmatpush1.msra.mxu0 0.0
    %3712 = vmatprep.subr.mxu0 0.0
    %3713 = vmatpush1.msra.mxu0 0.0
    %3714 = vmatprep.mubr.f32.mxu0 0.0
    %v3715 = vand.u32 %v3045, 4294901760
    %v3716 = vsub.f32 %v3045, %v3715
    %v3717 = vand.u32 %v3716, 4294901760
    %v3718 = vsub.f32 %v3716, %v3717
    %v3719 = vand.u32 %v3718, 4294901760
    %3720 = vmatmul.mubr.f32.gmra.mrb[0].mxu0 %v3719
    %v3721 = vpop.f32.mrb[0].mxu0
    %v3722 = vadd.f32 0.0, %v3721
    %v3723 = vpop.f32.mrb[0].mxu0
    %v3724 = vadd.f32 0.0, %v3723
    %3725 = vmatprep.mubr.f32.mxu0 0.0
    %v3726 = vand.u32 %v3048, 4294901760
    %v3727 = vsub.f32 %v3048, %v3726
    %v3728 = vand.u32 %v3727, 4294901760
    %v3729 = vsub.f32 %v3727, %v3728
    %v3730 = vand.u32 %v3729, 4294901760
    %3731 = vmatmul.mubr.f32.gmra.mrb[0].mxu0 %v3730
    %v3732 = vpop.f32.mrb[0].mxu0
    %v3733 = vadd.f32 0.0, %v3732
    %v3734 = vpop.f32.mrb[0].mxu0
    %v3735 = vadd.f32 0.0, %v3734
    %3736 = vdwg.mxu0
    %v3737 = vand.u32 %v134, 4294901760
    %v3738 = vsub.f32 %v134, %v3737
    %v3739 = vand.u32 %v3738, 4294901760
    %v3740 = vsub.f32 %v3738, %v3739
    %v3741 = vand.u32 %v3740, 4294901760
    %3742 = vmatprep.subr.mxu0 %v3741
    %v3743 = vand.u32 %v133, 4294901760
    %v3744 = vsub.f32 %v133, %v3743
    %v3745 = vand.u32 %v3744, 4294901760
    %v3746 = vsub.f32 %v3744, %v3745
    %v3747 = vand.u32 %v3746, 4294901760
    %3748 = vmatpush1.msra.mxu0 %v3747
    %v3749 = vand.u32 %v136, 4294901760
    %v3750 = vsub.f32 %v136, %v3749
    %v3751 = vand.u32 %v3750, 4294901760
    %v3752 = vsub.f32 %v3750, %v3751
    %v3753 = vand.u32 %v3752, 4294901760
    %3754 = vmatprep.subr.mxu0 %v3753
    %v3755 = vand.u32 %v135, 4294901760
    %v3756 = vsub.f32 %v135, %v3755
    %v3757 = vand.u32 %v3756, 4294901760
    %v3758 = vsub.f32 %v3756, %v3757
    %v3759 = vand.u32 %v3758, 4294901760
    %3760 = vmatpush1.msra.mxu0 %v3759
    %v3761 = vand.u32 %v138, 4294901760
    %v3762 = vsub.f32 %v138, %v3761
    %v3763 = vand.u32 %v3762, 4294901760
    %v3764 = vsub.f32 %v3762, %v3763
    %v3765 = vand.u32 %v3764, 4294901760
    %3766 = vmatprep.subr.mxu0 %v3765
    %v3767 = vand.u32 %v137, 4294901760
    %v3768 = vsub.f32 %v137, %v3767
    %v3769 = vand.u32 %v3768, 4294901760
    %v3770 = vsub.f32 %v3768, %v3769
    %v3771 = vand.u32 %v3770, 4294901760
    %3772 = vmatpush1.msra.mxu0 %v3771
    %v3773 = vand.u32 %v140, 4294901760
    %v3774 = vsub.f32 %v140, %v3773
    %v3775 = vand.u32 %v3774, 4294901760
    %v3776 = vsub.f32 %v3774, %v3775
    %v3777 = vand.u32 %v3776, 4294901760
    %3778 = vmatprep.subr.mxu0 %v3777
    %v3779 = vand.u32 %v139, 4294901760
    %v3780 = vsub.f32 %v139, %v3779
    %v3781 = vand.u32 %v3780, 4294901760
    %v3782 = vsub.f32 %v3780, %v3781
    %v3783 = vand.u32 %v3782, 4294901760
    %3784 = vmatpush1.msra.mxu0 %v3783
    %3785 = vmatprep.subr.mxu0 0.0
    %3786 = vmatpush1.msra.mxu0 0.0
    %3787 = vmatprep.subr.mxu0 0.0
    %3788 = vmatpush1.msra.mxu0 0.0
    %3789 = vmatprep.subr.mxu0 0.0
    %3790 = vmatpush1.msra.mxu0 0.0
    %3791 = vmatprep.subr.mxu0 0.0
    %3792 = vmatpush1.msra.mxu0 0.0
    %3793 = vmatprep.subr.mxu0 0.0
    %3794 = vmatpush1.msra.mxu0 0.0
    %3795 = vmatprep.subr.mxu0 0.0
    %3796 = vmatpush1.msra.mxu0 0.0
    %3797 = vmatprep.subr.mxu0 0.0
    %3798 = vmatpush1.msra.mxu0 0.0
    %3799 = vmatprep.subr.mxu0 0.0
    %3800 = vmatpush1.msra.mxu0 0.0
    %3801 = vmatprep.subr.mxu0 0.0
    %3802 = vmatpush1.msra.mxu0 0.0
    %3803 = vmatprep.subr.mxu0 0.0
    %3804 = vmatpush1.msra.mxu0 0.0
    %3805 = vmatprep.subr.mxu0 0.0
    %3806 = vmatpush1.msra.mxu0 0.0
    %3807 = vmatprep.subr.mxu0 0.0
    %3808 = vmatpush1.msra.mxu0 0.0
    %3809 = vmatprep.subr.mxu0 0.0
    %3810 = vmatpush1.msra.mxu0 0.0
    %3811 = vmatprep.subr.mxu0 0.0
    %3812 = vmatpush1.msra.mxu0 0.0
    %3813 = vmatprep.subr.mxu0 0.0
    %3814 = vmatpush1.msra.mxu0 0.0
    %3815 = vmatprep.subr.mxu0 0.0
    %3816 = vmatpush1.msra.mxu0 0.0
    %3817 = vmatprep.subr.mxu0 0.0
    %3818 = vmatpush1.msra.mxu0 0.0
    %3819 = vmatprep.subr.mxu0 0.0
    %3820 = vmatpush1.msra.mxu0 0.0
    %3821 = vmatprep.subr.mxu0 0.0
    %3822 = vmatpush1.msra.mxu0 0.0
    %3823 = vmatprep.subr.mxu0 0.0
    %3824 = vmatpush1.msra.mxu0 0.0
    %3825 = vmatprep.subr.mxu0 0.0
    %3826 = vmatpush1.msra.mxu0 0.0
    %3827 = vmatprep.subr.mxu0 0.0
    %3828 = vmatpush1.msra.mxu0 0.0
    %3829 = vmatprep.subr.mxu0 0.0
    %3830 = vmatpush1.msra.mxu0 0.0
    %3831 = vmatprep.subr.mxu0 0.0
    %3832 = vmatpush1.msra.mxu0 0.0
    %3833 = vmatprep.subr.mxu0 0.0
    %3834 = vmatpush1.msra.mxu0 0.0
    %3835 = vmatprep.subr.mxu0 0.0
    %3836 = vmatpush1.msra.mxu0 0.0
    %3837 = vmatprep.subr.mxu0 0.0
    %3838 = vmatpush1.msra.mxu0 0.0
    %3839 = vmatprep.subr.mxu0 0.0
    %3840 = vmatpush1.msra.mxu0 0.0
    %3841 = vmatprep.mubr.f32.mxu0 0.0
    %v3842 = vand.u32 %v3045, 4294901760
    %3843 = vmatmul.mubr.f32.gmra.mrb[0].mxu0 %v3842
    %v3844 = vpop.f32.mrb[0].mxu0
    %v3845 = vadd.f32 %v3722, %v3844
    %v3846 = vpop.f32.mrb[0].mxu0
    %v3847 = vadd.f32 %v3724, %v3846
    %3848 = vmatprep.mubr.f32.mxu0 0.0
    %v3849 = vand.u32 %v3048, 4294901760
    %3850 = vmatmul.mubr.f32.gmra.mrb[0].mxu0 %v3849
    %v3851 = vpop.f32.mrb[0].mxu0
    %v3852 = vadd.f32 %v3733, %v3851
    %v3853 = vpop.f32.mrb[0].mxu0
    %v3854 = vadd.f32 %v3735, %v3853
    %3855 = vdwg.mxu0
    %v3856 = vand.u32 %v134, 4294901760
    %v3857 = vsub.f32 %v134, %v3856
    %3858 = vmatprep.subr.mxu0 %v3857
    %v3859 = vand.u32 %v133, 4294901760
    %v3860 = vsub.f32 %v133, %v3859
    %3861 = vmatpush1.msra.mxu0 %v3860
    %v3862 = vand.u32 %v136, 4294901760
    %v3863 = vsub.f32 %v136, %v3862
    %3864 = vmatprep.subr.mxu0 %v3863
    %v3865 = vand.u32 %v135, 4294901760
    %v3866 = vsub.f32 %v135, %v3865
    %3867 = vmatpush1.msra.mxu0 %v3866
    %v3868 = vand.u32 %v138, 4294901760
    %v3869 = vsub.f32 %v138, %v3868
    %3870 = vmatprep.subr.mxu0 %v3869
    %v3871 = vand.u32 %v137, 4294901760
    %v3872 = vsub.f32 %v137, %v3871
    %3873 = vmatpush1.msra.mxu0 %v3872
    %v3874 = vand.u32 %v140, 4294901760
    %v3875 = vsub.f32 %v140, %v3874
    %3876 = vmatprep.subr.mxu0 %v3875
    %v3877 = vand.u32 %v139, 4294901760
    %v3878 = vsub.f32 %v139, %v3877
    %3879 = vmatpush1.msra.mxu0 %v3878
    %3880 = vmatprep.subr.mxu0 0.0
    %3881 = vmatpush1.msra.mxu0 0.0
    %3882 = vmatprep.subr.mxu0 0.0
    %3883 = vmatpush1.msra.mxu0 0.0
    %3884 = vmatprep.subr.mxu0 0.0
    %3885 = vmatpush1.msra.mxu0 0.0
    %3886 = vmatprep.subr.mxu0 0.0
    %3887 = vmatpush1.msra.mxu0 0.0
    %3888 = vmatprep.subr.mxu0 0.0
    %3889 = vmatpush1.msra.mxu0 0.0
    %3890 = vmatprep.subr.mxu0 0.0
    %3891 = vmatpush1.msra.mxu0 0.0
    %3892 = vmatprep.subr.mxu0 0.0
    %3893 = vmatpush1.msra.mxu0 0.0
    %3894 = vmatprep.subr.mxu0 0.0
    %3895 = vmatpush1.msra.mxu0 0.0
    %3896 = vmatprep.subr.mxu0 0.0
    %3897 = vmatpush1.msra.mxu0 0.0
    %3898 = vmatprep.subr.mxu0 0.0
    %3899 = vmatpush1.msra.mxu0 0.0
    %3900 = vmatprep.subr.mxu0 0.0
    %3901 = vmatpush1.msra.mxu0 0.0
    %3902 = vmatprep.subr.mxu0 0.0
    %3903 = vmatpush1.msra.mxu0 0.0
    %3904 = vmatprep.subr.mxu0 0.0
    %3905 = vmatpush1.msra.mxu0 0.0
    %3906 = vmatprep.subr.mxu0 0.0
    %3907 = vmatpush1.msra.mxu0 0.0
    %3908 = vmatprep.subr.mxu0 0.0
    %3909 = vmatpush1.msra.mxu0 0.0
    %3910 = vmatprep.subr.mxu0 0.0
    %3911 = vmatpush1.msra.mxu0 0.0
    %3912 = vmatprep.subr.mxu0 0.0
    %3913 = vmatpush1.msra.mxu0 0.0
    %3914 = vmatprep.subr.mxu0 0.0
    %3915 = vmatpush1.msra.mxu0 0.0
    %3916 = vmatprep.subr.mxu0 0.0
    %3917 = vmatpush1.msra.mxu0 0.0
    %3918 = vmatprep.subr.mxu0 0.0
    %3919 = vmatpush1.msra.mxu0 0.0
    %3920 = vmatprep.subr.mxu0 0.0
    %3921 = vmatpush1.msra.mxu0 0.0
    %3922 = vmatprep.subr.mxu0 0.0
    %3923 = vmatpush1.msra.mxu0 0.0
    %3924 = vmatprep.subr.mxu0 0.0
    %3925 = vmatpush1.msra.mxu0 0.0
    %3926 = vmatprep.subr.mxu0 0.0
    %3927 = vmatpush1.msra.mxu0 0.0
    %3928 = vmatprep.subr.mxu0 0.0
    %3929 = vmatpush1.msra.mxu0 0.0
    %3930 = vmatprep.subr.mxu0 0.0
    %3931 = vmatpush1.msra.mxu0 0.0
    %3932 = vmatprep.subr.mxu0 0.0
    %3933 = vmatpush1.msra.mxu0 0.0
    %3934 = vmatprep.subr.mxu0 0.0
    %3935 = vmatpush1.msra.mxu0 0.0
    %3936 = vmatprep.mubr.f32.mxu0 0.0
    %v3937 = vand.u32 %v3045, 4294901760
    %v3938 = vsub.f32 %v3045, %v3937
    %3939 = vmatmul.mubr.f32.gmra.mrb[0].mxu0 %v3938
    %v3940 = vpop.f32.mrb[0].mxu0
    %v3941 = vadd.f32 %v3845, %v3940
    %v3942 = vpop.f32.mrb[0].mxu0
    %v3943 = vadd.f32 %v3847, %v3942
    %3944 = vmatprep.mubr.f32.mxu0 0.0
    %v3945 = vand.u32 %v3048, 4294901760
    %v3946 = vsub.f32 %v3048, %v3945
    %3947 = vmatmul.mubr.f32.gmra.mrb[0].mxu0 %v3946
    %v3948 = vpop.f32.mrb[0].mxu0
    %v3949 = vadd.f32 %v3852, %v3948
    %v3950 = vpop.f32.mrb[0].mxu0
    %v3951 = vadd.f32 %v3854, %v3950
    %3952 = vdwg.mxu0
    %v3953 = vand.u32 %v134, 4294901760
    %3954 = vmatprep.subr.mxu0 %v3953
    %v3955 = vand.u32 %v133, 4294901760
    %3956 = vmatpush1.msra.mxu0 %v3955
    %v3957 = vand.u32 %v136, 4294901760
    %3958 = vmatprep.subr.mxu0 %v3957
    %v3959 = vand.u32 %v135, 4294901760
    %3960 = vmatpush1.msra.mxu0 %v3959
    %v3961 = vand.u32 %v138, 4294901760
    %3962 = vmatprep.subr.mxu0 %v3961
    %v3963 = vand.u32 %v137, 4294901760
    %3964 = vmatpush1.msra.mxu0 %v3963
    %v3965 = vand.u32 %v140, 4294901760
    %3966 = vmatprep.subr.mxu0 %v3965
    %v3967 = vand.u32 %v139, 4294901760
    %3968 = vmatpush1.msra.mxu0 %v3967
    %3969 = vmatprep.subr.mxu0 0.0
    %3970 = vmatpush1.msra.mxu0 0.0
    %3971 = vmatprep.subr.mxu0 0.0
    %3972 = vmatpush1.msra.mxu0 0.0
    %3973 = vmatprep.subr.mxu0 0.0
    %3974 = vmatpush1.msra.mxu0 0.0
    %3975 = vmatprep.subr.mxu0 0.0
    %3976 = vmatpush1.msra.mxu0 0.0
    %3977 = vmatprep.subr.mxu0 0.0
    %3978 = vmatpush1.msra.mxu0 0.0
    %3979 = vmatprep.subr.mxu0 0.0
    %3980 = vmatpush1.msra.mxu0 0.0
    %3981 = vmatprep.subr.mxu0 0.0
    %3982 = vmatpush1.msra.mxu0 0.0
    %3983 = vmatprep.subr.mxu0 0.0
    %3984 = vmatpush1.msra.mxu0 0.0
    %3985 = vmatprep.subr.mxu0 0.0
    %3986 = vmatpush1.msra.mxu0 0.0
    %3987 = vmatprep.subr.mxu0 0.0
    %3988 = vmatpush1.msra.mxu0 0.0
    %3989 = vmatprep.subr.mxu0 0.0
    %3990 = vmatpush1.msra.mxu0 0.0
    %3991 = vmatprep.subr.mxu0 0.0
    %3992 = vmatpush1.msra.mxu0 0.0
    %3993 = vmatprep.subr.mxu0 0.0
    %3994 = vmatpush1.msra.mxu0 0.0
    %3995 = vmatprep.subr.mxu0 0.0
    %3996 = vmatpush1.msra.mxu0 0.0
    %3997 = vmatprep.subr.mxu0 0.0
    %3998 = vmatpush1.msra.mxu0 0.0
    %3999 = vmatprep.subr.mxu0 0.0
    %4000 = vmatpush1.msra.mxu0 0.0
    %4001 = vmatprep.subr.mxu0 0.0
    %4002 = vmatpush1.msra.mxu0 0.0
    %4003 = vmatprep.subr.mxu0 0.0
    %4004 = vmatpush1.msra.mxu0 0.0
    %4005 = vmatprep.subr.mxu0 0.0
    %4006 = vmatpush1.msra.mxu0 0.0
    %4007 = vmatprep.subr.mxu0 0.0
    %4008 = vmatpush1.msra.mxu0 0.0
    %4009 = vmatprep.subr.mxu0 0.0
    %4010 = vmatpush1.msra.mxu0 0.0
    %4011 = vmatprep.subr.mxu0 0.0
    %4012 = vmatpush1.msra.mxu0 0.0
    %4013 = vmatprep.subr.mxu0 0.0
    %4014 = vmatpush1.msra.mxu0 0.0
    %4015 = vmatprep.subr.mxu0 0.0
    %4016 = vmatpush1.msra.mxu0 0.0
    %4017 = vmatprep.subr.mxu0 0.0
    %4018 = vmatpush1.msra.mxu0 0.0
    %4019 = vmatprep.subr.mxu0 0.0
    %4020 = vmatpush1.msra.mxu0 0.0
    %4021 = vmatprep.subr.mxu0 0.0
    %4022 = vmatpush1.msra.mxu0 0.0
    %4023 = vmatprep.subr.mxu0 0.0
    %4024 = vmatpush1.msra.mxu0 0.0
    %4025 = vmatprep.mubr.f32.mxu0 0.0
    %v4026 = vand.u32 %v3045, 4294901760
    %v4027 = vsub.f32 %v3045, %v4026
    %v4028 = vand.u32 %v4027, 4294901760
    %4029 = vmatmul.mubr.f32.gmra.mrb[0].mxu0 %v4028
    %v4030 = vpop.f32.mrb[0].mxu0
    %v4031 = vadd.f32 %v3941, %v4030
    %v4032 = vpop.f32.mrb[0].mxu0
    %v4033 = vadd.f32 %v3943, %v4032
    %4034 = vmatprep.mubr.f32.mxu0 0.0
    %v4035 = vand.u32 %v3048, 4294901760
    %v4036 = vsub.f32 %v3048, %v4035
    %v4037 = vand.u32 %v4036, 4294901760
    %4038 = vmatmul.mubr.f32.gmra.mrb[0].mxu0 %v4037
    %v4039 = vpop.f32.mrb[0].mxu0
    %v4040 = vadd.f32 %v3949, %v4039
    %v4041 = vpop.f32.mrb[0].mxu0
    %v4042 = vadd.f32 %v3951, %v4041
    %4043 = vdwg.mxu0
    %v4044 = vand.u32 %v134, 4294901760
    %v4045 = vsub.f32 %v134, %v4044
    %v4046 = vand.u32 %v4045, 4294901760
    %4047 = vmatprep.subr.mxu0 %v4046
    %v4048 = vand.u32 %v133, 4294901760
    %v4049 = vsub.f32 %v133, %v4048
    %v4050 = vand.u32 %v4049, 4294901760
    %4051 = vmatpush1.msra.mxu0 %v4050
    %v4052 = vand.u32 %v136, 4294901760
    %v4053 = vsub.f32 %v136, %v4052
    %v4054 = vand.u32 %v4053, 4294901760
    %4055 = vmatprep.subr.mxu0 %v4054
    %v4056 = vand.u32 %v135, 4294901760
    %v4057 = vsub.f32 %v135, %v4056
    %v4058 = vand.u32 %v4057, 4294901760
    %4059 = vmatpush1.msra.mxu0 %v4058
    %v4060 = vand.u32 %v138, 4294901760
    %v4061 = vsub.f32 %v138, %v4060
    %v4062 = vand.u32 %v4061, 4294901760
    %4063 = vmatprep.subr.mxu0 %v4062
    %v4064 = vand.u32 %v137, 4294901760
    %v4065 = vsub.f32 %v137, %v4064
    %v4066 = vand.u32 %v4065, 4294901760
    %4067 = vmatpush1.msra.mxu0 %v4066
    %v4068 = vand.u32 %v140, 4294901760
    %v4069 = vsub.f32 %v140, %v4068
    %v4070 = vand.u32 %v4069, 4294901760
    %4071 = vmatprep.subr.mxu0 %v4070
    %v4072 = vand.u32 %v139, 4294901760
    %v4073 = vsub.f32 %v139, %v4072
    %v4074 = vand.u32 %v4073, 4294901760
    %4075 = vmatpush1.msra.mxu0 %v4074
    %4076 = vmatprep.subr.mxu0 0.0
    %4077 = vmatpush1.msra.mxu0 0.0
    %4078 = vmatprep.subr.mxu0 0.0
    %4079 = vmatpush1.msra.mxu0 0.0
    %4080 = vmatprep.subr.mxu0 0.0
    %4081 = vmatpush1.msra.mxu0 0.0
    %4082 = vmatprep.subr.mxu0 0.0
    %4083 = vmatpush1.msra.mxu0 0.0
    %4084 = vmatprep.subr.mxu0 0.0
    %4085 = vmatpush1.msra.mxu0 0.0
    %4086 = vmatprep.subr.mxu0 0.0
    %4087 = vmatpush1.msra.mxu0 0.0
    %4088 = vmatprep.subr.mxu0 0.0
    %4089 = vmatpush1.msra.mxu0 0.0
    %4090 = vmatprep.subr.mxu0 0.0
    %4091 = vmatpush1.msra.mxu0 0.0
    %4092 = vmatprep.subr.mxu0 0.0
    %4093 = vmatpush1.msra.mxu0 0.0
    %4094 = vmatprep.subr.mxu0 0.0
    %4095 = vmatpush1.msra.mxu0 0.0
    %4096 = vmatprep.subr.mxu0 0.0
    %4097 = vmatpush1.msra.mxu0 0.0
    %4098 = vmatprep.subr.mxu0 0.0
    %4099 = vmatpush1.msra.mxu0 0.0
    %4100 = vmatprep.subr.mxu0 0.0
    %4101 = vmatpush1.msra.mxu0 0.0
    %4102 = vmatprep.subr.mxu0 0.0
    %4103 = vmatpush1.msra.mxu0 0.0
    %4104 = vmatprep.subr.mxu0 0.0
    %4105 = vmatpush1.msra.mxu0 0.0
    %4106 = vmatprep.subr.mxu0 0.0
    %4107 = vmatpush1.msra.mxu0 0.0
    %4108 = vmatprep.subr.mxu0 0.0
    %4109 = vmatpush1.msra.mxu0 0.0
    %4110 = vmatprep.subr.mxu0 0.0
    %4111 = vmatpush1.msra.mxu0 0.0
    %4112 = vmatprep.subr.mxu0 0.0
    %4113 = vmatpush1.msra.mxu0 0.0
    %4114 = vmatprep.subr.mxu0 0.0
    %4115 = vmatpush1.msra.mxu0 0.0
    %4116 = vmatprep.subr.mxu0 0.0
    %4117 = vmatpush1.msra.mxu0 0.0
    %4118 = vmatprep.subr.mxu0 0.0
    %4119 = vmatpush1.msra.mxu0 0.0
    %4120 = vmatprep.subr.mxu0 0.0
    %4121 = vmatpush1.msra.mxu0 0.0
    %4122 = vmatprep.subr.mxu0 0.0
    %4123 = vmatpush1.msra.mxu0 0.0
    %4124 = vmatprep.subr.mxu0 0.0
    %4125 = vmatpush1.msra.mxu0 0.0
    %4126 = vmatprep.subr.mxu0 0.0
    %4127 = vmatpush1.msra.mxu0 0.0
    %4128 = vmatprep.subr.mxu0 0.0
    %4129 = vmatpush1.msra.mxu0 0.0
    %4130 = vmatprep.subr.mxu0 0.0
    %4131 = vmatpush1.msra.mxu0 0.0
    %4132 = vmatprep.mubr.f32.mxu0 0.0
    %v4133 = vand.u32 %v3045, 4294901760
    %4134 = vmatmul.mubr.f32.gmra.mrb[0].mxu0 %v4133
    %v4135 = vpop.f32.mrb[0].mxu0
    %v4136 = vadd.f32 %v4031, %v4135
    %v4137 = vpop.f32.mrb[0].mxu0
    %v4138 = vadd.f32 %v4033, %v4137
    %4139 = vmatprep.mubr.f32.mxu0 0.0
    %v4140 = vand.u32 %v3048, 4294901760
    %4141 = vmatmul.mubr.f32.gmra.mrb[0].mxu0 %v4140
    %v4142 = vpop.f32.mrb[0].mxu0
    %v4143 = vadd.f32 %v4040, %v4142
    %v4144 = vpop.f32.mrb[0].mxu0
    %v4145 = vadd.f32 %v4042, %v4144
    %4146 = vdwg.mxu0
    %v4147 = vand.u32 %v134, 4294901760
    %4148 = vmatprep.subr.mxu0 %v4147
    %v4149 = vand.u32 %v133, 4294901760
    %4150 = vmatpush1.msra.mxu0 %v4149
    %v4151 = vand.u32 %v136, 4294901760
    %4152 = vmatprep.subr.mxu0 %v4151
    %v4153 = vand.u32 %v135, 4294901760
    %4154 = vmatpush1.msra.mxu0 %v4153
    %v4155 = vand.u32 %v138, 4294901760
    %4156 = vmatprep.subr.mxu0 %v4155
    %v4157 = vand.u32 %v137, 4294901760
    %4158 = vmatpush1.msra.mxu0 %v4157
    %v4159 = vand.u32 %v140, 4294901760
    %4160 = vmatprep.subr.mxu0 %v4159
    %v4161 = vand.u32 %v139, 4294901760
    %4162 = vmatpush1.msra.mxu0 %v4161
    %4163 = vmatprep.subr.mxu0 0.0
    %4164 = vmatpush1.msra.mxu0 0.0
    %4165 = vmatprep.subr.mxu0 0.0
    %4166 = vmatpush1.msra.mxu0 0.0
    %4167 = vmatprep.subr.mxu0 0.0
    %4168 = vmatpush1.msra.mxu0 0.0
    %4169 = vmatprep.subr.mxu0 0.0
    %4170 = vmatpush1.msra.mxu0 0.0
    %4171 = vmatprep.subr.mxu0 0.0
    %4172 = vmatpush1.msra.mxu0 0.0
    %4173 = vmatprep.subr.mxu0 0.0
    %4174 = vmatpush1.msra.mxu0 0.0
    %4175 = vmatprep.subr.mxu0 0.0
    %4176 = vmatpush1.msra.mxu0 0.0
    %4177 = vmatprep.subr.mxu0 0.0
    %4178 = vmatpush1.msra.mxu0 0.0
    %4179 = vmatprep.subr.mxu0 0.0
    %4180 = vmatpush1.msra.mxu0 0.0
    %4181 = vmatprep.subr.mxu0 0.0
    %4182 = vmatpush1.msra.mxu0 0.0
    %4183 = vmatprep.subr.mxu0 0.0
    %4184 = vmatpush1.msra.mxu0 0.0
    %4185 = vmatprep.subr.mxu0 0.0
    %4186 = vmatpush1.msra.mxu0 0.0
    %4187 = vmatprep.subr.mxu0 0.0
    %4188 = vmatpush1.msra.mxu0 0.0
    %4189 = vmatprep.subr.mxu0 0.0
    %4190 = vmatpush1.msra.mxu0 0.0
    %4191 = vmatprep.subr.mxu0 0.0
    %4192 = vmatpush1.msra.mxu0 0.0
    %4193 = vmatprep.subr.mxu0 0.0
    %4194 = vmatpush1.msra.mxu0 0.0
    %4195 = vmatprep.subr.mxu0 0.0
    %4196 = vmatpush1.msra.mxu0 0.0
    %4197 = vmatprep.subr.mxu0 0.0
    %4198 = vmatpush1.msra.mxu0 0.0
    %4199 = vmatprep.subr.mxu0 0.0
    %4200 = vmatpush1.msra.mxu0 0.0
    %4201 = vmatprep.subr.mxu0 0.0
    %4202 = vmatpush1.msra.mxu0 0.0
    %4203 = vmatprep.subr.mxu0 0.0
    %4204 = vmatpush1.msra.mxu0 0.0
    %4205 = vmatprep.subr.mxu0 0.0
    %4206 = vmatpush1.msra.mxu0 0.0
    %4207 = vmatprep.subr.mxu0 0.0
    %4208 = vmatpush1.msra.mxu0 0.0
    %4209 = vmatprep.subr.mxu0 0.0
    %4210 = vmatpush1.msra.mxu0 0.0
    %4211 = vmatprep.subr.mxu0 0.0
    %4212 = vmatpush1.msra.mxu0 0.0
    %4213 = vmatprep.subr.mxu0 0.0
    %4214 = vmatpush1.msra.mxu0 0.0
    %4215 = vmatprep.subr.mxu0 0.0
    %4216 = vmatpush1.msra.mxu0 0.0
    %4217 = vmatprep.subr.mxu0 0.0
    %4218 = vmatpush1.msra.mxu0 0.0
    %4219 = vmatprep.mubr.f32.mxu0 0.0
    %v4220 = vand.u32 %v3045, 4294901760
    %4221 = vmatmul.mubr.f32.gmra.mrb[0].mxu0 %v4220
    %v4222 = vpop.f32.mrb[0].mxu0
    %v4223 = vadd.f32 %v4136, %v4222
    %v4224 = vpop.f32.mrb[0].mxu0
    %v4225 = vadd.f32 %v4138, %v4224
    %4226 = vmatprep.mubr.f32.mxu0 0.0
    %v4227 = vand.u32 %v3048, 4294901760
    %4228 = vmatmul.mubr.f32.gmra.mrb[0].mxu0 %v4227
    %v4229 = vpop.f32.mrb[0].mxu0
    %v4230 = vadd.f32 %v4143, %v4229
    %v4231 = vpop.f32.mrb[0].mxu0
    %v4232 = vadd.f32 %v4145, %v4231
    %4233 = vdwg.mxu0
    %v4234 = vmul.f32 %v3631, %v123
    %v4235 = vmul.f32 %v3633, %v124
    %v4236 = vrot.slane %v4234, 4
    %v4237 = vadd.f32 %v4234, %v4236
    %v4238 = vrot.slane %v4237, 2
    %v4239 = vadd.f32 %v4237, %v4238
    %v4240 = vrot.slane %v4239, 1
    %v4241 = vadd.f32 %v4239, %v4240
    %v4242 = vrot.slane %v4235, 4
    %v4243 = vadd.f32 %v4235, %v4242
    %v4244 = vrot.slane %v4243, 2
    %v4245 = vadd.f32 %v4243, %v4244
    %v4246 = vrot.slane %v4245, 1
    %v4247 = vadd.f32 %v4245, %v4246
    %v4249 = vlaneseq
    %v4250 = vshrl.u32 %v4249, 7
    %v4251 = vsub.s32 0, %v4250
    %v4252 = vrot.slane %v141, %v4251
    %v4253 = vlaneseq
    %v4254 = vshrl.u32 %v4253, 7
    %v4255 = vsub.s32 1, %v4254
    %v4256 = vrot.slane %v141, %v4255
    %v4259 = vadd.f32 %v4241, %v4252
    %v4260 = vadd.f32 %v4247, %v4256
    %v4261 = vmul.f32 %v4223, %v123
    %v4262 = vmul.f32 %v4225, %v124
    %v4263 = vrot.slane %v4261, 4
    %v4264 = vadd.f32 %v4261, %v4263
    %v4265 = vrot.slane %v4264, 2
    %v4266 = vadd.f32 %v4264, %v4265
    %v4267 = vrot.slane %v4266, 1
    %v4268 = vadd.f32 %v4266, %v4267
    %v4269 = vrot.slane %v4262, 4
    %v4270 = vadd.f32 %v4262, %v4269
    %v4271 = vrot.slane %v4270, 2
    %v4272 = vadd.f32 %v4270, %v4271
    %v4273 = vrot.slane %v4272, 1
    %v4274 = vadd.f32 %v4272, %v4273
    %v4276 = vlaneseq
    %v4277 = vshrl.u32 %v4276, 7
    %v4278 = vsub.s32 0, %v4277
    %v4279 = vrot.slane %v142, %v4278
    %v4280 = vlaneseq
    %v4281 = vshrl.u32 %v4280, 7
    %v4282 = vsub.s32 1, %v4281
    %v4283 = vrot.slane %v142, %v4282
    %v4286 = vadd.f32 %v4268, %v4279
    %v4287 = vadd.f32 %v4274, %v4283
    %v4288 = vmul.f32 %v3638, %v123
    %v4289 = vmul.f32 %v3640, %v124
    %v4290 = vrot.slane %v4288, 4
    %v4291 = vadd.f32 %v4288, %v4290
    %v4292 = vrot.slane %v4291, 2
    %v4293 = vadd.f32 %v4291, %v4292
    %v4294 = vrot.slane %v4293, 1
    %v4295 = vadd.f32 %v4293, %v4294
    %v4296 = vrot.slane %v4289, 4
    %v4297 = vadd.f32 %v4289, %v4296
    %v4298 = vrot.slane %v4297, 2
    %v4299 = vadd.f32 %v4297, %v4298
    %v4300 = vrot.slane %v4299, 1
    %v4301 = vadd.f32 %v4299, %v4300
    %v4302 = vadd.f32 %v4295, %v4252
    %v4303 = vadd.f32 %v4301, %v4256
    %v4304 = vmul.f32 %v4230, %v123
    %v4305 = vmul.f32 %v4232, %v124
    %v4306 = vrot.slane %v4304, 4
    %v4307 = vadd.f32 %v4304, %v4306
    %v4308 = vrot.slane %v4307, 2
    %v4309 = vadd.f32 %v4307, %v4308
    %v4310 = vrot.slane %v4309, 1
    %v4311 = vadd.f32 %v4309, %v4310
    %v4312 = vrot.slane %v4305, 4
    %v4313 = vadd.f32 %v4305, %v4312
    %v4314 = vrot.slane %v4313, 2
    %v4315 = vadd.f32 %v4313, %v4314
    %v4316 = vrot.slane %v4315, 1
    %v4317 = vadd.f32 %v4315, %v4316
    %v4318 = vadd.f32 %v4311, %v4279
    %v4319 = vadd.f32 %v4317, %v4283
    %v4322 = vrot.slane %v4302, 7
    %v4323 = vrot.slane %v4303, 7
    %vm4326 = vcmask 1040384
    %v4327 = vsel %vm4326, %v4259, %v4322
    %v4328 = vsel %vm4326, %v4260, %v4323
    %v4331 = vcombine.low %v4327, %v4328
    %v4333 = vunpack.c.l.s4 1983009808
    %v4334 = vunpack.c.0.s8 %v4333
    %v4335 = vlaneseq
    %v4336 = vshrl.u32 %v4335, 7
    %v4337 = vsub.s32 %v4334, %v4336
    %v4338 = vrot.slane %v4331, %v4337
    %4340 = vst [vmem:[%s11] sm:$0xf] %v4338
    %v4343 = vrot.slane %v4318, 7
    %v4344 = vrot.slane %v4319, 7
    %v4347 = vsel %vm4326, %v4286, %v4343
    %v4348 = vsel %vm4326, %v4287, %v4344
    %v4351 = vcombine.low %v4347, %v4348
    %v4353 = vunpack.c.l.s4 1983009808
    %v4354 = vunpack.c.0.s8 %v4353
    %v4355 = vlaneseq
    %v4356 = vshrl.u32 %v4355, 7
    %v4357 = vsub.s32 %v4354, %v4356
    %v4358 = vrot.slane %v4351, %v4357
    %4360 = vst [vmem:[%s12] sm:$0xf] %v4358
    // Predicated region
    $region70: #{neuron_bank_forward.1} parent=1 // pred_check
      _
    $region71: #{neuron_bank_forward.1} parent=1 // pred_check_branch
      %4362 = sbr.rel (0) target = $region73
    $region72: #{neuron_bank_forward.1} parent=1 // pred_region
      _
    $region73: #{neuron_bank_forward.1} parent=1 // pred_fallthru
      _
    // Predicated region
    $region74: #{neuron_bank_forward.1} parent=1 // pred_check
      _
    $region75: #{neuron_bank_forward.1} parent=1 // pred_check_branch
      %4364 = sbr.rel (0) target = $region77
    $region76: #{neuron_bank_forward.1} parent=1 // pred_region
      _
    $region77: #{neuron_bank_forward.1} parent=1 // pred_fallthru
      _
    // Predicated region
    $region78: #{neuron_bank_forward.1} parent=1 // pred_check
      _
    $region79: #{neuron_bank_forward.1} parent=1 // pred_check_branch
      %4366 = sbr.rel (0) target = $region81
    $region80: #{neuron_bank_forward.1} parent=1 // pred_region
      _
    $region81: #{neuron_bank_forward.1} parent=1 // pred_fallthru
      _
    // Predicated region
    $region82: #{neuron_bank_forward.1} parent=1 // pred_check
      _
    $region83: #{neuron_bank_forward.1} parent=1 // pred_check_branch
      %4368 = sbr.rel (0) target = $region85
    $region84: #{neuron_bank_forward.1} parent=1 // pred_region
      _
    $region85: #{neuron_bank_forward.1} parent=1 // pred_fallthru
      _
    %4369 = vsyncpa [#allocation3], 1
    %4370 = vsyncpa [#allocation5], 1
    %4371 = vsyncpa [#allocation8], 1
    %4372 = vsyncpa [#allocation11], 1

</llo_original>
